<compile_context>
chip_gen: v7x
topology: tpu7x:2x2x1
jax: 0.10.0
libtpu: 0.0.40
codegen_flags: <defaults>
</compile_context>

<pallas_src>
import jax
import jax.numpy as jnp
from jax.experimental import pallas as pl
from jax.experimental.pallas import tpu as pltpu

# ---------------- configuration (small, ViT-consistent shapes) ----------------
BATCH = 2
IMAGE_SIZE = 16
PATCH_SIZE = 4
CHANNELS = 3
DIM = 32
DEPTH = 2
HEADS = 4
DIM_HEAD = 8
MLP_DIM = 64

INNER = HEADS * DIM_HEAD                                  # 32
NUM_PATCHES = (IMAGE_SIZE // PATCH_SIZE) ** 2             # 16
PATCH_DIM = CHANNELS * PATCH_SIZE * PATCH_SIZE            # 48
EPS = 1e-5
SCALE = DIM_HEAD ** (-0.5)

# Single grid step over the whole batch (best on 1-TC v5e/v6e).
# On v7x (2 TensorCores) set IMAGES_PER_STEP = BATCH // 2 to shard the parallel grid across cores.
IMAGES_PER_STEP = BATCH
GRID_STEPS = BATCH // IMAGES_PER_STEP
ROWS = IMAGES_PER_STEP * NUM_PATCHES


# ---------------- shared math (used in-kernel and in the pure-JAX reference) ----------------
def _layernorm(x, gamma, beta):
    mu = jnp.mean(x, axis=-1, keepdims=True)
    var = jnp.mean((x - mu) ** 2, axis=-1, keepdims=True)
    return (x - mu) * jax.lax.rsqrt(var + EPS) * gamma + beta


def _gelu_exact(x):
    # nn.GELU() default (erf form)
    return 0.5 * x * (1.0 + jax.lax.erf(x * (2.0 ** -0.5)))


# ---------------- fused Pallas kernel: whole (sub-)batch per grid step ----------------
def vit_kernel(patch_ref, wp_ref, posb_ref, wqkv_ref, wo_ref, vec_ref,
               w1_ref, b1_ref, w2_ref, o_ref):
    IMG = patch_ref.shape[0]
    N = NUM_PATCHES

    # patch embedding + (pos + patch-bias), rows = IMG*N for full sublane occupancy
    patches = patch_ref[...].reshape(IMG * N, PATCH_DIM)
    x = jnp.dot(patches, wp_ref[...], preferred_element_type=jnp.float32) + posb_ref[...]

    for L in range(DEPTH):                    # static unroll over layers (weights VMEM-resident)
        vl = vec_ref[L]                       # (6, DIM): ln1_g, ln1_b, ln2_g, ln2_b, bo, b2

        # ---- PreNorm + multi-head attention + residual ----
        xn = _layernorm(x, vl[0:1], vl[1:2])
        # ONE fused QKV projection per layer; SCALE already folded into the Wq block.
        qkv = jnp.dot(xn, wqkv_ref[L], preferred_element_type=jnp.float32)   # (IMG*N, 3*INNER)
        qkv = qkv.reshape(IMG, N, 3 * INNER)
        heads = []
        for h in range(HEADS):
            c = h * DIM_HEAD
            q = qkv[..., c:c + DIM_HEAD]                                     # (IMG, N, dh)
            k = qkv[..., INNER + c:INNER + c + DIM_HEAD]
            v = qkv[..., 2 * INNER + c:2 * INNER + c + DIM_HEAD]
            # Q.K^T per image, contraction over the last axis (no materialized transpose).
            dots = jnp.einsum("bnd,bmd->bnm", q, k,
                              preferred_element_type=jnp.float32)            # (IMG, N, N)
            dots = dots - jnp.max(dots, axis=-1, keepdims=True)
            e = jnp.exp(dots)
            p = e * (1.0 / jnp.sum(e, axis=-1, keepdims=True))               # 1 recip + bcast mul
            heads.append(jnp.einsum("bnm,bmd->bnd", p, v,
                                    preferred_element_type=jnp.float32))     # (IMG, N, dh)
        # ONE fused output projection per layer (concat-then-matmul, matches reference order).
        concat = jnp.concatenate(heads, axis=-1).reshape(IMG * N, INNER)
        x = x + jnp.dot(concat, wo_ref[L], preferred_element_type=jnp.float32) + vl[4:5]

        # ---- PreNorm + FeedForward + residual ----
        xn = _layernorm(x, vl[2:3], vl[3:4])
        hdn = jnp.dot(xn, w1_ref[L], preferred_element_type=jnp.float32) + b1_ref[L]
        hdn = _gelu_exact(hdn)
        x = x + jnp.dot(hdn, w2_ref[L], preferred_element_type=jnp.float32) + vl[5:6]

    # TODO(synk): optional lane-dense (1, ROWS*DIM) output slab and bf16 matmul-operand casts
    # skipped — marginal at these tiny shapes and would risk relayouts / the 1e-4 tolerance.
    o_ref[...] = x.reshape(IMG, N, DIM)


# ---------------- pallas_call wrapper ----------------
def _full(shape):
    return pl.BlockSpec(shape, lambda i: (0,) * len(shape))


@jax.jit
def vit_forward(img, params):
    patches = to_patches(img)                              # (B, N, PATCH_DIM)

    # --- wrapper-side packing (tiny one-off ops; cuts kernel inputs 17 -> 9) ---
    # Fused QKV weight (DEPTH, DIM, 3*INNER), head-major columns; SCALE folded into the Q block.
    wq = params["wq"].transpose(0, 2, 1, 3).reshape(DEPTH, DIM, INNER) * SCALE
    wk = params["wk"].transpose(0, 2, 1, 3).reshape(DEPTH, DIM, INNER)
    wv = params["wv"].transpose(0, 2, 1, 3).reshape(DEPTH, DIM, INNER)
    wqkv = jnp.concatenate([wq, wk, wv], axis=-1)
    # Fused output projection (DEPTH, INNER, DIM), head-major rows.
    wo = params["wo"].reshape(DEPTH, INNER, DIM)
    # Pack the six DIM-wide per-layer vectors into one array.
    vecs = jnp.concatenate([params["ln1_g"], params["ln1_b"],
                            params["ln2_g"], params["ln2_b"],
                            params["bo"], params["b2"]], axis=1)             # (DEPTH, 6, DIM)
    # Positional embedding + patch bias, pre-tiled to the per-step row count.
    pos_bias = jnp.tile(params["pos"] + params["b_patch"], (IMAGES_PER_STEP, 1))   # (ROWS, DIM)

    return pl.pallas_call(
        vit_kernel,
        out_shape=jax.ShapeDtypeStruct((BATCH, NUM_PATCHES, DIM), jnp.float32),
        grid=(GRID_STEPS,),
        in_specs=[
            pl.BlockSpec((IMAGES_PER_STEP, NUM_PATCHES, PATCH_DIM), lambda i: (i, 0, 0)),
            _full((PATCH_DIM, DIM)),                                # w_patch
            _full((ROWS, DIM)),                                     # pos + b_patch (tiled)
            _full((DEPTH, DIM, 3 * INNER)),                         # fused Wqkv (Wq pre-scaled)
            _full((DEPTH, INNER, DIM)),                             # fused Wo
            _full((DEPTH, 6, DIM)),                                 # ln1_g/b, ln2_g/b, bo, b2
            _full((DEPTH, DIM, MLP_DIM)),                           # W1
            _full((DEPTH, 1, MLP_DIM)),                             # b1
            _full((DEPTH, MLP_DIM, DIM)),                           # W2
        ],
        out_specs=pl.BlockSpec((IMAGES_PER_STEP, NUM_PATCHES, DIM), lambda i: (i, 0, 0)),
        compiler_params=pltpu.CompilerParams(dimension_semantics=("parallel",)),
    )(patches, params["w_patch"], pos_bias, wqkv, wo, vecs,
      params["w1"], params["b1"], params["w2"])


# ---------------- glue: patch rearrange + parameter init ----------------
def to_patches(img):
    # 'b c (h p1) (w p2) -> b (h w) (p1 p2 c)'
    B, C, H, W = img.shape
    p = PATCH_SIZE
    x = img.reshape(B, C, H // p, p, W // p, p)
    x = jnp.transpose(x, (0, 2, 4, 3, 5, 1))          # (B, h, w, p1, p2, c)
    return x.reshape(B, (H // p) * (W // p), p * p * C)


def init_params(key):
    ks = jax.random.split(key, 3 + DEPTH)
    wq, wk, wv, wo, bo = [], [], [], [], []
    ln1g, ln1b, ln2g, ln2b = [], [], [], []
    w1s, b1s, w2s, b2s = [], [], [], []
    for L in range(DEPTH):
        lk = jax.random.split(ks[3 + L], 8)
        wq.append(0.05 * jax.random.normal(lk[0], (HEADS, DIM, DIM_HEAD), jnp.float32))
        wk.append(0.05 * jax.random.normal(lk[1], (HEADS, DIM, DIM_HEAD), jnp.float32))
        wv.append(0.05 * jax.random.normal(lk[2], (HEADS, DIM, DIM_HEAD), jnp.float32))
        wo.append(0.05 * jax.random.normal(lk[3], (HEADS, DIM_HEAD, DIM), jnp.float32))
        bo.append(0.05 * jax.random.normal(lk[4], (1, DIM), jnp.float32))
        ln1g.append(jnp.ones((1, DIM), jnp.float32))
        ln1b.append(jnp.zeros((1, DIM), jnp.float32))
        ln2g.append(jnp.ones((1, DIM), jnp.float32))
        ln2b.append(jnp.zeros((1, DIM), jnp.float32))
        w1s.append(0.05 * jax.random.normal(lk[5], (DIM, MLP_DIM), jnp.float32))
        b1s.append(0.05 * jax.random.normal(lk[6], (1, MLP_DIM), jnp.float32))
        w2s.append(0.05 * jax.random.normal(lk[7], (MLP_DIM, DIM), jnp.float32))
        b2s.append(jnp.zeros((1, DIM), jnp.float32))
    return {
        "w_patch": 0.05 * jax.random.normal(ks[0], (PATCH_DIM, DIM), jnp.float32),
        "b_patch": 0.05 * jax.random.normal(ks[1], (1, DIM), jnp.float32),
        "pos": jax.random.normal(ks[2], (NUM_PATCHES, DIM), jnp.float32),
        "ln1_g": jnp.stack(ln1g), "ln1_b": jnp.stack(ln1b),
        "wq": jnp.stack(wq), "wk": jnp.stack(wk), "wv": jnp.stack(wv),
        "wo": jnp.stack(wo), "bo": jnp.stack(bo),
        "ln2_g": jnp.stack(ln2g), "ln2_b": jnp.stack(ln2b),
        "w1": jnp.stack(w1s), "b1": jnp.stack(b1s),
        "w2": jnp.stack(w2s), "b2": jnp.stack(b2s),
    }


# ---------------- pure-JAX reference for correctness ----------------
def vit_reference(img, params):
    x = to_patches(img) @ params["w_patch"] + params["b_patch"] + params["pos"]
    for L in range(DEPTH):
        xn = _layernorm(x, params["ln1_g"][L], params["ln1_b"][L])
        q = jnp.einsum("bnd,hdk->bhnk", xn, params["wq"][L])
        k = jnp.einsum("bnd,hdk->bhnk", xn, params["wk"][L])
        v = jnp.einsum("bnd,hdk->bhnk", xn, params["wv"][L])
        dots = jnp.einsum("bhnk,bhmk->bhnm", q, k) * SCALE
        attn = jax.nn.softmax(dots, axis=-1)
        out = jnp.einsum("bhnm,bhmk->bhnk", attn, v)
        y = jnp.einsum("bhnk,hkd->bnd", out, params["wo"][L]) + params["bo"][L]
        x = x + y
        xn = _layernorm(x, params["ln2_g"][L], params["ln2_b"][L])
        h = _gelu_exact(xn @ params["w1"][L] + params["b1"][L])
        x = x + h @ params["w2"][L] + params["b2"][L]
    return x


if __name__ == "__main__":
    key = jax.random.PRNGKey(0)
    k_img, k_par = jax.random.split(key)
    img = jax.random.normal(k_img, (BATCH, CHANNELS, IMAGE_SIZE, IMAGE_SIZE), jnp.float32)
    params = init_params(k_par)

    out = jax.block_until_ready(vit_forward(img, params))
    ref = vit_reference(img, params)

    assert out.shape == (BATCH, NUM_PATCHES, DIM), out.shape
    max_err = float(jnp.max(jnp.abs(out - ref)))
    assert jnp.allclose(out, ref, atol=1e-4, rtol=1e-4), max_err

    print("KERNEL_OK")
</pallas_src>

<mosaic_0001>
module attributes {stable_mosaic.version = 11 : i64} {
  func.func @vit_kernel(%arg0: i32, %arg1: memref<2x16x48xf32, #tpu.memory_space<vmem>>, %arg2: memref<48x32xf32, #tpu.memory_space<vmem>>, %arg3: memref<32x32xf32, #tpu.memory_space<vmem>>, %arg4: memref<2x32x96xf32, #tpu.memory_space<vmem>>, %arg5: memref<2x32x32xf32, #tpu.memory_space<vmem>>, %arg6: memref<2x6x32xf32, #tpu.memory_space<vmem>>, %arg7: memref<2x32x64xf32, #tpu.memory_space<vmem>>, %arg8: memref<2x1x64xf32, #tpu.memory_space<vmem>>, %arg9: memref<2x64x32xf32, #tpu.memory_space<vmem>>, %arg10: memref<2x16x32xf32, #tpu.memory_space<vmem>>) attributes {dimension_semantics = [#tpu.dimension_semantics<parallel>], iteration_bounds = array<i64: 1>, scalar_prefetch = 0 : i64, scratch_operands = 0 : i64, tpu.core_type = #tpu.core_type<tc>, window_params = [{transform_indices = @transform_0, window_bounds = array<i64: 2, 16, 48>}, {pipeline_mode = #tpu.pipeline_mode<synchronous>, transform_indices = @transform_1, window_bounds = array<i64: 48, 32>}, {pipeline_mode = #tpu.pipeline_mode<synchronous>, transform_indices = @transform_2, window_bounds = array<i64: 32, 32>}, {pipeline_mode = #tpu.pipeline_mode<synchronous>, transform_indices = @transform_3, window_bounds = array<i64: 2, 32, 96>}, {pipeline_mode = #tpu.pipeline_mode<synchronous>, transform_indices = @transform_4, window_bounds = array<i64: 2, 32, 32>}, {pipeline_mode = #tpu.pipeline_mode<synchronous>, transform_indices = @transform_5, window_bounds = array<i64: 2, 6, 32>}, {pipeline_mode = #tpu.pipeline_mode<synchronous>, transform_indices = @transform_6, window_bounds = array<i64: 2, 32, 64>}, {pipeline_mode = #tpu.pipeline_mode<synchronous>, transform_indices = @transform_7, window_bounds = array<i64: 2, 1, 64>}, {pipeline_mode = #tpu.pipeline_mode<synchronous>, transform_indices = @transform_8, window_bounds = array<i64: 2, 64, 32>}, {transform_indices = @transform_9, window_bounds = array<i64: 2, 16, 32>}]} {
    %c0 = arith.constant 0 : index
    %c0_0 = arith.constant 0 : index
    %c0_1 = arith.constant 0 : index
    %0 = vector.load %arg1[%c0, %c0_0, %c0_1] : memref<2x16x48xf32, #tpu.memory_space<vmem>>, vector<2x16x48xf32>
    %1 = vector.shape_cast %0 : vector<2x16x48xf32> to vector<32x48xf32>
    %c0_2 = arith.constant 0 : index
    %c0_3 = arith.constant 0 : index
    %2 = vector.load %arg2[%c0_2, %c0_3] : memref<48x32xf32, #tpu.memory_space<vmem>>, vector<48x32xf32>
    %cst = arith.constant dense<0.000000e+00> : vector<32x32xf32>
    %3 = tpu.matmul %1, %2, %cst {dimension_numbers = #tpu.dot_dimension_numbers<[1], [0], [0], [1], [0, 0, 1, 1], [], []>} : vector<32x48xf32>, vector<48x32xf32>, vector<32x32xf32> -> vector<32x32xf32>
    %c0_4 = arith.constant 0 : index
    %c0_5 = arith.constant 0 : index
    %4 = vector.load %arg3[%c0_4, %c0_5] : memref<32x32xf32, #tpu.memory_space<vmem>>, vector<32x32xf32>
    %5 = arith.addf %3, %4 : vector<32x32xf32>
    %c0_6 = arith.constant 0 : index
    %c0_7 = arith.constant 0 : index
    %c0_8 = arith.constant 0 : index
    %6 = vector.load %arg6[%c0_6, %c0_7, %c0_8] : memref<2x6x32xf32, #tpu.memory_space<vmem>>, vector<1x6x32xf32>
    %7 = vector.shape_cast %6 : vector<1x6x32xf32> to vector<6x32xf32>
    %8 = vector.extract_strided_slice %7 {offsets = [0, 0], sizes = [1, 32], strides = [1, 1]} : vector<6x32xf32> to vector<1x32xf32>
    %9 = vector.extract_strided_slice %7 {offsets = [1, 0], sizes = [1, 32], strides = [1, 1]} : vector<6x32xf32> to vector<1x32xf32>
    %cst_9 = arith.constant dense<0.000000e+00> : vector<32xf32>
    %10 = vector.multi_reduction <add>, %5, %cst_9 [1] : vector<32x32xf32> to vector<32xf32>
    %11 = vector.shape_cast %10 : vector<32xf32> to vector<32x1xf32>
    %cst_10 = arith.constant 3.200000e+01 : f32
    %12 = vector.broadcast %cst_10 : f32 to vector<32x1xf32>
    %13 = arith.divf %11, %12 : vector<32x1xf32>
    %14 = vector.broadcast %13 : vector<32x1xf32> to vector<32x32xf32>
    %15 = arith.subf %5, %14 : vector<32x32xf32>
    %16 = arith.mulf %15, %15 : vector<32x32xf32>
    %cst_11 = arith.constant dense<0.000000e+00> : vector<32xf32>
    %17 = vector.multi_reduction <add>, %16, %cst_11 [1] : vector<32x32xf32> to vector<32xf32>
    %18 = vector.shape_cast %17 : vector<32xf32> to vector<32x1xf32>
    %cst_12 = arith.constant 3.200000e+01 : f32
    %19 = vector.broadcast %cst_12 : f32 to vector<32x1xf32>
    %20 = arith.divf %18, %19 : vector<32x1xf32>
    %21 = vector.broadcast %13 : vector<32x1xf32> to vector<32x32xf32>
    %22 = arith.subf %5, %21 : vector<32x32xf32>
    %cst_13 = arith.constant 9.99999974E-6 : f32
    %23 = vector.broadcast %cst_13 : f32 to vector<32x1xf32>
    %24 = arith.addf %20, %23 : vector<32x1xf32>
    %25 = math.rsqrt %24 : vector<32x1xf32>
    %26 = vector.broadcast %25 : vector<32x1xf32> to vector<32x32xf32>
    %27 = arith.mulf %22, %26 : vector<32x32xf32>
    %28 = vector.broadcast %8 : vector<1x32xf32> to vector<32x32xf32>
    %29 = arith.mulf %27, %28 : vector<32x32xf32>
    %30 = vector.broadcast %9 : vector<1x32xf32> to vector<32x32xf32>
    %31 = arith.addf %29, %30 : vector<32x32xf32>
    %c0_14 = arith.constant 0 : index
    %c0_15 = arith.constant 0 : index
    %c0_16 = arith.constant 0 : index
    %32 = vector.load %arg4[%c0_14, %c0_15, %c0_16] : memref<2x32x96xf32, #tpu.memory_space<vmem>>, vector<1x32x96xf32>
    %33 = vector.shape_cast %32 : vector<1x32x96xf32> to vector<32x96xf32>
    %cst_17 = arith.constant dense<0.000000e+00> : vector<32x96xf32>
    %34 = tpu.matmul %31, %33, %cst_17 {dimension_numbers = #tpu.dot_dimension_numbers<[1], [0], [0], [1], [0, 0, 1, 1], [], []>} : vector<32x32xf32>, vector<32x96xf32>, vector<32x96xf32> -> vector<32x96xf32>
    %35 = vector.shape_cast %34 : vector<32x96xf32> to vector<2x16x96xf32>
    %36 = vector.extract_strided_slice %35 {offsets = [0, 0, 0], sizes = [2, 16, 8], strides = [1, 1, 1]} : vector<2x16x96xf32> to vector<2x16x8xf32>
    %37 = vector.extract_strided_slice %35 {offsets = [0, 0, 32], sizes = [2, 16, 8], strides = [1, 1, 1]} : vector<2x16x96xf32> to vector<2x16x8xf32>
    %38 = vector.extract_strided_slice %35 {offsets = [0, 0, 64], sizes = [2, 16, 8], strides = [1, 1, 1]} : vector<2x16x96xf32> to vector<2x16x8xf32>
    "tpu.trace_start"() <{level = 10 : i32, message = "bnd,bmd->bnm"}> : () -> ()
    %cst_18 = arith.constant dense<0.000000e+00> : vector<2x16x16xf32>
    %39 = tpu.matmul %36, %37, %cst_18 {dimension_numbers = #tpu.dot_dimension_numbers<[2], [2], [1], [1], [0, 0, 0, 1, 1, 1], [0], [0]>} : vector<2x16x8xf32>, vector<2x16x8xf32>, vector<2x16x16xf32> -> vector<2x16x16xf32>
    "tpu.trace_stop"() : () -> ()
    %cst_19 = arith.constant dense<0xFF800000> : vector<2x16xf32>
    %40 = vector.multi_reduction <maximumf>, %39, %cst_19 [2] : vector<2x16x16xf32> to vector<2x16xf32>
    %41 = vector.shape_cast %40 : vector<2x16xf32> to vector<2x16x1xf32>
    %42 = vector.broadcast %41 : vector<2x16x1xf32> to vector<2x16x16xf32>
    %43 = arith.subf %39, %42 : vector<2x16x16xf32>
    %44 = math.exp %43 : vector<2x16x16xf32>
    %cst_20 = arith.constant dense<0.000000e+00> : vector<2x16xf32>
    %45 = vector.multi_reduction <add>, %44, %cst_20 [2] : vector<2x16x16xf32> to vector<2x16xf32>
    %46 = vector.shape_cast %45 : vector<2x16xf32> to vector<2x16x1xf32>
    %cst_21 = arith.constant 1.000000e+00 : f32
    %47 = vector.broadcast %cst_21 : f32 to vector<2x16x1xf32>
    %48 = arith.divf %47, %46 : vector<2x16x1xf32>
    %49 = vector.broadcast %48 : vector<2x16x1xf32> to vector<2x16x16xf32>
    %50 = arith.mulf %44, %49 : vector<2x16x16xf32>
    "tpu.trace_start"() <{level = 10 : i32, message = "bnm,bmd->bnd"}> : () -> ()
    %cst_22 = arith.constant dense<0.000000e+00> : vector<2x16x8xf32>
    %51 = tpu.matmul %50, %38, %cst_22 {dimension_numbers = #tpu.dot_dimension_numbers<[2], [1], [1], [2], [0, 0, 0, 1, 1, 2], [0], [0]>} : vector<2x16x16xf32>, vector<2x16x8xf32>, vector<2x16x8xf32> -> vector<2x16x8xf32>
    "tpu.trace_stop"() : () -> ()
    %52 = vector.extract_strided_slice %35 {offsets = [0, 0, 8], sizes = [2, 16, 8], strides = [1, 1, 1]} : vector<2x16x96xf32> to vector<2x16x8xf32>
    %53 = vector.extract_strided_slice %35 {offsets = [0, 0, 40], sizes = [2, 16, 8], strides = [1, 1, 1]} : vector<2x16x96xf32> to vector<2x16x8xf32>
    %54 = vector.extract_strided_slice %35 {offsets = [0, 0, 72], sizes = [2, 16, 8], strides = [1, 1, 1]} : vector<2x16x96xf32> to vector<2x16x8xf32>
    "tpu.trace_start"() <{level = 10 : i32, message = "bnd,bmd->bnm"}> : () -> ()
    %cst_23 = arith.constant dense<0.000000e+00> : vector<2x16x16xf32>
    %55 = tpu.matmul %52, %53, %cst_23 {dimension_numbers = #tpu.dot_dimension_numbers<[2], [2], [1], [1], [0, 0, 0, 1, 1, 1], [0], [0]>} : vector<2x16x8xf32>, vector<2x16x8xf32>, vector<2x16x16xf32> -> vector<2x16x16xf32>
    "tpu.trace_stop"() : () -> ()
    %cst_24 = arith.constant dense<0xFF800000> : vector<2x16xf32>
    %56 = vector.multi_reduction <maximumf>, %55, %cst_24 [2] : vector<2x16x16xf32> to vector<2x16xf32>
    %57 = vector.shape_cast %56 : vector<2x16xf32> to vector<2x16x1xf32>
    %58 = vector.broadcast %57 : vector<2x16x1xf32> to vector<2x16x16xf32>
    %59 = arith.subf %55, %58 : vector<2x16x16xf32>
    %60 = math.exp %59 : vector<2x16x16xf32>
    %cst_25 = arith.constant dense<0.000000e+00> : vector<2x16xf32>
    %61 = vector.multi_reduction <add>, %60, %cst_25 [2] : vector<2x16x16xf32> to vector<2x16xf32>
    %62 = vector.shape_cast %61 : vector<2x16xf32> to vector<2x16x1xf32>
    %cst_26 = arith.constant 1.000000e+00 : f32
    %63 = vector.broadcast %cst_26 : f32 to vector<2x16x1xf32>
    %64 = arith.divf %63, %62 : vector<2x16x1xf32>
    %65 = vector.broadcast %64 : vector<2x16x1xf32> to vector<2x16x16xf32>
    %66 = arith.mulf %60, %65 : vector<2x16x16xf32>
    "tpu.trace_start"() <{level = 10 : i32, message = "bnm,bmd->bnd"}> : () -> ()
    %cst_27 = arith.constant dense<0.000000e+00> : vector<2x16x8xf32>
    %67 = tpu.matmul %66, %54, %cst_27 {dimension_numbers = #tpu.dot_dimension_numbers<[2], [1], [1], [2], [0, 0, 0, 1, 1, 2], [0], [0]>} : vector<2x16x16xf32>, vector<2x16x8xf32>, vector<2x16x8xf32> -> vector<2x16x8xf32>
    "tpu.trace_stop"() : () -> ()
    %68 = vector.extract_strided_slice %35 {offsets = [0, 0, 16], sizes = [2, 16, 8], strides = [1, 1, 1]} : vector<2x16x96xf32> to vector<2x16x8xf32>
    %69 = vector.extract_strided_slice %35 {offsets = [0, 0, 48], sizes = [2, 16, 8], strides = [1, 1, 1]} : vector<2x16x96xf32> to vector<2x16x8xf32>
    %70 = vector.extract_strided_slice %35 {offsets = [0, 0, 80], sizes = [2, 16, 8], strides = [1, 1, 1]} : vector<2x16x96xf32> to vector<2x16x8xf32>
    "tpu.trace_start"() <{level = 10 : i32, message = "bnd,bmd->bnm"}> : () -> ()
    %cst_28 = arith.constant dense<0.000000e+00> : vector<2x16x16xf32>
    %71 = tpu.matmul %68, %69, %cst_28 {dimension_numbers = #tpu.dot_dimension_numbers<[2], [2], [1], [1], [0, 0, 0, 1, 1, 1], [0], [0]>} : vector<2x16x8xf32>, vector<2x16x8xf32>, vector<2x16x16xf32> -> vector<2x16x16xf32>
    "tpu.trace_stop"() : () -> ()
    %cst_29 = arith.constant dense<0xFF800000> : vector<2x16xf32>
    %72 = vector.multi_reduction <maximumf>, %71, %cst_29 [2] : vector<2x16x16xf32> to vector<2x16xf32>
    %73 = vector.shape_cast %72 : vector<2x16xf32> to vector<2x16x1xf32>
    %74 = vector.broadcast %73 : vector<2x16x1xf32> to vector<2x16x16xf32>
    %75 = arith.subf %71, %74 : vector<2x16x16xf32>
    %76 = math.exp %75 : vector<2x16x16xf32>
    %cst_30 = arith.constant dense<0.000000e+00> : vector<2x16xf32>
    %77 = vector.multi_reduction <add>, %76, %cst_30 [2] : vector<2x16x16xf32> to vector<2x16xf32>
    %78 = vector.shape_cast %77 : vector<2x16xf32> to vector<2x16x1xf32>
    %cst_31 = arith.constant 1.000000e+00 : f32
    %79 = vector.broadcast %cst_31 : f32 to vector<2x16x1xf32>
    %80 = arith.divf %79, %78 : vector<2x16x1xf32>
    %81 = vector.broadcast %80 : vector<2x16x1xf32> to vector<2x16x16xf32>
    %82 = arith.mulf %76, %81 : vector<2x16x16xf32>
    "tpu.trace_start"() <{level = 10 : i32, message = "bnm,bmd->bnd"}> : () -> ()
    %cst_32 = arith.constant dense<0.000000e+00> : vector<2x16x8xf32>
    %83 = tpu.matmul %82, %70, %cst_32 {dimension_numbers = #tpu.dot_dimension_numbers<[2], [1], [1], [2], [0, 0, 0, 1, 1, 2], [0], [0]>} : vector<2x16x16xf32>, vector<2x16x8xf32>, vector<2x16x8xf32> -> vector<2x16x8xf32>
    "tpu.trace_stop"() : () -> ()
    %84 = vector.extract_strided_slice %35 {offsets = [0, 0, 24], sizes = [2, 16, 8], strides = [1, 1, 1]} : vector<2x16x96xf32> to vector<2x16x8xf32>
    %85 = vector.extract_strided_slice %35 {offsets = [0, 0, 56], sizes = [2, 16, 8], strides = [1, 1, 1]} : vector<2x16x96xf32> to vector<2x16x8xf32>
    %86 = vector.extract_strided_slice %35 {offsets = [0, 0, 88], sizes = [2, 16, 8], strides = [1, 1, 1]} : vector<2x16x96xf32> to vector<2x16x8xf32>
    "tpu.trace_start"() <{level = 10 : i32, message = "bnd,bmd->bnm"}> : () -> ()
    %cst_33 = arith.constant dense<0.000000e+00> : vector<2x16x16xf32>
    %87 = tpu.matmul %84, %85, %cst_33 {dimension_numbers = #tpu.dot_dimension_numbers<[2], [2], [1], [1], [0, 0, 0, 1, 1, 1], [0], [0]>} : vector<2x16x8xf32>, vector<2x16x8xf32>, vector<2x16x16xf32> -> vector<2x16x16xf32>
    "tpu.trace_stop"() : () -> ()
    %cst_34 = arith.constant dense<0xFF800000> : vector<2x16xf32>
    %88 = vector.multi_reduction <maximumf>, %87, %cst_34 [2] : vector<2x16x16xf32> to vector<2x16xf32>
    %89 = vector.shape_cast %88 : vector<2x16xf32> to vector<2x16x1xf32>
    %90 = vector.broadcast %89 : vector<2x16x1xf32> to vector<2x16x16xf32>
    %91 = arith.subf %87, %90 : vector<2x16x16xf32>
    %92 = math.exp %91 : vector<2x16x16xf32>
    %cst_35 = arith.constant dense<0.000000e+00> : vector<2x16xf32>
    %93 = vector.multi_reduction <add>, %92, %cst_35 [2] : vector<2x16x16xf32> to vector<2x16xf32>
    %94 = vector.shape_cast %93 : vector<2x16xf32> to vector<2x16x1xf32>
    %cst_36 = arith.constant 1.000000e+00 : f32
    %95 = vector.broadcast %cst_36 : f32 to vector<2x16x1xf32>
    %96 = arith.divf %95, %94 : vector<2x16x1xf32>
    %97 = vector.broadcast %96 : vector<2x16x1xf32> to vector<2x16x16xf32>
    %98 = arith.mulf %92, %97 : vector<2x16x16xf32>
    "tpu.trace_start"() <{level = 10 : i32, message = "bnm,bmd->bnd"}> : () -> ()
    %cst_37 = arith.constant dense<0.000000e+00> : vector<2x16x8xf32>
    %99 = tpu.matmul %98, %86, %cst_37 {dimension_numbers = #tpu.dot_dimension_numbers<[2], [1], [1], [2], [0, 0, 0, 1, 1, 2], [0], [0]>} : vector<2x16x16xf32>, vector<2x16x8xf32>, vector<2x16x8xf32> -> vector<2x16x8xf32>
    "tpu.trace_stop"() : () -> ()
    %100 = tpu.concatenate %51, %67, %83, %99 in 2 : vector<2x16x8xf32>, vector<2x16x8xf32>, vector<2x16x8xf32>, vector<2x16x8xf32> -> vector<2x16x32xf32>
    %101 = vector.shape_cast %100 : vector<2x16x32xf32> to vector<32x32xf32>
    %c0_38 = arith.constant 0 : index
    %c0_39 = arith.constant 0 : index
    %c0_40 = arith.constant 0 : index
    %102 = vector.load %arg5[%c0_38, %c0_39, %c0_40] : memref<2x32x32xf32, #tpu.memory_space<vmem>>, vector<1x32x32xf32>
    %103 = vector.shape_cast %102 : vector<1x32x32xf32> to vector<32x32xf32>
    %cst_41 = arith.constant dense<0.000000e+00> : vector<32x32xf32>
    %104 = tpu.matmul %101, %103, %cst_41 {dimension_numbers = #tpu.dot_dimension_numbers<[1], [0], [0], [1], [0, 0, 1, 1], [], []>} : vector<32x32xf32>, vector<32x32xf32>, vector<32x32xf32> -> vector<32x32xf32>
    %105 = arith.addf %5, %104 : vector<32x32xf32>
    %106 = vector.extract_strided_slice %7 {offsets = [4, 0], sizes = [1, 32], strides = [1, 1]} : vector<6x32xf32> to vector<1x32xf32>
    %107 = vector.broadcast %106 : vector<1x32xf32> to vector<32x32xf32>
    %108 = arith.addf %105, %107 : vector<32x32xf32>
    %109 = vector.extract_strided_slice %7 {offsets = [2, 0], sizes = [1, 32], strides = [1, 1]} : vector<6x32xf32> to vector<1x32xf32>
    %110 = vector.extract_strided_slice %7 {offsets = [3, 0], sizes = [1, 32], strides = [1, 1]} : vector<6x32xf32> to vector<1x32xf32>
    %cst_42 = arith.constant dense<0.000000e+00> : vector<32xf32>
    %111 = vector.multi_reduction <add>, %108, %cst_42 [1] : vector<32x32xf32> to vector<32xf32>
    %112 = vector.shape_cast %111 : vector<32xf32> to vector<32x1xf32>
    %cst_43 = arith.constant 3.200000e+01 : f32
    %113 = vector.broadcast %cst_43 : f32 to vector<32x1xf32>
    %114 = arith.divf %112, %113 : vector<32x1xf32>
    %115 = vector.broadcast %114 : vector<32x1xf32> to vector<32x32xf32>
    %116 = arith.subf %108, %115 : vector<32x32xf32>
    %117 = arith.mulf %116, %116 : vector<32x32xf32>
    %cst_44 = arith.constant dense<0.000000e+00> : vector<32xf32>
    %118 = vector.multi_reduction <add>, %117, %cst_44 [1] : vector<32x32xf32> to vector<32xf32>
    %119 = vector.shape_cast %118 : vector<32xf32> to vector<32x1xf32>
    %cst_45 = arith.constant 3.200000e+01 : f32
    %120 = vector.broadcast %cst_45 : f32 to vector<32x1xf32>
    %121 = arith.divf %119, %120 : vector<32x1xf32>
    %122 = vector.broadcast %114 : vector<32x1xf32> to vector<32x32xf32>
    %123 = arith.subf %108, %122 : vector<32x32xf32>
    %cst_46 = arith.constant 9.99999974E-6 : f32
    %124 = vector.broadcast %cst_46 : f32 to vector<32x1xf32>
    %125 = arith.addf %121, %124 : vector<32x1xf32>
    %126 = math.rsqrt %125 : vector<32x1xf32>
    %127 = vector.broadcast %126 : vector<32x1xf32> to vector<32x32xf32>
    %128 = arith.mulf %123, %127 : vector<32x32xf32>
    %129 = vector.broadcast %109 : vector<1x32xf32> to vector<32x32xf32>
    %130 = arith.mulf %128, %129 : vector<32x32xf32>
    %131 = vector.broadcast %110 : vector<1x32xf32> to vector<32x32xf32>
    %132 = arith.addf %130, %131 : vector<32x32xf32>
    %c0_47 = arith.constant 0 : index
    %c0_48 = arith.constant 0 : index
    %c0_49 = arith.constant 0 : index
    %133 = vector.load %arg7[%c0_47, %c0_48, %c0_49] : memref<2x32x64xf32, #tpu.memory_space<vmem>>, vector<1x32x64xf32>
    %134 = vector.shape_cast %133 : vector<1x32x64xf32> to vector<32x64xf32>
    %cst_50 = arith.constant dense<0.000000e+00> : vector<32x64xf32>
    %135 = tpu.matmul %132, %134, %cst_50 {dimension_numbers = #tpu.dot_dimension_numbers<[1], [0], [0], [1], [0, 0, 1, 1], [], []>} : vector<32x32xf32>, vector<32x64xf32>, vector<32x64xf32> -> vector<32x64xf32>
    %c0_51 = arith.constant 0 : index
    %c0_52 = arith.constant 0 : index
    %c0_53 = arith.constant 0 : index
    %136 = vector.load %arg8[%c0_51, %c0_52, %c0_53] : memref<2x1x64xf32, #tpu.memory_space<vmem>>, vector<1x1x64xf32>
    %137 = vector.shape_cast %136 : vector<1x1x64xf32> to vector<1x64xf32>
    %138 = vector.broadcast %137 : vector<1x64xf32> to vector<32x64xf32>
    %139 = arith.addf %135, %138 : vector<32x64xf32>
    %cst_54 = arith.constant 5.000000e-01 : f32
    %140 = vector.broadcast %cst_54 : f32 to vector<32x64xf32>
    %141 = arith.mulf %140, %139 : vector<32x64xf32>
    %cst_55 = arith.constant 0.707106769 : f32
    %142 = vector.broadcast %cst_55 : f32 to vector<32x64xf32>
    %143 = arith.mulf %139, %142 : vector<32x64xf32>
    %144 = math.erf %143 : vector<32x64xf32>
    %cst_56 = arith.constant 1.000000e+00 : f32
    %145 = vector.broadcast %cst_56 : f32 to vector<32x64xf32>
    %146 = arith.addf %145, %144 : vector<32x64xf32>
    %147 = arith.mulf %141, %146 : vector<32x64xf32>
    %c0_57 = arith.constant 0 : index
    %c0_58 = arith.constant 0 : index
    %c0_59 = arith.constant 0 : index
    %148 = vector.load %arg9[%c0_57, %c0_58, %c0_59] : memref<2x64x32xf32, #tpu.memory_space<vmem>>, vector<1x64x32xf32>
    %149 = vector.shape_cast %148 : vector<1x64x32xf32> to vector<64x32xf32>
    %cst_60 = arith.constant dense<0.000000e+00> : vector<32x32xf32>
    %150 = tpu.matmul %147, %149, %cst_60 {dimension_numbers = #tpu.dot_dimension_numbers<[1], [0], [0], [1], [0, 0, 1, 1], [], []>} : vector<32x64xf32>, vector<64x32xf32>, vector<32x32xf32> -> vector<32x32xf32>
    %151 = arith.addf %108, %150 : vector<32x32xf32>
    %152 = vector.extract_strided_slice %7 {offsets = [5, 0], sizes = [1, 32], strides = [1, 1]} : vector<6x32xf32> to vector<1x32xf32>
    %153 = vector.broadcast %152 : vector<1x32xf32> to vector<32x32xf32>
    %154 = arith.addf %151, %153 : vector<32x32xf32>
    %c1 = arith.constant 1 : index
    %c0_61 = arith.constant 0 : index
    %c0_62 = arith.constant 0 : index
    %155 = vector.load %arg6[%c1, %c0_61, %c0_62] : memref<2x6x32xf32, #tpu.memory_space<vmem>>, vector<1x6x32xf32>
    %156 = vector.shape_cast %155 : vector<1x6x32xf32> to vector<6x32xf32>
    %157 = vector.extract_strided_slice %156 {offsets = [0, 0], sizes = [1, 32], strides = [1, 1]} : vector<6x32xf32> to vector<1x32xf32>
    %158 = vector.extract_strided_slice %156 {offsets = [1, 0], sizes = [1, 32], strides = [1, 1]} : vector<6x32xf32> to vector<1x32xf32>
    %cst_63 = arith.constant dense<0.000000e+00> : vector<32xf32>
    %159 = vector.multi_reduction <add>, %154, %cst_63 [1] : vector<32x32xf32> to vector<32xf32>
    %160 = vector.shape_cast %159 : vector<32xf32> to vector<32x1xf32>
    %cst_64 = arith.constant 3.200000e+01 : f32
    %161 = vector.broadcast %cst_64 : f32 to vector<32x1xf32>
    %162 = arith.divf %160, %161 : vector<32x1xf32>
    %163 = vector.broadcast %162 : vector<32x1xf32> to vector<32x32xf32>
    %164 = arith.subf %154, %163 : vector<32x32xf32>
    %165 = arith.mulf %164, %164 : vector<32x32xf32>
    %cst_65 = arith.constant dense<0.000000e+00> : vector<32xf32>
    %166 = vector.multi_reduction <add>, %165, %cst_65 [1] : vector<32x32xf32> to vector<32xf32>
    %167 = vector.shape_cast %166 : vector<32xf32> to vector<32x1xf32>
    %cst_66 = arith.constant 3.200000e+01 : f32
    %168 = vector.broadcast %cst_66 : f32 to vector<32x1xf32>
    %169 = arith.divf %167, %168 : vector<32x1xf32>
    %170 = vector.broadcast %162 : vector<32x1xf32> to vector<32x32xf32>
    %171 = arith.subf %154, %170 : vector<32x32xf32>
    %cst_67 = arith.constant 9.99999974E-6 : f32
    %172 = vector.broadcast %cst_67 : f32 to vector<32x1xf32>
    %173 = arith.addf %169, %172 : vector<32x1xf32>
    %174 = math.rsqrt %173 : vector<32x1xf32>
    %175 = vector.broadcast %174 : vector<32x1xf32> to vector<32x32xf32>
    %176 = arith.mulf %171, %175 : vector<32x32xf32>
    %177 = vector.broadcast %157 : vector<1x32xf32> to vector<32x32xf32>
    %178 = arith.mulf %176, %177 : vector<32x32xf32>
    %179 = vector.broadcast %158 : vector<1x32xf32> to vector<32x32xf32>
    %180 = arith.addf %178, %179 : vector<32x32xf32>
    %c1_68 = arith.constant 1 : index
    %c0_69 = arith.constant 0 : index
    %c0_70 = arith.constant 0 : index
    %181 = vector.load %arg4[%c1_68, %c0_69, %c0_70] : memref<2x32x96xf32, #tpu.memory_space<vmem>>, vector<1x32x96xf32>
    %182 = vector.shape_cast %181 : vector<1x32x96xf32> to vector<32x96xf32>
    %cst_71 = arith.constant dense<0.000000e+00> : vector<32x96xf32>
    %183 = tpu.matmul %180, %182, %cst_71 {dimension_numbers = #tpu.dot_dimension_numbers<[1], [0], [0], [1], [0, 0, 1, 1], [], []>} : vector<32x32xf32>, vector<32x96xf32>, vector<32x96xf32> -> vector<32x96xf32>
    %184 = vector.shape_cast %183 : vector<32x96xf32> to vector<2x16x96xf32>
    %185 = vector.extract_strided_slice %184 {offsets = [0, 0, 0], sizes = [2, 16, 8], strides = [1, 1, 1]} : vector<2x16x96xf32> to vector<2x16x8xf32>
    %186 = vector.extract_strided_slice %184 {offsets = [0, 0, 32], sizes = [2, 16, 8], strides = [1, 1, 1]} : vector<2x16x96xf32> to vector<2x16x8xf32>
    %187 = vector.extract_strided_slice %184 {offsets = [0, 0, 64], sizes = [2, 16, 8], strides = [1, 1, 1]} : vector<2x16x96xf32> to vector<2x16x8xf32>
    "tpu.trace_start"() <{level = 10 : i32, message = "bnd,bmd->bnm"}> : () -> ()
    %cst_72 = arith.constant dense<0.000000e+00> : vector<2x16x16xf32>
    %188 = tpu.matmul %185, %186, %cst_72 {dimension_numbers = #tpu.dot_dimension_numbers<[2], [2], [1], [1], [0, 0, 0, 1, 1, 1], [0], [0]>} : vector<2x16x8xf32>, vector<2x16x8xf32>, vector<2x16x16xf32> -> vector<2x16x16xf32>
    "tpu.trace_stop"() : () -> ()
    %cst_73 = arith.constant dense<0xFF800000> : vector<2x16xf32>
    %189 = vector.multi_reduction <maximumf>, %188, %cst_73 [2] : vector<2x16x16xf32> to vector<2x16xf32>
    %190 = vector.shape_cast %189 : vector<2x16xf32> to vector<2x16x1xf32>
    %191 = vector.broadcast %190 : vector<2x16x1xf32> to vector<2x16x16xf32>
    %192 = arith.subf %188, %191 : vector<2x16x16xf32>
    %193 = math.exp %192 : vector<2x16x16xf32>
    %cst_74 = arith.constant dense<0.000000e+00> : vector<2x16xf32>
    %194 = vector.multi_reduction <add>, %193, %cst_74 [2] : vector<2x16x16xf32> to vector<2x16xf32>
    %195 = vector.shape_cast %194 : vector<2x16xf32> to vector<2x16x1xf32>
    %cst_75 = arith.constant 1.000000e+00 : f32
    %196 = vector.broadcast %cst_75 : f32 to vector<2x16x1xf32>
    %197 = arith.divf %196, %195 : vector<2x16x1xf32>
    %198 = vector.broadcast %197 : vector<2x16x1xf32> to vector<2x16x16xf32>
    %199 = arith.mulf %193, %198 : vector<2x16x16xf32>
    "tpu.trace_start"() <{level = 10 : i32, message = "bnm,bmd->bnd"}> : () -> ()
    %cst_76 = arith.constant dense<0.000000e+00> : vector<2x16x8xf32>
    %200 = tpu.matmul %199, %187, %cst_76 {dimension_numbers = #tpu.dot_dimension_numbers<[2], [1], [1], [2], [0, 0, 0, 1, 1, 2], [0], [0]>} : vector<2x16x16xf32>, vector<2x16x8xf32>, vector<2x16x8xf32> -> vector<2x16x8xf32>
    "tpu.trace_stop"() : () -> ()
    %201 = vector.extract_strided_slice %184 {offsets = [0, 0, 8], sizes = [2, 16, 8], strides = [1, 1, 1]} : vector<2x16x96xf32> to vector<2x16x8xf32>
    %202 = vector.extract_strided_slice %184 {offsets = [0, 0, 40], sizes = [2, 16, 8], strides = [1, 1, 1]} : vector<2x16x96xf32> to vector<2x16x8xf32>
    %203 = vector.extract_strided_slice %184 {offsets = [0, 0, 72], sizes = [2, 16, 8], strides = [1, 1, 1]} : vector<2x16x96xf32> to vector<2x16x8xf32>
    "tpu.trace_start"() <{level = 10 : i32, message = "bnd,bmd->bnm"}> : () -> ()
    %cst_77 = arith.constant dense<0.000000e+00> : vector<2x16x16xf32>
    %204 = tpu.matmul %201, %202, %cst_77 {dimension_numbers = #tpu.dot_dimension_numbers<[2], [2], [1], [1], [0, 0, 0, 1, 1, 1], [0], [0]>} : vector<2x16x8xf32>, vector<2x16x8xf32>, vector<2x16x16xf32> -> vector<2x16x16xf32>
    "tpu.trace_stop"() : () -> ()
    %cst_78 = arith.constant dense<0xFF800000> : vector<2x16xf32>
    %205 = vector.multi_reduction <maximumf>, %204, %cst_78 [2] : vector<2x16x16xf32> to vector<2x16xf32>
    %206 = vector.shape_cast %205 : vector<2x16xf32> to vector<2x16x1xf32>
    %207 = vector.broadcast %206 : vector<2x16x1xf32> to vector<2x16x16xf32>
    %208 = arith.subf %204, %207 : vector<2x16x16xf32>
    %209 = math.exp %208 : vector<2x16x16xf32>
    %cst_79 = arith.constant dense<0.000000e+00> : vector<2x16xf32>
    %210 = vector.multi_reduction <add>, %209, %cst_79 [2] : vector<2x16x16xf32> to vector<2x16xf32>
    %211 = vector.shape_cast %210 : vector<2x16xf32> to vector<2x16x1xf32>
    %cst_80 = arith.constant 1.000000e+00 : f32
    %212 = vector.broadcast %cst_80 : f32 to vector<2x16x1xf32>
    %213 = arith.divf %212, %211 : vector<2x16x1xf32>
    %214 = vector.broadcast %213 : vector<2x16x1xf32> to vector<2x16x16xf32>
    %215 = arith.mulf %209, %214 : vector<2x16x16xf32>
    "tpu.trace_start"() <{level = 10 : i32, message = "bnm,bmd->bnd"}> : () -> ()
    %cst_81 = arith.constant dense<0.000000e+00> : vector<2x16x8xf32>
    %216 = tpu.matmul %215, %203, %cst_81 {dimension_numbers = #tpu.dot_dimension_numbers<[2], [1], [1], [2], [0, 0, 0, 1, 1, 2], [0], [0]>} : vector<2x16x16xf32>, vector<2x16x8xf32>, vector<2x16x8xf32> -> vector<2x16x8xf32>
    "tpu.trace_stop"() : () -> ()
    %217 = vector.extract_strided_slice %184 {offsets = [0, 0, 16], sizes = [2, 16, 8], strides = [1, 1, 1]} : vector<2x16x96xf32> to vector<2x16x8xf32>
    %218 = vector.extract_strided_slice %184 {offsets = [0, 0, 48], sizes = [2, 16, 8], strides = [1, 1, 1]} : vector<2x16x96xf32> to vector<2x16x8xf32>
    %219 = vector.extract_strided_slice %184 {offsets = [0, 0, 80], sizes = [2, 16, 8], strides = [1, 1, 1]} : vector<2x16x96xf32> to vector<2x16x8xf32>
    "tpu.trace_start"() <{level = 10 : i32, message = "bnd,bmd->bnm"}> : () -> ()
    %cst_82 = arith.constant dense<0.000000e+00> : vector<2x16x16xf32>
    %220 = tpu.matmul %217, %218, %cst_82 {dimension_numbers = #tpu.dot_dimension_numbers<[2], [2], [1], [1], [0, 0, 0, 1, 1, 1], [0], [0]>} : vector<2x16x8xf32>, vector<2x16x8xf32>, vector<2x16x16xf32> -> vector<2x16x16xf32>
    "tpu.trace_stop"() : () -> ()
    %cst_83 = arith.constant dense<0xFF800000> : vector<2x16xf32>
    %221 = vector.multi_reduction <maximumf>, %220, %cst_83 [2] : vector<2x16x16xf32> to vector<2x16xf32>
    %222 = vector.shape_cast %221 : vector<2x16xf32> to vector<2x16x1xf32>
    %223 = vector.broadcast %222 : vector<2x16x1xf32> to vector<2x16x16xf32>
    %224 = arith.subf %220, %223 : vector<2x16x16xf32>
    %225 = math.exp %224 : vector<2x16x16xf32>
    %cst_84 = arith.constant dense<0.000000e+00> : vector<2x16xf32>
    %226 = vector.multi_reduction <add>, %225, %cst_84 [2] : vector<2x16x16xf32> to vector<2x16xf32>
    %227 = vector.shape_cast %226 : vector<2x16xf32> to vector<2x16x1xf32>
    %cst_85 = arith.constant 1.000000e+00 : f32
    %228 = vector.broadcast %cst_85 : f32 to vector<2x16x1xf32>
    %229 = arith.divf %228, %227 : vector<2x16x1xf32>
    %230 = vector.broadcast %229 : vector<2x16x1xf32> to vector<2x16x16xf32>
    %231 = arith.mulf %225, %230 : vector<2x16x16xf32>
    "tpu.trace_start"() <{level = 10 : i32, message = "bnm,bmd->bnd"}> : () -> ()
    %cst_86 = arith.constant dense<0.000000e+00> : vector<2x16x8xf32>
    %232 = tpu.matmul %231, %219, %cst_86 {dimension_numbers = #tpu.dot_dimension_numbers<[2], [1], [1], [2], [0, 0, 0, 1, 1, 2], [0], [0]>} : vector<2x16x16xf32>, vector<2x16x8xf32>, vector<2x16x8xf32> -> vector<2x16x8xf32>
    "tpu.trace_stop"() : () -> ()
    %233 = vector.extract_strided_slice %184 {offsets = [0, 0, 24], sizes = [2, 16, 8], strides = [1, 1, 1]} : vector<2x16x96xf32> to vector<2x16x8xf32>
    %234 = vector.extract_strided_slice %184 {offsets = [0, 0, 56], sizes = [2, 16, 8], strides = [1, 1, 1]} : vector<2x16x96xf32> to vector<2x16x8xf32>
    %235 = vector.extract_strided_slice %184 {offsets = [0, 0, 88], sizes = [2, 16, 8], strides = [1, 1, 1]} : vector<2x16x96xf32> to vector<2x16x8xf32>
    "tpu.trace_start"() <{level = 10 : i32, message = "bnd,bmd->bnm"}> : () -> ()
    %cst_87 = arith.constant dense<0.000000e+00> : vector<2x16x16xf32>
    %236 = tpu.matmul %233, %234, %cst_87 {dimension_numbers = #tpu.dot_dimension_numbers<[2], [2], [1], [1], [0, 0, 0, 1, 1, 1], [0], [0]>} : vector<2x16x8xf32>, vector<2x16x8xf32>, vector<2x16x16xf32> -> vector<2x16x16xf32>
    "tpu.trace_stop"() : () -> ()
    %cst_88 = arith.constant dense<0xFF800000> : vector<2x16xf32>
    %237 = vector.multi_reduction <maximumf>, %236, %cst_88 [2] : vector<2x16x16xf32> to vector<2x16xf32>
    %238 = vector.shape_cast %237 : vector<2x16xf32> to vector<2x16x1xf32>
    %239 = vector.broadcast %238 : vector<2x16x1xf32> to vector<2x16x16xf32>
    %240 = arith.subf %236, %239 : vector<2x16x16xf32>
    %241 = math.exp %240 : vector<2x16x16xf32>
    %cst_89 = arith.constant dense<0.000000e+00> : vector<2x16xf32>
    %242 = vector.multi_reduction <add>, %241, %cst_89 [2] : vector<2x16x16xf32> to vector<2x16xf32>
    %243 = vector.shape_cast %242 : vector<2x16xf32> to vector<2x16x1xf32>
    %cst_90 = arith.constant 1.000000e+00 : f32
    %244 = vector.broadcast %cst_90 : f32 to vector<2x16x1xf32>
    %245 = arith.divf %244, %243 : vector<2x16x1xf32>
    %246 = vector.broadcast %245 : vector<2x16x1xf32> to vector<2x16x16xf32>
    %247 = arith.mulf %241, %246 : vector<2x16x16xf32>
    "tpu.trace_start"() <{level = 10 : i32, message = "bnm,bmd->bnd"}> : () -> ()
    %cst_91 = arith.constant dense<0.000000e+00> : vector<2x16x8xf32>
    %248 = tpu.matmul %247, %235, %cst_91 {dimension_numbers = #tpu.dot_dimension_numbers<[2], [1], [1], [2], [0, 0, 0, 1, 1, 2], [0], [0]>} : vector<2x16x16xf32>, vector<2x16x8xf32>, vector<2x16x8xf32> -> vector<2x16x8xf32>
    "tpu.trace_stop"() : () -> ()
    %249 = tpu.concatenate %200, %216, %232, %248 in 2 : vector<2x16x8xf32>, vector<2x16x8xf32>, vector<2x16x8xf32>, vector<2x16x8xf32> -> vector<2x16x32xf32>
    %250 = vector.shape_cast %249 : vector<2x16x32xf32> to vector<32x32xf32>
    %c1_92 = arith.constant 1 : index
    %c0_93 = arith.constant 0 : index
    %c0_94 = arith.constant 0 : index
    %251 = vector.load %arg5[%c1_92, %c0_93, %c0_94] : memref<2x32x32xf32, #tpu.memory_space<vmem>>, vector<1x32x32xf32>
    %252 = vector.shape_cast %251 : vector<1x32x32xf32> to vector<32x32xf32>
    %cst_95 = arith.constant dense<0.000000e+00> : vector<32x32xf32>
    %253 = tpu.matmul %250, %252, %cst_95 {dimension_numbers = #tpu.dot_dimension_numbers<[1], [0], [0], [1], [0, 0, 1, 1], [], []>} : vector<32x32xf32>, vector<32x32xf32>, vector<32x32xf32> -> vector<32x32xf32>
    %254 = arith.addf %154, %253 : vector<32x32xf32>
    %255 = vector.extract_strided_slice %156 {offsets = [4, 0], sizes = [1, 32], strides = [1, 1]} : vector<6x32xf32> to vector<1x32xf32>
    %256 = vector.broadcast %255 : vector<1x32xf32> to vector<32x32xf32>
    %257 = arith.addf %254, %256 : vector<32x32xf32>
    %258 = vector.extract_strided_slice %156 {offsets = [2, 0], sizes = [1, 32], strides = [1, 1]} : vector<6x32xf32> to vector<1x32xf32>
    %259 = vector.extract_strided_slice %156 {offsets = [3, 0], sizes = [1, 32], strides = [1, 1]} : vector<6x32xf32> to vector<1x32xf32>
    %cst_96 = arith.constant dense<0.000000e+00> : vector<32xf32>
    %260 = vector.multi_reduction <add>, %257, %cst_96 [1] : vector<32x32xf32> to vector<32xf32>
    %261 = vector.shape_cast %260 : vector<32xf32> to vector<32x1xf32>
    %cst_97 = arith.constant 3.200000e+01 : f32
    %262 = vector.broadcast %cst_97 : f32 to vector<32x1xf32>
    %263 = arith.divf %261, %262 : vector<32x1xf32>
    %264 = vector.broadcast %263 : vector<32x1xf32> to vector<32x32xf32>
    %265 = arith.subf %257, %264 : vector<32x32xf32>
    %266 = arith.mulf %265, %265 : vector<32x32xf32>
    %cst_98 = arith.constant dense<0.000000e+00> : vector<32xf32>
    %267 = vector.multi_reduction <add>, %266, %cst_98 [1] : vector<32x32xf32> to vector<32xf32>
    %268 = vector.shape_cast %267 : vector<32xf32> to vector<32x1xf32>
    %cst_99 = arith.constant 3.200000e+01 : f32
    %269 = vector.broadcast %cst_99 : f32 to vector<32x1xf32>
    %270 = arith.divf %268, %269 : vector<32x1xf32>
    %271 = vector.broadcast %263 : vector<32x1xf32> to vector<32x32xf32>
    %272 = arith.subf %257, %271 : vector<32x32xf32>
    %cst_100 = arith.constant 9.99999974E-6 : f32
    %273 = vector.broadcast %cst_100 : f32 to vector<32x1xf32>
    %274 = arith.addf %270, %273 : vector<32x1xf32>
    %275 = math.rsqrt %274 : vector<32x1xf32>
    %276 = vector.broadcast %275 : vector<32x1xf32> to vector<32x32xf32>
    %277 = arith.mulf %272, %276 : vector<32x32xf32>
    %278 = vector.broadcast %258 : vector<1x32xf32> to vector<32x32xf32>
    %279 = arith.mulf %277, %278 : vector<32x32xf32>
    %280 = vector.broadcast %259 : vector<1x32xf32> to vector<32x32xf32>
    %281 = arith.addf %279, %280 : vector<32x32xf32>
    %c1_101 = arith.constant 1 : index
    %c0_102 = arith.constant 0 : index
    %c0_103 = arith.constant 0 : index
    %282 = vector.load %arg7[%c1_101, %c0_102, %c0_103] : memref<2x32x64xf32, #tpu.memory_space<vmem>>, vector<1x32x64xf32>
    %283 = vector.shape_cast %282 : vector<1x32x64xf32> to vector<32x64xf32>
    %cst_104 = arith.constant dense<0.000000e+00> : vector<32x64xf32>
    %284 = tpu.matmul %281, %283, %cst_104 {dimension_numbers = #tpu.dot_dimension_numbers<[1], [0], [0], [1], [0, 0, 1, 1], [], []>} : vector<32x32xf32>, vector<32x64xf32>, vector<32x64xf32> -> vector<32x64xf32>
    %c1_105 = arith.constant 1 : index
    %c0_106 = arith.constant 0 : index
    %c0_107 = arith.constant 0 : index
    %285 = vector.load %arg8[%c1_105, %c0_106, %c0_107] : memref<2x1x64xf32, #tpu.memory_space<vmem>>, vector<1x1x64xf32>
    %286 = vector.shape_cast %285 : vector<1x1x64xf32> to vector<1x64xf32>
    %287 = vector.broadcast %286 : vector<1x64xf32> to vector<32x64xf32>
    %288 = arith.addf %284, %287 : vector<32x64xf32>
    %cst_108 = arith.constant 5.000000e-01 : f32
    %289 = vector.broadcast %cst_108 : f32 to vector<32x64xf32>
    %290 = arith.mulf %289, %288 : vector<32x64xf32>
    %cst_109 = arith.constant 0.707106769 : f32
    %291 = vector.broadcast %cst_109 : f32 to vector<32x64xf32>
    %292 = arith.mulf %288, %291 : vector<32x64xf32>
    %293 = math.erf %292 : vector<32x64xf32>
    %cst_110 = arith.constant 1.000000e+00 : f32
    %294 = vector.broadcast %cst_110 : f32 to vector<32x64xf32>
    %295 = arith.addf %294, %293 : vector<32x64xf32>
    %296 = arith.mulf %290, %295 : vector<32x64xf32>
    %c1_111 = arith.constant 1 : index
    %c0_112 = arith.constant 0 : index
    %c0_113 = arith.constant 0 : index
    %297 = vector.load %arg9[%c1_111, %c0_112, %c0_113] : memref<2x64x32xf32, #tpu.memory_space<vmem>>, vector<1x64x32xf32>
    %298 = vector.shape_cast %297 : vector<1x64x32xf32> to vector<64x32xf32>
    %cst_114 = arith.constant dense<0.000000e+00> : vector<32x32xf32>
    %299 = tpu.matmul %296, %298, %cst_114 {dimension_numbers = #tpu.dot_dimension_numbers<[1], [0], [0], [1], [0, 0, 1, 1], [], []>} : vector<32x64xf32>, vector<64x32xf32>, vector<32x32xf32> -> vector<32x32xf32>
    %300 = arith.addf %257, %299 : vector<32x32xf32>
    %301 = vector.extract_strided_slice %156 {offsets = [5, 0], sizes = [1, 32], strides = [1, 1]} : vector<6x32xf32> to vector<1x32xf32>
    %302 = vector.broadcast %301 : vector<1x32xf32> to vector<32x32xf32>
    %303 = arith.addf %300, %302 : vector<32x32xf32>
    %304 = vector.shape_cast %303 : vector<32x32xf32> to vector<2x16x32xf32>
    %c0_115 = arith.constant 0 : index
    %c0_116 = arith.constant 0 : index
    %c0_117 = arith.constant 0 : index
    %305 = vector.load %arg10[%c0_115, %c0_116, %c0_117] : memref<2x16x32xf32, #tpu.memory_space<vmem>>, vector<2x16x32xf32>
    tpu.vector_store %arg10[%c0_115, %c0_116, %c0_117], %304 {strides = array<i32>} : memref<2x16x32xf32, #tpu.memory_space<vmem>>, vector<2x16x32xf32>,
    return
  }
  func.func @transform_0(%arg0: i32) -> (i32, i32, i32) {
    %c0_i32 = arith.constant 0 : i32
    %c0_i32_0 = arith.constant 0 : i32
    %c0_i32_1 = arith.constant 0 : i32
    return %arg0, %c0_i32, %c0_i32_0 : i32, i32, i32
  }
  func.func @transform_1(%arg0: i32) -> (i32, i32) {
    %c0_i32 = arith.constant 0 : i32
    %c0_i32_0 = arith.constant 0 : i32
    %c0_i32_1 = arith.constant 0 : i32
    return %c0_i32, %c0_i32_0 : i32, i32
  }
  func.func @transform_2(%arg0: i32) -> (i32, i32) {
    %c0_i32 = arith.constant 0 : i32
    %c0_i32_0 = arith.constant 0 : i32
    %c0_i32_1 = arith.constant 0 : i32
    return %c0_i32, %c0_i32_0 : i32, i32
  }
  func.func @transform_3(%arg0: i32) -> (i32, i32, i32) {
    %c0_i32 = arith.constant 0 : i32
    %c0_i32_0 = arith.constant 0 : i32
    %c0_i32_1 = arith.constant 0 : i32
    %c0_i32_2 = arith.constant 0 : i32
    return %c0_i32, %c0_i32_0, %c0_i32_1 : i32, i32, i32
  }
  func.func @transform_4(%arg0: i32) -> (i32, i32, i32) {
    %c0_i32 = arith.constant 0 : i32
    %c0_i32_0 = arith.constant 0 : i32
    %c0_i32_1 = arith.constant 0 : i32
    %c0_i32_2 = arith.constant 0 : i32
    return %c0_i32, %c0_i32_0, %c0_i32_1 : i32, i32, i32
  }
  func.func @transform_5(%arg0: i32) -> (i32, i32, i32) {
    %c0_i32 = arith.constant 0 : i32
    %c0_i32_0 = arith.constant 0 : i32
    %c0_i32_1 = arith.constant 0 : i32
    %c0_i32_2 = arith.constant 0 : i32
    return %c0_i32, %c0_i32_0, %c0_i32_1 : i32, i32, i32
  }
  func.func @transform_6(%arg0: i32) -> (i32, i32, i32) {
    %c0_i32 = arith.constant 0 : i32
    %c0_i32_0 = arith.constant 0 : i32
    %c0_i32_1 = arith.constant 0 : i32
    %c0_i32_2 = arith.constant 0 : i32
    return %c0_i32, %c0_i32_0, %c0_i32_1 : i32, i32, i32
  }
  func.func @transform_7(%arg0: i32) -> (i32, i32, i32) {
    %c0_i32 = arith.constant 0 : i32
    %c0_i32_0 = arith.constant 0 : i32
    %c0_i32_1 = arith.constant 0 : i32
    %c0_i32_2 = arith.constant 0 : i32
    return %c0_i32, %c0_i32_0, %c0_i32_1 : i32, i32, i32
  }
  func.func @transform_8(%arg0: i32) -> (i32, i32, i32) {
    %c0_i32 = arith.constant 0 : i32
    %c0_i32_0 = arith.constant 0 : i32
    %c0_i32_1 = arith.constant 0 : i32
    %c0_i32_2 = arith.constant 0 : i32
    return %c0_i32, %c0_i32_0, %c0_i32_1 : i32, i32, i32
  }
  func.func @transform_9(%arg0: i32) -> (i32, i32, i32) {
    %c0_i32 = arith.constant 0 : i32
    %c0_i32_0 = arith.constant 0 : i32
    %c0_i32_1 = arith.constant 0 : i32
    return %arg0, %c0_i32, %c0_i32_0 : i32, i32, i32
  }
}

</mosaic_0001>

<llo_original>
// kernel: vit_forward.1
$region0: #{vit_forward.1}
  #allocation0 [shape = 'u32[]', space=smem, size = 0x4, offset = 0x4, fixed_abs, tag = 'smem constant byte address 0x4 - core index']
  #allocation1 [shape = 'u32[144,128]{1,0:T(1,128)}', space=vmem, size = 0x12000, scoped, tag = 'internal scratch']
  %s0 = inlined_call_operand.vmem [shape: f32[2,16,48], index: 0, kind: input, shape index: {}]
  %s1 = inlined_call_operand.vmem [shape: f32[48,32], index: 1, kind: input, shape index: {}]
  %s2 = inlined_call_operand.vmem [shape: f32[32,32], index: 2, kind: input, shape index: {}]
  %s3 = inlined_call_operand.vmem [shape: f32[2,32,96], index: 3, kind: input, shape index: {}]
  %s4 = inlined_call_operand.vmem [shape: f32[2,32,32], index: 4, kind: input, shape index: {}]
  %s5 = inlined_call_operand.vmem [shape: f32[2,6,32], index: 5, kind: input, shape index: {}]
  %s6 = inlined_call_operand.vmem [shape: f32[2,32,64], index: 6, kind: input, shape index: {}]
  %s7 = inlined_call_operand.vmem [shape: f32[2,1,64], index: 7, kind: input, shape index: {}]
  %s8 = inlined_call_operand.vmem [shape: f32[2,64,32], index: 8, kind: input, shape index: {}]
  %s9 = inlined_call_operand.hbm [shape: f32[2,16,32], index: 9, kind: output, shape index: {}]
  %s10 = sld [smem:[#allocation0]]
  $region46: #{vit_forward.1} parent=0
    _
  %s12 = ssub.s32 1, %s10
  %s13 = scalar_select 0, %s12, %s10
  $region1: #{vit_forward.1} parent=0
    #allocation2 [shape = 'u8[16384]{0}', space=vmem, size = 0x4000, scoped, tag = 'output window, operand 0, single buffered']
    #allocation3 [shape = 's32[1]{0}', space=sflag, size = 0x4, scoped, tag = 'scoped memory for vit_forward.1']
    %14 = vsyncpa [#allocation3], 0
    // Predicated region
    $region2: #{vit_forward.1} parent=1 // pred_check
      _
    $region3: #{vit_forward.1} parent=1 // pred_check_branch
      %16 = sbr.rel (0) target = $region5
    $region4: #{vit_forward.1} parent=1 // pred_region
      _
    $region5: #{vit_forward.1} parent=1 // pred_fallthru
      _
    // Predicated region
    $region6: #{vit_forward.1} parent=1 // pred_check
      _
    $region7: #{vit_forward.1} parent=1 // pred_check_branch
      %18 = sbr.rel (0) target = $region9
    $region8: #{vit_forward.1} parent=1 // pred_region
      _
    $region9: #{vit_forward.1} parent=1 // pred_fallthru
      _
    // Predicated region
    $region10: #{vit_forward.1} parent=1 // pred_check
      _
    $region11: #{vit_forward.1} parent=1 // pred_check_branch
      %20 = sbr.rel (0) target = $region13
    $region12: #{vit_forward.1} parent=1 // pred_region
      _
    $region13: #{vit_forward.1} parent=1 // pred_fallthru
      _
    // Predicated region
    $region14: #{vit_forward.1} parent=1 // pred_check
      _
    $region15: #{vit_forward.1} parent=1 // pred_check_branch
      %22 = sbr.rel (0) target = $region17
    $region16: #{vit_forward.1} parent=1 // pred_region
      _
    $region17: #{vit_forward.1} parent=1 // pred_fallthru
      _
    // Predicated region
    $region18: #{vit_forward.1} parent=1 // pred_check
      _
    $region19: #{vit_forward.1} parent=1 // pred_check_branch
      %24 = sbr.rel (0) target = $region21
    $region20: #{vit_forward.1} parent=1 // pred_region
      _
    $region21: #{vit_forward.1} parent=1 // pred_fallthru
      _
    // Predicated region
    $region22: #{vit_forward.1} parent=1 // pred_check
      _
    $region23: #{vit_forward.1} parent=1 // pred_check_branch
      %26 = sbr.rel (0) target = $region25
    $region24: #{vit_forward.1} parent=1 // pred_region
      _
    $region25: #{vit_forward.1} parent=1 // pred_fallthru
      _
    // Predicated region
    $region26: #{vit_forward.1} parent=1 // pred_check
      _
    $region27: #{vit_forward.1} parent=1 // pred_check_branch
      %28 = sbr.rel (0) target = $region29
    $region28: #{vit_forward.1} parent=1 // pred_region
      _
    $region29: #{vit_forward.1} parent=1 // pred_fallthru
      _
    // Predicated region
    $region30: #{vit_forward.1} parent=1 // pred_check
      _
    $region31: #{vit_forward.1} parent=1 // pred_check_branch
      %30 = sbr.rel (0) target = $region33
    $region32: #{vit_forward.1} parent=1 // pred_region
      _
    $region33: #{vit_forward.1} parent=1 // pred_fallthru
      _
    // Predicated region
    $region34: #{vit_forward.1} parent=1 // pred_check
      _
    $region35: #{vit_forward.1} parent=1 // pred_check_branch
      %32 = sbr.rel (0) target = $region37
    $region36: #{vit_forward.1} parent=1 // pred_region
      _
    $region37: #{vit_forward.1} parent=1 // pred_fallthru
      _
    %v33 = vld [vmem:[%s0] sm:$0xff]
    %v34 = vld [vmem:[%s0 + $0x8] sm:$0xff]
    %v35 = vld [vmem:[%s0 + $0x10] sm:$0xff]
    %v36 = vld [vmem:[%s0 + $0x18] sm:$0xff]
    %v37 = vld [vmem:[%s1] sm:$0xff]
    %v38 = vld [vmem:[%s1 + $0x8] sm:$0xff]
    %v39 = vld [vmem:[%s1 + $0x10] sm:$0xff]
    %v40 = vld [vmem:[%s1 + $0x18] sm:$0xff]
    %v41 = vld [vmem:[%s1 + $0x20] sm:$0xff]
    %v42 = vld [vmem:[%s1 + $0x28] sm:$0xff]
    %v43 = vld [vmem:[%s2] sm:$0xff]
    %v44 = vld [vmem:[%s2 + $0x8] sm:$0xff]
    %v45 = vld [vmem:[%s2 + $0x10] sm:$0xff]
    %v46 = vld [vmem:[%s2 + $0x18] sm:$0xff]
    %vm47 = vcmask 392192
    %v49 = vsel %vm47, %v33, 0
    %v52 = vsel %vm47, %v34, 0
    %v55 = vsel %vm47, %v35, 0
    %v58 = vsel %vm47, %v36, 0
    %60 = vmatprep.subr.mxu0 0.0
    %61 = vmatpush1.msra.mxu0 %v37
    %62 = vmatprep.subr.mxu0 0.0
    %63 = vmatpush1.msra.mxu0 %v38
    %64 = vmatprep.subr.mxu0 0.0
    %65 = vmatpush1.msra.mxu0 %v39
    %66 = vmatprep.subr.mxu0 0.0
    %67 = vmatpush1.msra.mxu0 %v40
    %68 = vmatprep.subr.mxu0 0.0
    %69 = vmatpush1.msra.mxu0 %v41
    %70 = vmatprep.subr.mxu0 0.0
    %71 = vmatpush1.msra.mxu0 %v42
    %72 = vmatprep.subr.mxu0 0.0
    %73 = vmatpush1.msra.mxu0 0.0
    %74 = vmatprep.subr.mxu0 0.0
    %75 = vmatpush1.msra.mxu0 0.0
    %76 = vmatprep.subr.mxu0 0.0
    %77 = vmatpush1.msra.mxu0 0.0
    %78 = vmatprep.subr.mxu0 0.0
    %79 = vmatpush1.msra.mxu0 0.0
    %80 = vmatprep.subr.mxu0 0.0
    %81 = vmatpush1.msra.mxu0 0.0
    %82 = vmatprep.subr.mxu0 0.0
    %83 = vmatpush1.msra.mxu0 0.0
    %84 = vmatprep.subr.mxu0 0.0
    %85 = vmatpush1.msra.mxu0 0.0
    %86 = vmatprep.subr.mxu0 0.0
    %87 = vmatpush1.msra.mxu0 0.0
    %88 = vmatprep.subr.mxu0 0.0
    %89 = vmatpush1.msra.mxu0 0.0
    %90 = vmatprep.subr.mxu0 0.0
    %91 = vmatpush1.msra.mxu0 0.0
    %92 = vmatprep.subr.mxu0 0.0
    %93 = vmatpush1.msra.mxu0 0.0
    %94 = vmatprep.subr.mxu0 0.0
    %95 = vmatpush1.msra.mxu0 0.0
    %96 = vmatprep.subr.mxu0 0.0
    %97 = vmatpush1.msra.mxu0 0.0
    %98 = vmatprep.subr.mxu0 0.0
    %99 = vmatpush1.msra.mxu0 0.0
    %100 = vmatprep.subr.mxu0 0.0
    %101 = vmatpush1.msra.mxu0 0.0
    %102 = vmatprep.subr.mxu0 0.0
    %103 = vmatpush1.msra.mxu0 0.0
    %104 = vmatprep.subr.mxu0 0.0
    %105 = vmatpush1.msra.mxu0 0.0
    %106 = vmatprep.subr.mxu0 0.0
    %107 = vmatpush1.msra.mxu0 0.0
    %108 = vmatprep.subr.mxu0 0.0
    %109 = vmatpush1.msra.mxu0 0.0
    %110 = vmatprep.subr.mxu0 0.0
    %111 = vmatpush1.msra.mxu0 0.0
    %112 = vmatprep.subr.mxu0 0.0
    %113 = vmatpush1.msra.mxu0 0.0
    %114 = vmatprep.subr.mxu0 0.0
    %115 = vmatpush1.msra.mxu0 0.0
    %116 = vmatprep.subr.mxu0 0.0
    %117 = vmatpush1.msra.mxu0 0.0
    %118 = vmatprep.subr.mxu0 0.0
    %119 = vmatpush1.msra.mxu0 0.0
    %120 = vmatprep.subr.mxu0 0.0
    %121 = vmatpush1.msra.mxu0 0.0
    %122 = vmatprep.subr.mxu0 0.0
    %123 = vmatpush1.msra.mxu0 0.0
    %124 = vmatprep.mubr.f32.mxu0 0.0
    %125 = vmatmul.mubr.f32.gmra.mrb[0].mxu0 %v49
    %v126 = vpop.f32.mrb[0].mxu0
    %v127 = vadd.f32 %v43, %v126
    %v128 = vpop.f32.mrb[0].mxu0
    %129 = vmatprep.mubr.f32.mxu0 0.0
    %130 = vmatmul.mubr.f32.gmra.mrb[0].mxu0 %v52
    %v131 = vpop.f32.mrb[0].mxu0
    %v132 = vadd.f32 %v44, %v131
    %v133 = vpop.f32.mrb[0].mxu0
    %134 = vmatprep.mubr.f32.mxu0 0.0
    %135 = vmatmul.mubr.f32.gmra.mrb[0].mxu0 %v55
    %v136 = vpop.f32.mrb[0].mxu0
    %v137 = vadd.f32 %v45, %v136
    %v138 = vpop.f32.mrb[0].mxu0
    %139 = vmatprep.mubr.f32.mxu0 0.0
    %140 = vmatmul.mubr.f32.gmra.mrb[0].mxu0 %v58
    %v141 = vpop.f32.mrb[0].mxu0
    %v142 = vadd.f32 %v46, %v141
    %v143 = vpop.f32.mrb[0].mxu0
    %144 = vdwg.mxu0
    %v145 = vld [vmem:[%s5] sm:$0x3f]
    %vm146 = vcmask 261120
    %v147 = vsel %vm146, %v127, 0.0
    %148 = vadd.xlane.f32.xlu0 %v147
    %v149 = vpop.xlane.xlu0 %148
    %v150 = vsel %vm146, %v132, 0.0
    %151 = vadd.xlane.f32.xlu0 %v150
    %v152 = vpop.xlane.xlu0 %151
    %v153 = vsel %vm146, %v137, 0.0
    %154 = vadd.xlane.f32.xlu0 %v153
    %v155 = vpop.xlane.xlu0 %154
    %v156 = vsel %vm146, %v142, 0.0
    %157 = vadd.xlane.f32.xlu0 %v156
    %v158 = vpop.xlane.xlu0 %157
    %v159 = vrcp.pop 32.0
    %v160 = vmul.f32 %v149, %v159
    %v161 = vmul.f32 %v152, %v159
    %v162 = vmul.f32 %v155, %v159
    %v163 = vmul.f32 %v158, %v159
    %v164 = vsub.f32 %v127, %v160
    %v165 = vsub.f32 %v132, %v161
    %v166 = vsub.f32 %v137, %v162
    %v167 = vsub.f32 %v142, %v163
    %v168 = vmul.f32 %v164, %v164
    %v169 = vmul.f32 %v165, %v165
    %v170 = vmul.f32 %v166, %v166
    %v171 = vmul.f32 %v167, %v167
    %v172 = vsel %vm146, %v168, 0.0
    %173 = vadd.xlane.f32.xlu0 %v172
    %v174 = vpop.xlane.xlu0 %173
    %v175 = vsel %vm146, %v169, 0.0
    %176 = vadd.xlane.f32.xlu0 %v175
    %v177 = vpop.xlane.xlu0 %176
    %v178 = vsel %vm146, %v170, 0.0
    %179 = vadd.xlane.f32.xlu0 %v178
    %v180 = vpop.xlane.xlu0 %179
    %v181 = vsel %vm146, %v171, 0.0
    %182 = vadd.xlane.f32.xlu0 %v181
    %v183 = vpop.xlane.xlu0 %182
    %v184 = vmul.f32 %v174, %v159
    %v185 = vmul.f32 %v177, %v159
    %v186 = vmul.f32 %v180, %v159
    %v187 = vmul.f32 %v183, %v159
    %v188 = vadd.f32 %v184, 1e-05
    %v189 = vadd.f32 %v185, 1e-05
    %v190 = vadd.f32 %v186, 1e-05
    %v191 = vadd.f32 %v187, 1e-05
    %v192 = vrsqrt.pop %v188
    %v193 = vrsqrt.pop %v189
    %v194 = vrsqrt.pop %v190
    %v195 = vrsqrt.pop %v191
    %v196 = vmul.f32 %v164, %v192
    %v197 = vmul.f32 %v165, %v193
    %v198 = vmul.f32 %v166, %v194
    %v199 = vmul.f32 %v167, %v195
    %v200 = vlaneseq
    %v201 = vshrl.u32 %v200, 7
    %v202 = vsub.s32 0, %v201
    %v203 = vrot.slane %v145, %v202
    %v204 = vmul.f32 %v196, %v203
    %v205 = vmul.f32 %v197, %v203
    %v206 = vmul.f32 %v198, %v203
    %v207 = vmul.f32 %v199, %v203
    %v208 = vlaneseq
    %v209 = vshrl.u32 %v208, 7
    %v210 = vsub.s32 1, %v209
    %v211 = vrot.slane %v145, %v210
    %v212 = vadd.f32 %v204, %v211
    %v213 = vadd.f32 %v205, %v211
    %v214 = vadd.f32 %v206, %v211
    %v215 = vadd.f32 %v207, %v211
    %v216 = vld [vmem:[%s3] sm:$0xff]
    %v217 = vld [vmem:[%s3 + $0x8] sm:$0xff]
    %v218 = vld [vmem:[%s3 + $0x10] sm:$0xff]
    %v219 = vld [vmem:[%s3 + $0x18] sm:$0xff]
    %v221 = vsel %vm146, %v212, 0
    %v224 = vsel %vm146, %v213, 0
    %v227 = vsel %vm146, %v214, 0
    %v230 = vsel %vm146, %v215, 0
    %232 = vmatprep.subr.mxu0 0.0
    %233 = vmatpush1.msra.mxu0 %v216
    %234 = vmatprep.subr.mxu0 0.0
    %235 = vmatpush1.msra.mxu0 %v217
    %236 = vmatprep.subr.mxu0 0.0
    %237 = vmatpush1.msra.mxu0 %v218
    %238 = vmatprep.subr.mxu0 0.0
    %239 = vmatpush1.msra.mxu0 %v219
    %240 = vmatprep.subr.mxu0 0.0
    %241 = vmatpush1.msra.mxu0 0.0
    %242 = vmatprep.subr.mxu0 0.0
    %243 = vmatpush1.msra.mxu0 0.0
    %244 = vmatprep.subr.mxu0 0.0
    %245 = vmatpush1.msra.mxu0 0.0
    %246 = vmatprep.subr.mxu0 0.0
    %247 = vmatpush1.msra.mxu0 0.0
    %248 = vmatprep.subr.mxu0 0.0
    %249 = vmatpush1.msra.mxu0 0.0
    %250 = vmatprep.subr.mxu0 0.0
    %251 = vmatpush1.msra.mxu0 0.0
    %252 = vmatprep.subr.mxu0 0.0
    %253 = vmatpush1.msra.mxu0 0.0
    %254 = vmatprep.subr.mxu0 0.0
    %255 = vmatpush1.msra.mxu0 0.0
    %256 = vmatprep.subr.mxu0 0.0
    %257 = vmatpush1.msra.mxu0 0.0
    %258 = vmatprep.subr.mxu0 0.0
    %259 = vmatpush1.msra.mxu0 0.0
    %260 = vmatprep.subr.mxu0 0.0
    %261 = vmatpush1.msra.mxu0 0.0
    %262 = vmatprep.subr.mxu0 0.0
    %263 = vmatpush1.msra.mxu0 0.0
    %264 = vmatprep.subr.mxu0 0.0
    %265 = vmatpush1.msra.mxu0 0.0
    %266 = vmatprep.subr.mxu0 0.0
    %267 = vmatpush1.msra.mxu0 0.0
    %268 = vmatprep.subr.mxu0 0.0
    %269 = vmatpush1.msra.mxu0 0.0
    %270 = vmatprep.subr.mxu0 0.0
    %271 = vmatpush1.msra.mxu0 0.0
    %272 = vmatprep.subr.mxu0 0.0
    %273 = vmatpush1.msra.mxu0 0.0
    %274 = vmatprep.subr.mxu0 0.0
    %275 = vmatpush1.msra.mxu0 0.0
    %276 = vmatprep.subr.mxu0 0.0
    %277 = vmatpush1.msra.mxu0 0.0
    %278 = vmatprep.subr.mxu0 0.0
    %279 = vmatpush1.msra.mxu0 0.0
    %280 = vmatprep.subr.mxu0 0.0
    %281 = vmatpush1.msra.mxu0 0.0
    %282 = vmatprep.subr.mxu0 0.0
    %283 = vmatpush1.msra.mxu0 0.0
    %284 = vmatprep.subr.mxu0 0.0
    %285 = vmatpush1.msra.mxu0 0.0
    %286 = vmatprep.subr.mxu0 0.0
    %287 = vmatpush1.msra.mxu0 0.0
    %288 = vmatprep.subr.mxu0 0.0
    %289 = vmatpush1.msra.mxu0 0.0
    %290 = vmatprep.subr.mxu0 0.0
    %291 = vmatpush1.msra.mxu0 0.0
    %292 = vmatprep.subr.mxu0 0.0
    %293 = vmatpush1.msra.mxu0 0.0
    %294 = vmatprep.subr.mxu0 0.0
    %295 = vmatpush1.msra.mxu0 0.0
    %296 = vmatprep.mubr.f32.mxu0 0.0
    %297 = vmatmul.mubr.f32.gmra.mrb[0].mxu0 %v221
    %v298 = vpop.f32.mrb[0].mxu0
    %v299 = vadd.f32 0.0, %v298
    %v300 = vpop.f32.mrb[0].mxu0
    %301 = vmatprep.mubr.f32.mxu0 0.0
    %302 = vmatmul.mubr.f32.gmra.mrb[0].mxu0 %v224
    %v303 = vpop.f32.mrb[0].mxu0
    %v304 = vadd.f32 0.0, %v303
    %v305 = vpop.f32.mrb[0].mxu0
    %306 = vmatprep.mubr.f32.mxu0 0.0
    %307 = vmatmul.mubr.f32.gmra.mrb[0].mxu0 %v227
    %v308 = vpop.f32.mrb[0].mxu0
    %v309 = vadd.f32 0.0, %v308
    %v310 = vpop.f32.mrb[0].mxu0
    %311 = vmatprep.mubr.f32.mxu0 0.0
    %312 = vmatmul.mubr.f32.gmra.mrb[0].mxu0 %v230
    %v313 = vpop.f32.mrb[0].mxu0
    %v314 = vadd.f32 0.0, %v313
    %v315 = vpop.f32.mrb[0].mxu0
    %316 = vdwg.mxu0
    %319 = vrot.lane.b32.xlu0 %v299, 96
    %v320 = vpop.permute.xlu0 %319
    %321 = vrot.lane.b32.xlu0 %v304, 96
    %v322 = vpop.permute.xlu0 %321
    %vm323 = vcmask 64512
    %v324 = vsel %vm323, %v299, 0
    %v326 = vsel %vm323, %v304, 0
    %v328 = vsel %vm323, %v320, 0
    %v330 = vsel %vm323, %v322, 0
    %332 = vmatprep.subr.mxu0 0.0
    %333 = vmatpush1.xpose.msra.mxu0 %v328
    %334 = vmatprep.subr.mxu0 0.0
    %335 = vmatpush1.xpose.msra.mxu0 %v330
    %336 = vmatprep.subr.mxu0 0.0
    %337 = vmatpush1.xpose.msra.mxu0 0.0
    %338 = vmatprep.subr.mxu0 0.0
    %339 = vmatpush1.xpose.msra.mxu0 0.0
    %340 = vmatprep.subr.mxu0 0.0
    %341 = vmatpush1.xpose.msra.mxu0 0.0
    %342 = vmatprep.subr.mxu0 0.0
    %343 = vmatpush1.xpose.msra.mxu0 0.0
    %344 = vmatprep.subr.mxu0 0.0
    %345 = vmatpush1.xpose.msra.mxu0 0.0
    %346 = vmatprep.subr.mxu0 0.0
    %347 = vmatpush1.xpose.msra.mxu0 0.0
    %348 = vmatprep.subr.mxu0 0.0
    %349 = vmatpush1.xpose.msra.mxu0 0.0
    %350 = vmatprep.subr.mxu0 0.0
    %351 = vmatpush1.xpose.msra.mxu0 0.0
    %352 = vmatprep.subr.mxu0 0.0
    %353 = vmatpush1.xpose.msra.mxu0 0.0
    %354 = vmatprep.subr.mxu0 0.0
    %355 = vmatpush1.xpose.msra.mxu0 0.0
    %356 = vmatprep.subr.mxu0 0.0
    %357 = vmatpush1.xpose.msra.mxu0 0.0
    %358 = vmatprep.subr.mxu0 0.0
    %359 = vmatpush1.xpose.msra.mxu0 0.0
    %360 = vmatprep.subr.mxu0 0.0
    %361 = vmatpush1.xpose.msra.mxu0 0.0
    %362 = vmatprep.subr.mxu0 0.0
    %363 = vmatpush1.xpose.msra.mxu0 0.0
    %364 = vmatprep.subr.mxu0 0.0
    %365 = vmatpush1.xpose.msra.mxu0 0.0
    %366 = vmatprep.subr.mxu0 0.0
    %367 = vmatpush1.xpose.msra.mxu0 0.0
    %368 = vmatprep.subr.mxu0 0.0
    %369 = vmatpush1.xpose.msra.mxu0 0.0
    %370 = vmatprep.subr.mxu0 0.0
    %371 = vmatpush1.xpose.msra.mxu0 0.0
    %372 = vmatprep.subr.mxu0 0.0
    %373 = vmatpush1.xpose.msra.mxu0 0.0
    %374 = vmatprep.subr.mxu0 0.0
    %375 = vmatpush1.xpose.msra.mxu0 0.0
    %376 = vmatprep.subr.mxu0 0.0
    %377 = vmatpush1.xpose.msra.mxu0 0.0
    %378 = vmatprep.subr.mxu0 0.0
    %379 = vmatpush1.xpose.msra.mxu0 0.0
    %380 = vmatprep.subr.mxu0 0.0
    %381 = vmatpush1.xpose.msra.mxu0 0.0
    %382 = vmatprep.subr.mxu0 0.0
    %383 = vmatpush1.xpose.msra.mxu0 0.0
    %384 = vmatprep.subr.mxu0 0.0
    %385 = vmatpush1.xpose.msra.mxu0 0.0
    %386 = vmatprep.subr.mxu0 0.0
    %387 = vmatpush1.xpose.msra.mxu0 0.0
    %388 = vmatprep.subr.mxu0 0.0
    %389 = vmatpush1.xpose.msra.mxu0 0.0
    %390 = vmatprep.subr.mxu0 0.0
    %391 = vmatpush1.xpose.msra.mxu0 0.0
    %392 = vmatprep.subr.mxu0 0.0
    %393 = vmatpush1.xpose.msra.mxu0 0.0
    %394 = vmatprep.subr.mxu0 0.0
    %395 = vmatpush1.xpose.msra.mxu0 0.0
    %396 = vmatprep.mubr.f32.mxu0 0.0
    %397 = vmatmul.mubr.f32.gmra.mrb[0].mxu0 %v324
    %v398 = vpop.f32.mrb[0].mxu0
    %v399 = vadd.f32 0.0, %v398
    %v400 = vpop.f32.mrb[0].mxu0
    %401 = vmatprep.mubr.f32.mxu0 0.0
    %402 = vmatmul.mubr.f32.gmra.mrb[0].mxu0 %v326
    %v403 = vpop.f32.mrb[0].mxu0
    %v404 = vadd.f32 0.0, %v403
    %v405 = vpop.f32.mrb[0].mxu0
    %406 = vdwg.mxu0
    %409 = vrot.lane.b32.xlu0 %v309, 96
    %v410 = vpop.permute.xlu0 %409
    %411 = vrot.lane.b32.xlu0 %v314, 96
    %v412 = vpop.permute.xlu0 %411
    %v413 = vsel %vm323, %v309, 0
    %v415 = vsel %vm323, %v314, 0
    %v417 = vsel %vm323, %v410, 0
    %v419 = vsel %vm323, %v412, 0
    %421 = vmatprep.subr.mxu0 0.0
    %422 = vmatpush1.xpose.msra.mxu0 %v417
    %423 = vmatprep.subr.mxu0 0.0
    %424 = vmatpush1.xpose.msra.mxu0 %v419
    %425 = vmatprep.subr.mxu0 0.0
    %426 = vmatpush1.xpose.msra.mxu0 0.0
    %427 = vmatprep.subr.mxu0 0.0
    %428 = vmatpush1.xpose.msra.mxu0 0.0
    %429 = vmatprep.subr.mxu0 0.0
    %430 = vmatpush1.xpose.msra.mxu0 0.0
    %431 = vmatprep.subr.mxu0 0.0
    %432 = vmatpush1.xpose.msra.mxu0 0.0
    %433 = vmatprep.subr.mxu0 0.0
    %434 = vmatpush1.xpose.msra.mxu0 0.0
    %435 = vmatprep.subr.mxu0 0.0
    %436 = vmatpush1.xpose.msra.mxu0 0.0
    %437 = vmatprep.subr.mxu0 0.0
    %438 = vmatpush1.xpose.msra.mxu0 0.0
    %439 = vmatprep.subr.mxu0 0.0
    %440 = vmatpush1.xpose.msra.mxu0 0.0
    %441 = vmatprep.subr.mxu0 0.0
    %442 = vmatpush1.xpose.msra.mxu0 0.0
    %443 = vmatprep.subr.mxu0 0.0
    %444 = vmatpush1.xpose.msra.mxu0 0.0
    %445 = vmatprep.subr.mxu0 0.0
    %446 = vmatpush1.xpose.msra.mxu0 0.0
    %447 = vmatprep.subr.mxu0 0.0
    %448 = vmatpush1.xpose.msra.mxu0 0.0
    %449 = vmatprep.subr.mxu0 0.0
    %450 = vmatpush1.xpose.msra.mxu0 0.0
    %451 = vmatprep.subr.mxu0 0.0
    %452 = vmatpush1.xpose.msra.mxu0 0.0
    %453 = vmatprep.subr.mxu0 0.0
    %454 = vmatpush1.xpose.msra.mxu0 0.0
    %455 = vmatprep.subr.mxu0 0.0
    %456 = vmatpush1.xpose.msra.mxu0 0.0
    %457 = vmatprep.subr.mxu0 0.0
    %458 = vmatpush1.xpose.msra.mxu0 0.0
    %459 = vmatprep.subr.mxu0 0.0
    %460 = vmatpush1.xpose.msra.mxu0 0.0
    %461 = vmatprep.subr.mxu0 0.0
    %462 = vmatpush1.xpose.msra.mxu0 0.0
    %463 = vmatprep.subr.mxu0 0.0
    %464 = vmatpush1.xpose.msra.mxu0 0.0
    %465 = vmatprep.subr.mxu0 0.0
    %466 = vmatpush1.xpose.msra.mxu0 0.0
    %467 = vmatprep.subr.mxu0 0.0
    %468 = vmatpush1.xpose.msra.mxu0 0.0
    %469 = vmatprep.subr.mxu0 0.0
    %470 = vmatpush1.xpose.msra.mxu0 0.0
    %471 = vmatprep.subr.mxu0 0.0
    %472 = vmatpush1.xpose.msra.mxu0 0.0
    %473 = vmatprep.subr.mxu0 0.0
    %474 = vmatpush1.xpose.msra.mxu0 0.0
    %475 = vmatprep.subr.mxu0 0.0
    %476 = vmatpush1.xpose.msra.mxu0 0.0
    %477 = vmatprep.subr.mxu0 0.0
    %478 = vmatpush1.xpose.msra.mxu0 0.0
    %479 = vmatprep.subr.mxu0 0.0
    %480 = vmatpush1.xpose.msra.mxu0 0.0
    %481 = vmatprep.subr.mxu0 0.0
    %482 = vmatpush1.xpose.msra.mxu0 0.0
    %483 = vmatprep.subr.mxu0 0.0
    %484 = vmatpush1.xpose.msra.mxu0 0.0
    %485 = vmatprep.mubr.f32.mxu0 0.0
    %486 = vmatmul.mubr.f32.gmra.mrb[0].mxu0 %v413
    %v487 = vpop.f32.mrb[0].mxu0
    %v488 = vadd.f32 0.0, %v487
    %v489 = vpop.f32.mrb[0].mxu0
    %490 = vmatprep.mubr.f32.mxu0 0.0
    %491 = vmatmul.mubr.f32.gmra.mrb[0].mxu0 %v415
    %v492 = vpop.f32.mrb[0].mxu0
    %v493 = vadd.f32 0.0, %v492
    %v494 = vpop.f32.mrb[0].mxu0
    %495 = vdwg.mxu0
    %vm496 = vcmask 130048
    %v497 = vsel %vm496, %v399, -inf
    %498 = vmax.xlane.f32.xlu0 %v497
    %v499 = vpop.xlane.xlu0 %498
    %v500 = vsel %vm496, %v404, -inf
    %501 = vmax.xlane.f32.xlu0 %v500
    %v502 = vpop.xlane.xlu0 %501
    %v503 = vsel %vm496, %v488, -inf
    %504 = vmax.xlane.f32.xlu0 %v503
    %v505 = vpop.xlane.xlu0 %504
    %v506 = vsel %vm496, %v493, -inf
    %507 = vmax.xlane.f32.xlu0 %v506
    %v508 = vpop.xlane.xlu0 %507
    %v509 = vsub.f32 %v399, %v499
    %v510 = vsub.f32 %v404, %v502
    %v511 = vsub.f32 %v488, %v505
    %v512 = vsub.f32 %v493, %v508
    %v513 = vmul.f32 %v509, 1.442695
    %v514 = vpow.pop %v513
    %v515 = vmul.f32 %v510, 1.442695
    %v516 = vpow.pop %v515
    %v517 = vmul.f32 %v511, 1.442695
    %v518 = vpow.pop %v517
    %v519 = vmul.f32 %v512, 1.442695
    %v520 = vpow.pop %v519
    %v521 = vsel %vm496, %v514, 0.0
    %522 = vadd.xlane.f32.xlu0 %v521
    %v523 = vpop.xlane.xlu0 %522
    %v524 = vsel %vm496, %v516, 0.0
    %525 = vadd.xlane.f32.xlu0 %v524
    %v526 = vpop.xlane.xlu0 %525
    %v527 = vsel %vm496, %v518, 0.0
    %528 = vadd.xlane.f32.xlu0 %v527
    %v529 = vpop.xlane.xlu0 %528
    %v530 = vsel %vm496, %v520, 0.0
    %531 = vadd.xlane.f32.xlu0 %v530
    %v532 = vpop.xlane.xlu0 %531
    %v533 = vrcp.pop %v523
    %v534 = vmul.f32 1.0, %v533
    %v535 = vrcp.pop %v526
    %v536 = vmul.f32 1.0, %v535
    %v537 = vrcp.pop %v529
    %v538 = vmul.f32 1.0, %v537
    %v539 = vrcp.pop %v532
    %v540 = vmul.f32 1.0, %v539
    %v541 = vmul.f32 %v514, %v534
    %v542 = vmul.f32 %v516, %v536
    %v543 = vmul.f32 %v518, %v538
    %v544 = vmul.f32 %v520, %v540
    %545 = vrot.lane.b32.xlu0 %v299, 64
    %v546 = vpop.permute.xlu0 %545
    %547 = vrot.lane.b32.xlu0 %v304, 64
    %v548 = vpop.permute.xlu0 %547
    %v552 = vsel %vm496, %v541, 0
    %v555 = vsel %vm496, %v542, 0
    %557 = vmatprep.subr.mxu0 0.0
    %558 = vmatpush1.msra.mxu0 %v546
    %559 = vmatprep.subr.mxu0 0.0
    %560 = vmatpush1.msra.mxu0 %v548
    %561 = vmatprep.subr.mxu0 0.0
    %562 = vmatpush1.msra.mxu0 0.0
    %563 = vmatprep.subr.mxu0 0.0
    %564 = vmatpush1.msra.mxu0 0.0
    %565 = vmatprep.subr.mxu0 0.0
    %566 = vmatpush1.msra.mxu0 0.0
    %567 = vmatprep.subr.mxu0 0.0
    %568 = vmatpush1.msra.mxu0 0.0
    %569 = vmatprep.subr.mxu0 0.0
    %570 = vmatpush1.msra.mxu0 0.0
    %571 = vmatprep.subr.mxu0 0.0
    %572 = vmatpush1.msra.mxu0 0.0
    %573 = vmatprep.subr.mxu0 0.0
    %574 = vmatpush1.msra.mxu0 0.0
    %575 = vmatprep.subr.mxu0 0.0
    %576 = vmatpush1.msra.mxu0 0.0
    %577 = vmatprep.subr.mxu0 0.0
    %578 = vmatpush1.msra.mxu0 0.0
    %579 = vmatprep.subr.mxu0 0.0
    %580 = vmatpush1.msra.mxu0 0.0
    %581 = vmatprep.subr.mxu0 0.0
    %582 = vmatpush1.msra.mxu0 0.0
    %583 = vmatprep.subr.mxu0 0.0
    %584 = vmatpush1.msra.mxu0 0.0
    %585 = vmatprep.subr.mxu0 0.0
    %586 = vmatpush1.msra.mxu0 0.0
    %587 = vmatprep.subr.mxu0 0.0
    %588 = vmatpush1.msra.mxu0 0.0
    %589 = vmatprep.subr.mxu0 0.0
    %590 = vmatpush1.msra.mxu0 0.0
    %591 = vmatprep.subr.mxu0 0.0
    %592 = vmatpush1.msra.mxu0 0.0
    %593 = vmatprep.subr.mxu0 0.0
    %594 = vmatpush1.msra.mxu0 0.0
    %595 = vmatprep.subr.mxu0 0.0
    %596 = vmatpush1.msra.mxu0 0.0
    %597 = vmatprep.subr.mxu0 0.0
    %598 = vmatpush1.msra.mxu0 0.0
    %599 = vmatprep.subr.mxu0 0.0
    %600 = vmatpush1.msra.mxu0 0.0
    %601 = vmatprep.subr.mxu0 0.0
    %602 = vmatpush1.msra.mxu0 0.0
    %603 = vmatprep.subr.mxu0 0.0
    %604 = vmatpush1.msra.mxu0 0.0
    %605 = vmatprep.subr.mxu0 0.0
    %606 = vmatpush1.msra.mxu0 0.0
    %607 = vmatprep.subr.mxu0 0.0
    %608 = vmatpush1.msra.mxu0 0.0
    %609 = vmatprep.subr.mxu0 0.0
    %610 = vmatpush1.msra.mxu0 0.0
    %611 = vmatprep.subr.mxu0 0.0
    %612 = vmatpush1.msra.mxu0 0.0
    %613 = vmatprep.subr.mxu0 0.0
    %614 = vmatpush1.msra.mxu0 0.0
    %615 = vmatprep.subr.mxu0 0.0
    %616 = vmatpush1.msra.mxu0 0.0
    %617 = vmatprep.subr.mxu0 0.0
    %618 = vmatpush1.msra.mxu0 0.0
    %619 = vmatprep.subr.mxu0 0.0
    %620 = vmatpush1.msra.mxu0 0.0
    %621 = vmatprep.mubr.f32.mxu0 0.0
    %622 = vmatmul.mubr.f32.gmra.mrb[0].mxu0 %v552
    %v623 = vpop.f32.mrb[0].mxu0
    %v624 = vadd.f32 0.0, %v623
    %v625 = vpop.f32.mrb[0].mxu0
    %626 = vmatprep.mubr.f32.mxu0 0.0
    %627 = vmatmul.mubr.f32.gmra.mrb[0].mxu0 %v555
    %v628 = vpop.f32.mrb[0].mxu0
    %v629 = vadd.f32 0.0, %v628
    %v630 = vpop.f32.mrb[0].mxu0
    %631 = vdwg.mxu0
    %632 = vrot.lane.b32.xlu0 %v309, 64
    %v633 = vpop.permute.xlu0 %632
    %634 = vrot.lane.b32.xlu0 %v314, 64
    %v635 = vpop.permute.xlu0 %634
    %v639 = vsel %vm496, %v543, 0
    %v642 = vsel %vm496, %v544, 0
    %644 = vmatprep.subr.mxu0 0.0
    %645 = vmatpush1.msra.mxu0 %v633
    %646 = vmatprep.subr.mxu0 0.0
    %647 = vmatpush1.msra.mxu0 %v635
    %648 = vmatprep.subr.mxu0 0.0
    %649 = vmatpush1.msra.mxu0 0.0
    %650 = vmatprep.subr.mxu0 0.0
    %651 = vmatpush1.msra.mxu0 0.0
    %652 = vmatprep.subr.mxu0 0.0
    %653 = vmatpush1.msra.mxu0 0.0
    %654 = vmatprep.subr.mxu0 0.0
    %655 = vmatpush1.msra.mxu0 0.0
    %656 = vmatprep.subr.mxu0 0.0
    %657 = vmatpush1.msra.mxu0 0.0
    %658 = vmatprep.subr.mxu0 0.0
    %659 = vmatpush1.msra.mxu0 0.0
    %660 = vmatprep.subr.mxu0 0.0
    %661 = vmatpush1.msra.mxu0 0.0
    %662 = vmatprep.subr.mxu0 0.0
    %663 = vmatpush1.msra.mxu0 0.0
    %664 = vmatprep.subr.mxu0 0.0
    %665 = vmatpush1.msra.mxu0 0.0
    %666 = vmatprep.subr.mxu0 0.0
    %667 = vmatpush1.msra.mxu0 0.0
    %668 = vmatprep.subr.mxu0 0.0
    %669 = vmatpush1.msra.mxu0 0.0
    %670 = vmatprep.subr.mxu0 0.0
    %671 = vmatpush1.msra.mxu0 0.0
    %672 = vmatprep.subr.mxu0 0.0
    %673 = vmatpush1.msra.mxu0 0.0
    %674 = vmatprep.subr.mxu0 0.0
    %675 = vmatpush1.msra.mxu0 0.0
    %676 = vmatprep.subr.mxu0 0.0
    %677 = vmatpush1.msra.mxu0 0.0
    %678 = vmatprep.subr.mxu0 0.0
    %679 = vmatpush1.msra.mxu0 0.0
    %680 = vmatprep.subr.mxu0 0.0
    %681 = vmatpush1.msra.mxu0 0.0
    %682 = vmatprep.subr.mxu0 0.0
    %683 = vmatpush1.msra.mxu0 0.0
    %684 = vmatprep.subr.mxu0 0.0
    %685 = vmatpush1.msra.mxu0 0.0
    %686 = vmatprep.subr.mxu0 0.0
    %687 = vmatpush1.msra.mxu0 0.0
    %688 = vmatprep.subr.mxu0 0.0
    %689 = vmatpush1.msra.mxu0 0.0
    %690 = vmatprep.subr.mxu0 0.0
    %691 = vmatpush1.msra.mxu0 0.0
    %692 = vmatprep.subr.mxu0 0.0
    %693 = vmatpush1.msra.mxu0 0.0
    %694 = vmatprep.subr.mxu0 0.0
    %695 = vmatpush1.msra.mxu0 0.0
    %696 = vmatprep.subr.mxu0 0.0
    %697 = vmatpush1.msra.mxu0 0.0
    %698 = vmatprep.subr.mxu0 0.0
    %699 = vmatpush1.msra.mxu0 0.0
    %700 = vmatprep.subr.mxu0 0.0
    %701 = vmatpush1.msra.mxu0 0.0
    %702 = vmatprep.subr.mxu0 0.0
    %703 = vmatpush1.msra.mxu0 0.0
    %704 = vmatprep.subr.mxu0 0.0
    %705 = vmatpush1.msra.mxu0 0.0
    %706 = vmatprep.subr.mxu0 0.0
    %707 = vmatpush1.msra.mxu0 0.0
    %708 = vmatprep.mubr.f32.mxu0 0.0
    %709 = vmatmul.mubr.f32.gmra.mrb[0].mxu0 %v639
    %v710 = vpop.f32.mrb[0].mxu0
    %v711 = vadd.f32 0.0, %v710
    %v712 = vpop.f32.mrb[0].mxu0
    %713 = vmatprep.mubr.f32.mxu0 0.0
    %714 = vmatmul.mubr.f32.gmra.mrb[0].mxu0 %v642
    %v715 = vpop.f32.mrb[0].mxu0
    %v716 = vadd.f32 0.0, %v715
    %v717 = vpop.f32.mrb[0].mxu0
    %718 = vdwg.mxu0
    %719 = vrot.lane.b32.xlu0 %v299, 120
    %v720 = vpop.permute.xlu0 %719
    %721 = vrot.lane.b32.xlu0 %v304, 120
    %v722 = vpop.permute.xlu0 %721
    %723 = vrot.lane.b32.xlu0 %v299, 88
    %v724 = vpop.permute.xlu0 %723
    %725 = vrot.lane.b32.xlu0 %v304, 88
    %v726 = vpop.permute.xlu0 %725
    %v727 = vsel %vm323, %v720, 0
    %v729 = vsel %vm323, %v722, 0
    %v731 = vsel %vm323, %v724, 0
    %v733 = vsel %vm323, %v726, 0
    %735 = vmatprep.subr.mxu0 0.0
    %736 = vmatpush1.xpose.msra.mxu0 %v731
    %737 = vmatprep.subr.mxu0 0.0
    %738 = vmatpush1.xpose.msra.mxu0 %v733
    %739 = vmatprep.subr.mxu0 0.0
    %740 = vmatpush1.xpose.msra.mxu0 0.0
    %741 = vmatprep.subr.mxu0 0.0
    %742 = vmatpush1.xpose.msra.mxu0 0.0
    %743 = vmatprep.subr.mxu0 0.0
    %744 = vmatpush1.xpose.msra.mxu0 0.0
    %745 = vmatprep.subr.mxu0 0.0
    %746 = vmatpush1.xpose.msra.mxu0 0.0
    %747 = vmatprep.subr.mxu0 0.0
    %748 = vmatpush1.xpose.msra.mxu0 0.0
    %749 = vmatprep.subr.mxu0 0.0
    %750 = vmatpush1.xpose.msra.mxu0 0.0
    %751 = vmatprep.subr.mxu0 0.0
    %752 = vmatpush1.xpose.msra.mxu0 0.0
    %753 = vmatprep.subr.mxu0 0.0
    %754 = vmatpush1.xpose.msra.mxu0 0.0
    %755 = vmatprep.subr.mxu0 0.0
    %756 = vmatpush1.xpose.msra.mxu0 0.0
    %757 = vmatprep.subr.mxu0 0.0
    %758 = vmatpush1.xpose.msra.mxu0 0.0
    %759 = vmatprep.subr.mxu0 0.0
    %760 = vmatpush1.xpose.msra.mxu0 0.0
    %761 = vmatprep.subr.mxu0 0.0
    %762 = vmatpush1.xpose.msra.mxu0 0.0
    %763 = vmatprep.subr.mxu0 0.0
    %764 = vmatpush1.xpose.msra.mxu0 0.0
    %765 = vmatprep.subr.mxu0 0.0
    %766 = vmatpush1.xpose.msra.mxu0 0.0
    %767 = vmatprep.subr.mxu0 0.0
    %768 = vmatpush1.xpose.msra.mxu0 0.0
    %769 = vmatprep.subr.mxu0 0.0
    %770 = vmatpush1.xpose.msra.mxu0 0.0
    %771 = vmatprep.subr.mxu0 0.0
    %772 = vmatpush1.xpose.msra.mxu0 0.0
    %773 = vmatprep.subr.mxu0 0.0
    %774 = vmatpush1.xpose.msra.mxu0 0.0
    %775 = vmatprep.subr.mxu0 0.0
    %776 = vmatpush1.xpose.msra.mxu0 0.0
    %777 = vmatprep.subr.mxu0 0.0
    %778 = vmatpush1.xpose.msra.mxu0 0.0
    %779 = vmatprep.subr.mxu0 0.0
    %780 = vmatpush1.xpose.msra.mxu0 0.0
    %781 = vmatprep.subr.mxu0 0.0
    %782 = vmatpush1.xpose.msra.mxu0 0.0
    %783 = vmatprep.subr.mxu0 0.0
    %784 = vmatpush1.xpose.msra.mxu0 0.0
    %785 = vmatprep.subr.mxu0 0.0
    %786 = vmatpush1.xpose.msra.mxu0 0.0
    %787 = vmatprep.subr.mxu0 0.0
    %788 = vmatpush1.xpose.msra.mxu0 0.0
    %789 = vmatprep.subr.mxu0 0.0
    %790 = vmatpush1.xpose.msra.mxu0 0.0
    %791 = vmatprep.subr.mxu0 0.0
    %792 = vmatpush1.xpose.msra.mxu0 0.0
    %793 = vmatprep.subr.mxu0 0.0
    %794 = vmatpush1.xpose.msra.mxu0 0.0
    %795 = vmatprep.subr.mxu0 0.0
    %796 = vmatpush1.xpose.msra.mxu0 0.0
    %797 = vmatprep.subr.mxu0 0.0
    %798 = vmatpush1.xpose.msra.mxu0 0.0
    %799 = vmatprep.mubr.f32.mxu0 0.0
    %800 = vmatmul.mubr.f32.gmra.mrb[0].mxu0 %v727
    %v801 = vpop.f32.mrb[0].mxu0
    %v802 = vadd.f32 0.0, %v801
    %v803 = vpop.f32.mrb[0].mxu0
    %804 = vmatprep.mubr.f32.mxu0 0.0
    %805 = vmatmul.mubr.f32.gmra.mrb[0].mxu0 %v729
    %v806 = vpop.f32.mrb[0].mxu0
    %v807 = vadd.f32 0.0, %v806
    %v808 = vpop.f32.mrb[0].mxu0
    %809 = vdwg.mxu0
    %810 = vrot.lane.b32.xlu0 %v309, 120
    %v811 = vpop.permute.xlu0 %810
    %812 = vrot.lane.b32.xlu0 %v314, 120
    %v813 = vpop.permute.xlu0 %812
    %814 = vrot.lane.b32.xlu0 %v309, 88
    %v815 = vpop.permute.xlu0 %814
    %816 = vrot.lane.b32.xlu0 %v314, 88
    %v817 = vpop.permute.xlu0 %816
    %v818 = vsel %vm323, %v811, 0
    %v820 = vsel %vm323, %v813, 0
    %v822 = vsel %vm323, %v815, 0
    %v824 = vsel %vm323, %v817, 0
    %826 = vmatprep.subr.mxu0 0.0
    %827 = vmatpush1.xpose.msra.mxu0 %v822
    %828 = vmatprep.subr.mxu0 0.0
    %829 = vmatpush1.xpose.msra.mxu0 %v824
    %830 = vmatprep.subr.mxu0 0.0
    %831 = vmatpush1.xpose.msra.mxu0 0.0
    %832 = vmatprep.subr.mxu0 0.0
    %833 = vmatpush1.xpose.msra.mxu0 0.0
    %834 = vmatprep.subr.mxu0 0.0
    %835 = vmatpush1.xpose.msra.mxu0 0.0
    %836 = vmatprep.subr.mxu0 0.0
    %837 = vmatpush1.xpose.msra.mxu0 0.0
    %838 = vmatprep.subr.mxu0 0.0
    %839 = vmatpush1.xpose.msra.mxu0 0.0
    %840 = vmatprep.subr.mxu0 0.0
    %841 = vmatpush1.xpose.msra.mxu0 0.0
    %842 = vmatprep.subr.mxu0 0.0
    %843 = vmatpush1.xpose.msra.mxu0 0.0
    %844 = vmatprep.subr.mxu0 0.0
    %845 = vmatpush1.xpose.msra.mxu0 0.0
    %846 = vmatprep.subr.mxu0 0.0
    %847 = vmatpush1.xpose.msra.mxu0 0.0
    %848 = vmatprep.subr.mxu0 0.0
    %849 = vmatpush1.xpose.msra.mxu0 0.0
    %850 = vmatprep.subr.mxu0 0.0
    %851 = vmatpush1.xpose.msra.mxu0 0.0
    %852 = vmatprep.subr.mxu0 0.0
    %853 = vmatpush1.xpose.msra.mxu0 0.0
    %854 = vmatprep.subr.mxu0 0.0
    %855 = vmatpush1.xpose.msra.mxu0 0.0
    %856 = vmatprep.subr.mxu0 0.0
    %857 = vmatpush1.xpose.msra.mxu0 0.0
    %858 = vmatprep.subr.mxu0 0.0
    %859 = vmatpush1.xpose.msra.mxu0 0.0
    %860 = vmatprep.subr.mxu0 0.0
    %861 = vmatpush1.xpose.msra.mxu0 0.0
    %862 = vmatprep.subr.mxu0 0.0
    %863 = vmatpush1.xpose.msra.mxu0 0.0
    %864 = vmatprep.subr.mxu0 0.0
    %865 = vmatpush1.xpose.msra.mxu0 0.0
    %866 = vmatprep.subr.mxu0 0.0
    %867 = vmatpush1.xpose.msra.mxu0 0.0
    %868 = vmatprep.subr.mxu0 0.0
    %869 = vmatpush1.xpose.msra.mxu0 0.0
    %870 = vmatprep.subr.mxu0 0.0
    %871 = vmatpush1.xpose.msra.mxu0 0.0
    %872 = vmatprep.subr.mxu0 0.0
    %873 = vmatpush1.xpose.msra.mxu0 0.0
    %874 = vmatprep.subr.mxu0 0.0
    %875 = vmatpush1.xpose.msra.mxu0 0.0
    %876 = vmatprep.subr.mxu0 0.0
    %877 = vmatpush1.xpose.msra.mxu0 0.0
    %878 = vmatprep.subr.mxu0 0.0
    %879 = vmatpush1.xpose.msra.mxu0 0.0
    %880 = vmatprep.subr.mxu0 0.0
    %881 = vmatpush1.xpose.msra.mxu0 0.0
    %882 = vmatprep.subr.mxu0 0.0
    %883 = vmatpush1.xpose.msra.mxu0 0.0
    %884 = vmatprep.subr.mxu0 0.0
    %885 = vmatpush1.xpose.msra.mxu0 0.0
    %886 = vmatprep.subr.mxu0 0.0
    %887 = vmatpush1.xpose.msra.mxu0 0.0
    %888 = vmatprep.subr.mxu0 0.0
    %889 = vmatpush1.xpose.msra.mxu0 0.0
    %890 = vmatprep.mubr.f32.mxu0 0.0
    %891 = vmatmul.mubr.f32.gmra.mrb[0].mxu0 %v818
    %v892 = vpop.f32.mrb[0].mxu0
    %v893 = vadd.f32 0.0, %v892
    %v894 = vpop.f32.mrb[0].mxu0
    %895 = vmatprep.mubr.f32.mxu0 0.0
    %896 = vmatmul.mubr.f32.gmra.mrb[0].mxu0 %v820
    %v897 = vpop.f32.mrb[0].mxu0
    %v898 = vadd.f32 0.0, %v897
    %v899 = vpop.f32.mrb[0].mxu0
    %900 = vdwg.mxu0
    %v901 = vsel %vm496, %v802, -inf
    %902 = vmax.xlane.f32.xlu0 %v901
    %v903 = vpop.xlane.xlu0 %902
    %v904 = vsel %vm496, %v807, -inf
    %905 = vmax.xlane.f32.xlu0 %v904
    %v906 = vpop.xlane.xlu0 %905
    %v907 = vsel %vm496, %v893, -inf
    %908 = vmax.xlane.f32.xlu0 %v907
    %v909 = vpop.xlane.xlu0 %908
    %v910 = vsel %vm496, %v898, -inf
    %911 = vmax.xlane.f32.xlu0 %v910
    %v912 = vpop.xlane.xlu0 %911
    %v913 = vsub.f32 %v802, %v903
    %v914 = vsub.f32 %v807, %v906
    %v915 = vsub.f32 %v893, %v909
    %v916 = vsub.f32 %v898, %v912
    %v917 = vmul.f32 %v913, 1.442695
    %v918 = vpow.pop %v917
    %v919 = vmul.f32 %v914, 1.442695
    %v920 = vpow.pop %v919
    %v921 = vmul.f32 %v915, 1.442695
    %v922 = vpow.pop %v921
    %v923 = vmul.f32 %v916, 1.442695
    %v924 = vpow.pop %v923
    %v925 = vsel %vm496, %v918, 0.0
    %926 = vadd.xlane.f32.xlu0 %v925
    %v927 = vpop.xlane.xlu0 %926
    %v928 = vsel %vm496, %v920, 0.0
    %929 = vadd.xlane.f32.xlu0 %v928
    %v930 = vpop.xlane.xlu0 %929
    %v931 = vsel %vm496, %v922, 0.0
    %932 = vadd.xlane.f32.xlu0 %v931
    %v933 = vpop.xlane.xlu0 %932
    %v934 = vsel %vm496, %v924, 0.0
    %935 = vadd.xlane.f32.xlu0 %v934
    %v936 = vpop.xlane.xlu0 %935
    %v937 = vrcp.pop %v927
    %v938 = vmul.f32 1.0, %v937
    %v939 = vrcp.pop %v930
    %v940 = vmul.f32 1.0, %v939
    %v941 = vrcp.pop %v933
    %v942 = vmul.f32 1.0, %v941
    %v943 = vrcp.pop %v936
    %v944 = vmul.f32 1.0, %v943
    %v945 = vmul.f32 %v918, %v938
    %v946 = vmul.f32 %v920, %v940
    %v947 = vmul.f32 %v922, %v942
    %v948 = vmul.f32 %v924, %v944
    %949 = vrot.lane.b32.xlu0 %v299, 56
    %v950 = vpop.permute.xlu0 %949
    %951 = vrot.lane.b32.xlu0 %v304, 56
    %v952 = vpop.permute.xlu0 %951
    %v956 = vsel %vm496, %v945, 0
    %v959 = vsel %vm496, %v946, 0
    %961 = vmatprep.subr.mxu0 0.0
    %962 = vmatpush1.msra.mxu0 %v950
    %963 = vmatprep.subr.mxu0 0.0
    %964 = vmatpush1.msra.mxu0 %v952
    %965 = vmatprep.subr.mxu0 0.0
    %966 = vmatpush1.msra.mxu0 0.0
    %967 = vmatprep.subr.mxu0 0.0
    %968 = vmatpush1.msra.mxu0 0.0
    %969 = vmatprep.subr.mxu0 0.0
    %970 = vmatpush1.msra.mxu0 0.0
    %971 = vmatprep.subr.mxu0 0.0
    %972 = vmatpush1.msra.mxu0 0.0
    %973 = vmatprep.subr.mxu0 0.0
    %974 = vmatpush1.msra.mxu0 0.0
    %975 = vmatprep.subr.mxu0 0.0
    %976 = vmatpush1.msra.mxu0 0.0
    %977 = vmatprep.subr.mxu0 0.0
    %978 = vmatpush1.msra.mxu0 0.0
    %979 = vmatprep.subr.mxu0 0.0
    %980 = vmatpush1.msra.mxu0 0.0
    %981 = vmatprep.subr.mxu0 0.0
    %982 = vmatpush1.msra.mxu0 0.0
    %983 = vmatprep.subr.mxu0 0.0
    %984 = vmatpush1.msra.mxu0 0.0
    %985 = vmatprep.subr.mxu0 0.0
    %986 = vmatpush1.msra.mxu0 0.0
    %987 = vmatprep.subr.mxu0 0.0
    %988 = vmatpush1.msra.mxu0 0.0
    %989 = vmatprep.subr.mxu0 0.0
    %990 = vmatpush1.msra.mxu0 0.0
    %991 = vmatprep.subr.mxu0 0.0
    %992 = vmatpush1.msra.mxu0 0.0
    %993 = vmatprep.subr.mxu0 0.0
    %994 = vmatpush1.msra.mxu0 0.0
    %995 = vmatprep.subr.mxu0 0.0
    %996 = vmatpush1.msra.mxu0 0.0
    %997 = vmatprep.subr.mxu0 0.0
    %998 = vmatpush1.msra.mxu0 0.0
    %999 = vmatprep.subr.mxu0 0.0
    %1000 = vmatpush1.msra.mxu0 0.0
    %1001 = vmatprep.subr.mxu0 0.0
    %1002 = vmatpush1.msra.mxu0 0.0
    %1003 = vmatprep.subr.mxu0 0.0
    %1004 = vmatpush1.msra.mxu0 0.0
    %1005 = vmatprep.subr.mxu0 0.0
    %1006 = vmatpush1.msra.mxu0 0.0
    %1007 = vmatprep.subr.mxu0 0.0
    %1008 = vmatpush1.msra.mxu0 0.0
    %1009 = vmatprep.subr.mxu0 0.0
    %1010 = vmatpush1.msra.mxu0 0.0
    %1011 = vmatprep.subr.mxu0 0.0
    %1012 = vmatpush1.msra.mxu0 0.0
    %1013 = vmatprep.subr.mxu0 0.0
    %1014 = vmatpush1.msra.mxu0 0.0
    %1015 = vmatprep.subr.mxu0 0.0
    %1016 = vmatpush1.msra.mxu0 0.0
    %1017 = vmatprep.subr.mxu0 0.0
    %1018 = vmatpush1.msra.mxu0 0.0
    %1019 = vmatprep.subr.mxu0 0.0
    %1020 = vmatpush1.msra.mxu0 0.0
    %1021 = vmatprep.subr.mxu0 0.0
    %1022 = vmatpush1.msra.mxu0 0.0
    %1023 = vmatprep.subr.mxu0 0.0
    %1024 = vmatpush1.msra.mxu0 0.0
    %1025 = vmatprep.mubr.f32.mxu0 0.0
    %1026 = vmatmul.mubr.f32.gmra.mrb[0].mxu0 %v956
    %v1027 = vpop.f32.mrb[0].mxu0
    %v1028 = vadd.f32 0.0, %v1027
    %v1029 = vpop.f32.mrb[0].mxu0
    %1030 = vmatprep.mubr.f32.mxu0 0.0
    %1031 = vmatmul.mubr.f32.gmra.mrb[0].mxu0 %v959
    %v1032 = vpop.f32.mrb[0].mxu0
    %v1033 = vadd.f32 0.0, %v1032
    %v1034 = vpop.f32.mrb[0].mxu0
    %1035 = vdwg.mxu0
    %1036 = vrot.lane.b32.xlu0 %v309, 56
    %v1037 = vpop.permute.xlu0 %1036
    %1038 = vrot.lane.b32.xlu0 %v314, 56
    %v1039 = vpop.permute.xlu0 %1038
    %v1043 = vsel %vm496, %v947, 0
    %v1046 = vsel %vm496, %v948, 0
    %1048 = vmatprep.subr.mxu0 0.0
    %1049 = vmatpush1.msra.mxu0 %v1037
    %1050 = vmatprep.subr.mxu0 0.0
    %1051 = vmatpush1.msra.mxu0 %v1039
    %1052 = vmatprep.subr.mxu0 0.0
    %1053 = vmatpush1.msra.mxu0 0.0
    %1054 = vmatprep.subr.mxu0 0.0
    %1055 = vmatpush1.msra.mxu0 0.0
    %1056 = vmatprep.subr.mxu0 0.0
    %1057 = vmatpush1.msra.mxu0 0.0
    %1058 = vmatprep.subr.mxu0 0.0
    %1059 = vmatpush1.msra.mxu0 0.0
    %1060 = vmatprep.subr.mxu0 0.0
    %1061 = vmatpush1.msra.mxu0 0.0
    %1062 = vmatprep.subr.mxu0 0.0
    %1063 = vmatpush1.msra.mxu0 0.0
    %1064 = vmatprep.subr.mxu0 0.0
    %1065 = vmatpush1.msra.mxu0 0.0
    %1066 = vmatprep.subr.mxu0 0.0
    %1067 = vmatpush1.msra.mxu0 0.0
    %1068 = vmatprep.subr.mxu0 0.0
    %1069 = vmatpush1.msra.mxu0 0.0
    %1070 = vmatprep.subr.mxu0 0.0
    %1071 = vmatpush1.msra.mxu0 0.0
    %1072 = vmatprep.subr.mxu0 0.0
    %1073 = vmatpush1.msra.mxu0 0.0
    %1074 = vmatprep.subr.mxu0 0.0
    %1075 = vmatpush1.msra.mxu0 0.0
    %1076 = vmatprep.subr.mxu0 0.0
    %1077 = vmatpush1.msra.mxu0 0.0
    %1078 = vmatprep.subr.mxu0 0.0
    %1079 = vmatpush1.msra.mxu0 0.0
    %1080 = vmatprep.subr.mxu0 0.0
    %1081 = vmatpush1.msra.mxu0 0.0
    %1082 = vmatprep.subr.mxu0 0.0
    %1083 = vmatpush1.msra.mxu0 0.0
    %1084 = vmatprep.subr.mxu0 0.0
    %1085 = vmatpush1.msra.mxu0 0.0
    %1086 = vmatprep.subr.mxu0 0.0
    %1087 = vmatpush1.msra.mxu0 0.0
    %1088 = vmatprep.subr.mxu0 0.0
    %1089 = vmatpush1.msra.mxu0 0.0
    %1090 = vmatprep.subr.mxu0 0.0
    %1091 = vmatpush1.msra.mxu0 0.0
    %1092 = vmatprep.subr.mxu0 0.0
    %1093 = vmatpush1.msra.mxu0 0.0
    %1094 = vmatprep.subr.mxu0 0.0
    %1095 = vmatpush1.msra.mxu0 0.0
    %1096 = vmatprep.subr.mxu0 0.0
    %1097 = vmatpush1.msra.mxu0 0.0
    %1098 = vmatprep.subr.mxu0 0.0
    %1099 = vmatpush1.msra.mxu0 0.0
    %1100 = vmatprep.subr.mxu0 0.0
    %1101 = vmatpush1.msra.mxu0 0.0
    %1102 = vmatprep.subr.mxu0 0.0
    %1103 = vmatpush1.msra.mxu0 0.0
    %1104 = vmatprep.subr.mxu0 0.0
    %1105 = vmatpush1.msra.mxu0 0.0
    %1106 = vmatprep.subr.mxu0 0.0
    %1107 = vmatpush1.msra.mxu0 0.0
    %1108 = vmatprep.subr.mxu0 0.0
    %1109 = vmatpush1.msra.mxu0 0.0
    %1110 = vmatprep.subr.mxu0 0.0
    %1111 = vmatpush1.msra.mxu0 0.0
    %1112 = vmatprep.mubr.f32.mxu0 0.0
    %1113 = vmatmul.mubr.f32.gmra.mrb[0].mxu0 %v1043
    %v1114 = vpop.f32.mrb[0].mxu0
    %v1115 = vadd.f32 0.0, %v1114
    %v1116 = vpop.f32.mrb[0].mxu0
    %1117 = vmatprep.mubr.f32.mxu0 0.0
    %1118 = vmatmul.mubr.f32.gmra.mrb[0].mxu0 %v1046
    %v1119 = vpop.f32.mrb[0].mxu0
    %v1120 = vadd.f32 0.0, %v1119
    %v1121 = vpop.f32.mrb[0].mxu0
    %1122 = vdwg.mxu0
    %1123 = vrot.lane.b32.xlu0 %v299, 112
    %v1124 = vpop.permute.xlu0 %1123
    %1125 = vrot.lane.b32.xlu0 %v304, 112
    %v1126 = vpop.permute.xlu0 %1125
    %1127 = vrot.lane.b32.xlu0 %v299, 80
    %v1128 = vpop.permute.xlu0 %1127
    %1129 = vrot.lane.b32.xlu0 %v304, 80
    %v1130 = vpop.permute.xlu0 %1129
    %v1131 = vsel %vm323, %v1124, 0
    %v1133 = vsel %vm323, %v1126, 0
    %v1135 = vsel %vm323, %v1128, 0
    %v1137 = vsel %vm323, %v1130, 0
    %1139 = vmatprep.subr.mxu0 0.0
    %1140 = vmatpush1.xpose.msra.mxu0 %v1135
    %1141 = vmatprep.subr.mxu0 0.0
    %1142 = vmatpush1.xpose.msra.mxu0 %v1137
    %1143 = vmatprep.subr.mxu0 0.0
    %1144 = vmatpush1.xpose.msra.mxu0 0.0
    %1145 = vmatprep.subr.mxu0 0.0
    %1146 = vmatpush1.xpose.msra.mxu0 0.0
    %1147 = vmatprep.subr.mxu0 0.0
    %1148 = vmatpush1.xpose.msra.mxu0 0.0
    %1149 = vmatprep.subr.mxu0 0.0
    %1150 = vmatpush1.xpose.msra.mxu0 0.0
    %1151 = vmatprep.subr.mxu0 0.0
    %1152 = vmatpush1.xpose.msra.mxu0 0.0
    %1153 = vmatprep.subr.mxu0 0.0
    %1154 = vmatpush1.xpose.msra.mxu0 0.0
    %1155 = vmatprep.subr.mxu0 0.0
    %1156 = vmatpush1.xpose.msra.mxu0 0.0
    %1157 = vmatprep.subr.mxu0 0.0
    %1158 = vmatpush1.xpose.msra.mxu0 0.0
    %1159 = vmatprep.subr.mxu0 0.0
    %1160 = vmatpush1.xpose.msra.mxu0 0.0
    %1161 = vmatprep.subr.mxu0 0.0
    %1162 = vmatpush1.xpose.msra.mxu0 0.0
    %1163 = vmatprep.subr.mxu0 0.0
    %1164 = vmatpush1.xpose.msra.mxu0 0.0
    %1165 = vmatprep.subr.mxu0 0.0
    %1166 = vmatpush1.xpose.msra.mxu0 0.0
    %1167 = vmatprep.subr.mxu0 0.0
    %1168 = vmatpush1.xpose.msra.mxu0 0.0
    %1169 = vmatprep.subr.mxu0 0.0
    %1170 = vmatpush1.xpose.msra.mxu0 0.0
    %1171 = vmatprep.subr.mxu0 0.0
    %1172 = vmatpush1.xpose.msra.mxu0 0.0
    %1173 = vmatprep.subr.mxu0 0.0
    %1174 = vmatpush1.xpose.msra.mxu0 0.0
    %1175 = vmatprep.subr.mxu0 0.0
    %1176 = vmatpush1.xpose.msra.mxu0 0.0
    %1177 = vmatprep.subr.mxu0 0.0
    %1178 = vmatpush1.xpose.msra.mxu0 0.0
    %1179 = vmatprep.subr.mxu0 0.0
    %1180 = vmatpush1.xpose.msra.mxu0 0.0
    %1181 = vmatprep.subr.mxu0 0.0
    %1182 = vmatpush1.xpose.msra.mxu0 0.0
    %1183 = vmatprep.subr.mxu0 0.0
    %1184 = vmatpush1.xpose.msra.mxu0 0.0
    %1185 = vmatprep.subr.mxu0 0.0
    %1186 = vmatpush1.xpose.msra.mxu0 0.0
    %1187 = vmatprep.subr.mxu0 0.0
    %1188 = vmatpush1.xpose.msra.mxu0 0.0
    %1189 = vmatprep.subr.mxu0 0.0
    %1190 = vmatpush1.xpose.msra.mxu0 0.0
    %1191 = vmatprep.subr.mxu0 0.0
    %1192 = vmatpush1.xpose.msra.mxu0 0.0
    %1193 = vmatprep.subr.mxu0 0.0
    %1194 = vmatpush1.xpose.msra.mxu0 0.0
    %1195 = vmatprep.subr.mxu0 0.0
    %1196 = vmatpush1.xpose.msra.mxu0 0.0
    %1197 = vmatprep.subr.mxu0 0.0
    %1198 = vmatpush1.xpose.msra.mxu0 0.0
    %1199 = vmatprep.subr.mxu0 0.0
    %1200 = vmatpush1.xpose.msra.mxu0 0.0
    %1201 = vmatprep.subr.mxu0 0.0
    %1202 = vmatpush1.xpose.msra.mxu0 0.0
    %1203 = vmatprep.mubr.f32.mxu0 0.0
    %1204 = vmatmul.mubr.f32.gmra.mrb[0].mxu0 %v1131
    %v1205 = vpop.f32.mrb[0].mxu0
    %v1206 = vadd.f32 0.0, %v1205
    %v1207 = vpop.f32.mrb[0].mxu0
    %1208 = vmatprep.mubr.f32.mxu0 0.0
    %1209 = vmatmul.mubr.f32.gmra.mrb[0].mxu0 %v1133
    %v1210 = vpop.f32.mrb[0].mxu0
    %v1211 = vadd.f32 0.0, %v1210
    %v1212 = vpop.f32.mrb[0].mxu0
    %1213 = vdwg.mxu0
    %1214 = vrot.lane.b32.xlu0 %v309, 112
    %v1215 = vpop.permute.xlu0 %1214
    %1216 = vrot.lane.b32.xlu0 %v314, 112
    %v1217 = vpop.permute.xlu0 %1216
    %1218 = vrot.lane.b32.xlu0 %v309, 80
    %v1219 = vpop.permute.xlu0 %1218
    %1220 = vrot.lane.b32.xlu0 %v314, 80
    %v1221 = vpop.permute.xlu0 %1220
    %v1222 = vsel %vm323, %v1215, 0
    %v1224 = vsel %vm323, %v1217, 0
    %v1226 = vsel %vm323, %v1219, 0
    %v1228 = vsel %vm323, %v1221, 0
    %1230 = vmatprep.subr.mxu0 0.0
    %1231 = vmatpush1.xpose.msra.mxu0 %v1226
    %1232 = vmatprep.subr.mxu0 0.0
    %1233 = vmatpush1.xpose.msra.mxu0 %v1228
    %1234 = vmatprep.subr.mxu0 0.0
    %1235 = vmatpush1.xpose.msra.mxu0 0.0
    %1236 = vmatprep.subr.mxu0 0.0
    %1237 = vmatpush1.xpose.msra.mxu0 0.0
    %1238 = vmatprep.subr.mxu0 0.0
    %1239 = vmatpush1.xpose.msra.mxu0 0.0
    %1240 = vmatprep.subr.mxu0 0.0
    %1241 = vmatpush1.xpose.msra.mxu0 0.0
    %1242 = vmatprep.subr.mxu0 0.0
    %1243 = vmatpush1.xpose.msra.mxu0 0.0
    %1244 = vmatprep.subr.mxu0 0.0
    %1245 = vmatpush1.xpose.msra.mxu0 0.0
    %1246 = vmatprep.subr.mxu0 0.0
    %1247 = vmatpush1.xpose.msra.mxu0 0.0
    %1248 = vmatprep.subr.mxu0 0.0
    %1249 = vmatpush1.xpose.msra.mxu0 0.0
    %1250 = vmatprep.subr.mxu0 0.0
    %1251 = vmatpush1.xpose.msra.mxu0 0.0
    %1252 = vmatprep.subr.mxu0 0.0
    %1253 = vmatpush1.xpose.msra.mxu0 0.0
    %1254 = vmatprep.subr.mxu0 0.0
    %1255 = vmatpush1.xpose.msra.mxu0 0.0
    %1256 = vmatprep.subr.mxu0 0.0
    %1257 = vmatpush1.xpose.msra.mxu0 0.0
    %1258 = vmatprep.subr.mxu0 0.0
    %1259 = vmatpush1.xpose.msra.mxu0 0.0
    %1260 = vmatprep.subr.mxu0 0.0
    %1261 = vmatpush1.xpose.msra.mxu0 0.0
    %1262 = vmatprep.subr.mxu0 0.0
    %1263 = vmatpush1.xpose.msra.mxu0 0.0
    %1264 = vmatprep.subr.mxu0 0.0
    %1265 = vmatpush1.xpose.msra.mxu0 0.0
    %1266 = vmatprep.subr.mxu0 0.0
    %1267 = vmatpush1.xpose.msra.mxu0 0.0
    %1268 = vmatprep.subr.mxu0 0.0
    %1269 = vmatpush1.xpose.msra.mxu0 0.0
    %1270 = vmatprep.subr.mxu0 0.0
    %1271 = vmatpush1.xpose.msra.mxu0 0.0
    %1272 = vmatprep.subr.mxu0 0.0
    %1273 = vmatpush1.xpose.msra.mxu0 0.0
    %1274 = vmatprep.subr.mxu0 0.0
    %1275 = vmatpush1.xpose.msra.mxu0 0.0
    %1276 = vmatprep.subr.mxu0 0.0
    %1277 = vmatpush1.xpose.msra.mxu0 0.0
    %1278 = vmatprep.subr.mxu0 0.0
    %1279 = vmatpush1.xpose.msra.mxu0 0.0
    %1280 = vmatprep.subr.mxu0 0.0
    %1281 = vmatpush1.xpose.msra.mxu0 0.0
    %1282 = vmatprep.subr.mxu0 0.0
    %1283 = vmatpush1.xpose.msra.mxu0 0.0
    %1284 = vmatprep.subr.mxu0 0.0
    %1285 = vmatpush1.xpose.msra.mxu0 0.0
    %1286 = vmatprep.subr.mxu0 0.0
    %1287 = vmatpush1.xpose.msra.mxu0 0.0
    %1288 = vmatprep.subr.mxu0 0.0
    %1289 = vmatpush1.xpose.msra.mxu0 0.0
    %1290 = vmatprep.subr.mxu0 0.0
    %1291 = vmatpush1.xpose.msra.mxu0 0.0
    %1292 = vmatprep.subr.mxu0 0.0
    %1293 = vmatpush1.xpose.msra.mxu0 0.0
    %1294 = vmatprep.mubr.f32.mxu0 0.0
    %1295 = vmatmul.mubr.f32.gmra.mrb[0].mxu0 %v1222
    %v1296 = vpop.f32.mrb[0].mxu0
    %v1297 = vadd.f32 0.0, %v1296
    %v1298 = vpop.f32.mrb[0].mxu0
    %1299 = vmatprep.mubr.f32.mxu0 0.0
    %1300 = vmatmul.mubr.f32.gmra.mrb[0].mxu0 %v1224
    %v1301 = vpop.f32.mrb[0].mxu0
    %v1302 = vadd.f32 0.0, %v1301
    %v1303 = vpop.f32.mrb[0].mxu0
    %1304 = vdwg.mxu0
    %v1305 = vsel %vm496, %v1206, -inf
    %1306 = vmax.xlane.f32.xlu0 %v1305
    %v1307 = vpop.xlane.xlu0 %1306
    %v1308 = vsel %vm496, %v1211, -inf
    %1309 = vmax.xlane.f32.xlu0 %v1308
    %v1310 = vpop.xlane.xlu0 %1309
    %v1311 = vsel %vm496, %v1297, -inf
    %1312 = vmax.xlane.f32.xlu0 %v1311
    %v1313 = vpop.xlane.xlu0 %1312
    %v1314 = vsel %vm496, %v1302, -inf
    %1315 = vmax.xlane.f32.xlu0 %v1314
    %v1316 = vpop.xlane.xlu0 %1315
    %v1317 = vsub.f32 %v1206, %v1307
    %v1318 = vsub.f32 %v1211, %v1310
    %v1319 = vsub.f32 %v1297, %v1313
    %v1320 = vsub.f32 %v1302, %v1316
    %v1321 = vmul.f32 %v1317, 1.442695
    %v1322 = vpow.pop %v1321
    %v1323 = vmul.f32 %v1318, 1.442695
    %v1324 = vpow.pop %v1323
    %v1325 = vmul.f32 %v1319, 1.442695
    %v1326 = vpow.pop %v1325
    %v1327 = vmul.f32 %v1320, 1.442695
    %v1328 = vpow.pop %v1327
    %v1329 = vsel %vm496, %v1322, 0.0
    %1330 = vadd.xlane.f32.xlu0 %v1329
    %v1331 = vpop.xlane.xlu0 %1330
    %v1332 = vsel %vm496, %v1324, 0.0
    %1333 = vadd.xlane.f32.xlu0 %v1332
    %v1334 = vpop.xlane.xlu0 %1333
    %v1335 = vsel %vm496, %v1326, 0.0
    %1336 = vadd.xlane.f32.xlu0 %v1335
    %v1337 = vpop.xlane.xlu0 %1336
    %v1338 = vsel %vm496, %v1328, 0.0
    %1339 = vadd.xlane.f32.xlu0 %v1338
    %v1340 = vpop.xlane.xlu0 %1339
    %v1341 = vrcp.pop %v1331
    %v1342 = vmul.f32 1.0, %v1341
    %v1343 = vrcp.pop %v1334
    %v1344 = vmul.f32 1.0, %v1343
    %v1345 = vrcp.pop %v1337
    %v1346 = vmul.f32 1.0, %v1345
    %v1347 = vrcp.pop %v1340
    %v1348 = vmul.f32 1.0, %v1347
    %v1349 = vmul.f32 %v1322, %v1342
    %v1350 = vmul.f32 %v1324, %v1344
    %v1351 = vmul.f32 %v1326, %v1346
    %v1352 = vmul.f32 %v1328, %v1348
    %1353 = vrot.lane.b32.xlu0 %v299, 48
    %v1354 = vpop.permute.xlu0 %1353
    %1355 = vrot.lane.b32.xlu0 %v304, 48
    %v1356 = vpop.permute.xlu0 %1355
    %v1360 = vsel %vm496, %v1349, 0
    %v1363 = vsel %vm496, %v1350, 0
    %1365 = vmatprep.subr.mxu0 0.0
    %1366 = vmatpush1.msra.mxu0 %v1354
    %1367 = vmatprep.subr.mxu0 0.0
    %1368 = vmatpush1.msra.mxu0 %v1356
    %1369 = vmatprep.subr.mxu0 0.0
    %1370 = vmatpush1.msra.mxu0 0.0
    %1371 = vmatprep.subr.mxu0 0.0
    %1372 = vmatpush1.msra.mxu0 0.0
    %1373 = vmatprep.subr.mxu0 0.0
    %1374 = vmatpush1.msra.mxu0 0.0
    %1375 = vmatprep.subr.mxu0 0.0
    %1376 = vmatpush1.msra.mxu0 0.0
    %1377 = vmatprep.subr.mxu0 0.0
    %1378 = vmatpush1.msra.mxu0 0.0
    %1379 = vmatprep.subr.mxu0 0.0
    %1380 = vmatpush1.msra.mxu0 0.0
    %1381 = vmatprep.subr.mxu0 0.0
    %1382 = vmatpush1.msra.mxu0 0.0
    %1383 = vmatprep.subr.mxu0 0.0
    %1384 = vmatpush1.msra.mxu0 0.0
    %1385 = vmatprep.subr.mxu0 0.0
    %1386 = vmatpush1.msra.mxu0 0.0
    %1387 = vmatprep.subr.mxu0 0.0
    %1388 = vmatpush1.msra.mxu0 0.0
    %1389 = vmatprep.subr.mxu0 0.0
    %1390 = vmatpush1.msra.mxu0 0.0
    %1391 = vmatprep.subr.mxu0 0.0
    %1392 = vmatpush1.msra.mxu0 0.0
    %1393 = vmatprep.subr.mxu0 0.0
    %1394 = vmatpush1.msra.mxu0 0.0
    %1395 = vmatprep.subr.mxu0 0.0
    %1396 = vmatpush1.msra.mxu0 0.0
    %1397 = vmatprep.subr.mxu0 0.0
    %1398 = vmatpush1.msra.mxu0 0.0
    %1399 = vmatprep.subr.mxu0 0.0
    %1400 = vmatpush1.msra.mxu0 0.0
    %1401 = vmatprep.subr.mxu0 0.0
    %1402 = vmatpush1.msra.mxu0 0.0
    %1403 = vmatprep.subr.mxu0 0.0
    %1404 = vmatpush1.msra.mxu0 0.0
    %1405 = vmatprep.subr.mxu0 0.0
    %1406 = vmatpush1.msra.mxu0 0.0
    %1407 = vmatprep.subr.mxu0 0.0
    %1408 = vmatpush1.msra.mxu0 0.0
    %1409 = vmatprep.subr.mxu0 0.0
    %1410 = vmatpush1.msra.mxu0 0.0
    %1411 = vmatprep.subr.mxu0 0.0
    %1412 = vmatpush1.msra.mxu0 0.0
    %1413 = vmatprep.subr.mxu0 0.0
    %1414 = vmatpush1.msra.mxu0 0.0
    %1415 = vmatprep.subr.mxu0 0.0
    %1416 = vmatpush1.msra.mxu0 0.0
    %1417 = vmatprep.subr.mxu0 0.0
    %1418 = vmatpush1.msra.mxu0 0.0
    %1419 = vmatprep.subr.mxu0 0.0
    %1420 = vmatpush1.msra.mxu0 0.0
    %1421 = vmatprep.subr.mxu0 0.0
    %1422 = vmatpush1.msra.mxu0 0.0
    %1423 = vmatprep.subr.mxu0 0.0
    %1424 = vmatpush1.msra.mxu0 0.0
    %1425 = vmatprep.subr.mxu0 0.0
    %1426 = vmatpush1.msra.mxu0 0.0
    %1427 = vmatprep.subr.mxu0 0.0
    %1428 = vmatpush1.msra.mxu0 0.0
    %1429 = vmatprep.mubr.f32.mxu0 0.0
    %1430 = vmatmul.mubr.f32.gmra.mrb[0].mxu0 %v1360
    %v1431 = vpop.f32.mrb[0].mxu0
    %v1432 = vadd.f32 0.0, %v1431
    %v1433 = vpop.f32.mrb[0].mxu0
    %1434 = vmatprep.mubr.f32.mxu0 0.0
    %1435 = vmatmul.mubr.f32.gmra.mrb[0].mxu0 %v1363
    %v1436 = vpop.f32.mrb[0].mxu0
    %v1437 = vadd.f32 0.0, %v1436
    %v1438 = vpop.f32.mrb[0].mxu0
    %1439 = vdwg.mxu0
    %1440 = vrot.lane.b32.xlu0 %v309, 48
    %v1441 = vpop.permute.xlu0 %1440
    %1442 = vrot.lane.b32.xlu0 %v314, 48
    %v1443 = vpop.permute.xlu0 %1442
    %v1447 = vsel %vm496, %v1351, 0
    %v1450 = vsel %vm496, %v1352, 0
    %1452 = vmatprep.subr.mxu0 0.0
    %1453 = vmatpush1.msra.mxu0 %v1441
    %1454 = vmatprep.subr.mxu0 0.0
    %1455 = vmatpush1.msra.mxu0 %v1443
    %1456 = vmatprep.subr.mxu0 0.0
    %1457 = vmatpush1.msra.mxu0 0.0
    %1458 = vmatprep.subr.mxu0 0.0
    %1459 = vmatpush1.msra.mxu0 0.0
    %1460 = vmatprep.subr.mxu0 0.0
    %1461 = vmatpush1.msra.mxu0 0.0
    %1462 = vmatprep.subr.mxu0 0.0
    %1463 = vmatpush1.msra.mxu0 0.0
    %1464 = vmatprep.subr.mxu0 0.0
    %1465 = vmatpush1.msra.mxu0 0.0
    %1466 = vmatprep.subr.mxu0 0.0
    %1467 = vmatpush1.msra.mxu0 0.0
    %1468 = vmatprep.subr.mxu0 0.0
    %1469 = vmatpush1.msra.mxu0 0.0
    %1470 = vmatprep.subr.mxu0 0.0
    %1471 = vmatpush1.msra.mxu0 0.0
    %1472 = vmatprep.subr.mxu0 0.0
    %1473 = vmatpush1.msra.mxu0 0.0
    %1474 = vmatprep.subr.mxu0 0.0
    %1475 = vmatpush1.msra.mxu0 0.0
    %1476 = vmatprep.subr.mxu0 0.0
    %1477 = vmatpush1.msra.mxu0 0.0
    %1478 = vmatprep.subr.mxu0 0.0
    %1479 = vmatpush1.msra.mxu0 0.0
    %1480 = vmatprep.subr.mxu0 0.0
    %1481 = vmatpush1.msra.mxu0 0.0
    %1482 = vmatprep.subr.mxu0 0.0
    %1483 = vmatpush1.msra.mxu0 0.0
    %1484 = vmatprep.subr.mxu0 0.0
    %1485 = vmatpush1.msra.mxu0 0.0
    %1486 = vmatprep.subr.mxu0 0.0
    %1487 = vmatpush1.msra.mxu0 0.0
    %1488 = vmatprep.subr.mxu0 0.0
    %1489 = vmatpush1.msra.mxu0 0.0
    %1490 = vmatprep.subr.mxu0 0.0
    %1491 = vmatpush1.msra.mxu0 0.0
    %1492 = vmatprep.subr.mxu0 0.0
    %1493 = vmatpush1.msra.mxu0 0.0
    %1494 = vmatprep.subr.mxu0 0.0
    %1495 = vmatpush1.msra.mxu0 0.0
    %1496 = vmatprep.subr.mxu0 0.0
    %1497 = vmatpush1.msra.mxu0 0.0
    %1498 = vmatprep.subr.mxu0 0.0
    %1499 = vmatpush1.msra.mxu0 0.0
    %1500 = vmatprep.subr.mxu0 0.0
    %1501 = vmatpush1.msra.mxu0 0.0
    %1502 = vmatprep.subr.mxu0 0.0
    %1503 = vmatpush1.msra.mxu0 0.0
    %1504 = vmatprep.subr.mxu0 0.0
    %1505 = vmatpush1.msra.mxu0 0.0
    %1506 = vmatprep.subr.mxu0 0.0
    %1507 = vmatpush1.msra.mxu0 0.0
    %1508 = vmatprep.subr.mxu0 0.0
    %1509 = vmatpush1.msra.mxu0 0.0
    %1510 = vmatprep.subr.mxu0 0.0
    %1511 = vmatpush1.msra.mxu0 0.0
    %1512 = vmatprep.subr.mxu0 0.0
    %1513 = vmatpush1.msra.mxu0 0.0
    %1514 = vmatprep.subr.mxu0 0.0
    %1515 = vmatpush1.msra.mxu0 0.0
    %1516 = vmatprep.mubr.f32.mxu0 0.0
    %1517 = vmatmul.mubr.f32.gmra.mrb[0].mxu0 %v1447
    %v1518 = vpop.f32.mrb[0].mxu0
    %v1519 = vadd.f32 0.0, %v1518
    %v1520 = vpop.f32.mrb[0].mxu0
    %1521 = vmatprep.mubr.f32.mxu0 0.0
    %1522 = vmatmul.mubr.f32.gmra.mrb[0].mxu0 %v1450
    %v1523 = vpop.f32.mrb[0].mxu0
    %v1524 = vadd.f32 0.0, %v1523
    %v1525 = vpop.f32.mrb[0].mxu0
    %1526 = vdwg.mxu0
    %1527 = vrot.lane.b32.xlu0 %v299, 104
    %v1528 = vpop.permute.xlu0 %1527
    %1529 = vrot.lane.b32.xlu0 %v304, 104
    %v1530 = vpop.permute.xlu0 %1529
    %1531 = vrot.lane.b32.xlu0 %v299, 72
    %v1532 = vpop.permute.xlu0 %1531
    %1533 = vrot.lane.b32.xlu0 %v304, 72
    %v1534 = vpop.permute.xlu0 %1533
    %v1535 = vsel %vm323, %v1528, 0
    %v1537 = vsel %vm323, %v1530, 0
    %v1539 = vsel %vm323, %v1532, 0
    %v1541 = vsel %vm323, %v1534, 0
    %1543 = vmatprep.subr.mxu0 0.0
    %1544 = vmatpush1.xpose.msra.mxu0 %v1539
    %1545 = vmatprep.subr.mxu0 0.0
    %1546 = vmatpush1.xpose.msra.mxu0 %v1541
    %1547 = vmatprep.subr.mxu0 0.0
    %1548 = vmatpush1.xpose.msra.mxu0 0.0
    %1549 = vmatprep.subr.mxu0 0.0
    %1550 = vmatpush1.xpose.msra.mxu0 0.0
    %1551 = vmatprep.subr.mxu0 0.0
    %1552 = vmatpush1.xpose.msra.mxu0 0.0
    %1553 = vmatprep.subr.mxu0 0.0
    %1554 = vmatpush1.xpose.msra.mxu0 0.0
    %1555 = vmatprep.subr.mxu0 0.0
    %1556 = vmatpush1.xpose.msra.mxu0 0.0
    %1557 = vmatprep.subr.mxu0 0.0
    %1558 = vmatpush1.xpose.msra.mxu0 0.0
    %1559 = vmatprep.subr.mxu0 0.0
    %1560 = vmatpush1.xpose.msra.mxu0 0.0
    %1561 = vmatprep.subr.mxu0 0.0
    %1562 = vmatpush1.xpose.msra.mxu0 0.0
    %1563 = vmatprep.subr.mxu0 0.0
    %1564 = vmatpush1.xpose.msra.mxu0 0.0
    %1565 = vmatprep.subr.mxu0 0.0
    %1566 = vmatpush1.xpose.msra.mxu0 0.0
    %1567 = vmatprep.subr.mxu0 0.0
    %1568 = vmatpush1.xpose.msra.mxu0 0.0
    %1569 = vmatprep.subr.mxu0 0.0
    %1570 = vmatpush1.xpose.msra.mxu0 0.0
    %1571 = vmatprep.subr.mxu0 0.0
    %1572 = vmatpush1.xpose.msra.mxu0 0.0
    %1573 = vmatprep.subr.mxu0 0.0
    %1574 = vmatpush1.xpose.msra.mxu0 0.0
    %1575 = vmatprep.subr.mxu0 0.0
    %1576 = vmatpush1.xpose.msra.mxu0 0.0
    %1577 = vmatprep.subr.mxu0 0.0
    %1578 = vmatpush1.xpose.msra.mxu0 0.0
    %1579 = vmatprep.subr.mxu0 0.0
    %1580 = vmatpush1.xpose.msra.mxu0 0.0
    %1581 = vmatprep.subr.mxu0 0.0
    %1582 = vmatpush1.xpose.msra.mxu0 0.0
    %1583 = vmatprep.subr.mxu0 0.0
    %1584 = vmatpush1.xpose.msra.mxu0 0.0
    %1585 = vmatprep.subr.mxu0 0.0
    %1586 = vmatpush1.xpose.msra.mxu0 0.0
    %1587 = vmatprep.subr.mxu0 0.0
    %1588 = vmatpush1.xpose.msra.mxu0 0.0
    %1589 = vmatprep.subr.mxu0 0.0
    %1590 = vmatpush1.xpose.msra.mxu0 0.0
    %1591 = vmatprep.subr.mxu0 0.0
    %1592 = vmatpush1.xpose.msra.mxu0 0.0
    %1593 = vmatprep.subr.mxu0 0.0
    %1594 = vmatpush1.xpose.msra.mxu0 0.0
    %1595 = vmatprep.subr.mxu0 0.0
    %1596 = vmatpush1.xpose.msra.mxu0 0.0
    %1597 = vmatprep.subr.mxu0 0.0
    %1598 = vmatpush1.xpose.msra.mxu0 0.0
    %1599 = vmatprep.subr.mxu0 0.0
    %1600 = vmatpush1.xpose.msra.mxu0 0.0
    %1601 = vmatprep.subr.mxu0 0.0
    %1602 = vmatpush1.xpose.msra.mxu0 0.0
    %1603 = vmatprep.subr.mxu0 0.0
    %1604 = vmatpush1.xpose.msra.mxu0 0.0
    %1605 = vmatprep.subr.mxu0 0.0
    %1606 = vmatpush1.xpose.msra.mxu0 0.0
    %1607 = vmatprep.mubr.f32.mxu0 0.0
    %1608 = vmatmul.mubr.f32.gmra.mrb[0].mxu0 %v1535
    %v1609 = vpop.f32.mrb[0].mxu0
    %v1610 = vadd.f32 0.0, %v1609
    %v1611 = vpop.f32.mrb[0].mxu0
    %1612 = vmatprep.mubr.f32.mxu0 0.0
    %1613 = vmatmul.mubr.f32.gmra.mrb[0].mxu0 %v1537
    %v1614 = vpop.f32.mrb[0].mxu0
    %v1615 = vadd.f32 0.0, %v1614
    %v1616 = vpop.f32.mrb[0].mxu0
    %1617 = vdwg.mxu0
    %1618 = vrot.lane.b32.xlu0 %v309, 104
    %v1619 = vpop.permute.xlu0 %1618
    %1620 = vrot.lane.b32.xlu0 %v314, 104
    %v1621 = vpop.permute.xlu0 %1620
    %1622 = vrot.lane.b32.xlu0 %v309, 72
    %v1623 = vpop.permute.xlu0 %1622
    %1624 = vrot.lane.b32.xlu0 %v314, 72
    %v1625 = vpop.permute.xlu0 %1624
    %v1626 = vsel %vm323, %v1619, 0
    %v1628 = vsel %vm323, %v1621, 0
    %v1630 = vsel %vm323, %v1623, 0
    %v1632 = vsel %vm323, %v1625, 0
    %1634 = vmatprep.subr.mxu0 0.0
    %1635 = vmatpush1.xpose.msra.mxu0 %v1630
    %1636 = vmatprep.subr.mxu0 0.0
    %1637 = vmatpush1.xpose.msra.mxu0 %v1632
    %1638 = vmatprep.subr.mxu0 0.0
    %1639 = vmatpush1.xpose.msra.mxu0 0.0
    %1640 = vmatprep.subr.mxu0 0.0
    %1641 = vmatpush1.xpose.msra.mxu0 0.0
    %1642 = vmatprep.subr.mxu0 0.0
    %1643 = vmatpush1.xpose.msra.mxu0 0.0
    %1644 = vmatprep.subr.mxu0 0.0
    %1645 = vmatpush1.xpose.msra.mxu0 0.0
    %1646 = vmatprep.subr.mxu0 0.0
    %1647 = vmatpush1.xpose.msra.mxu0 0.0
    %1648 = vmatprep.subr.mxu0 0.0
    %1649 = vmatpush1.xpose.msra.mxu0 0.0
    %1650 = vmatprep.subr.mxu0 0.0
    %1651 = vmatpush1.xpose.msra.mxu0 0.0
    %1652 = vmatprep.subr.mxu0 0.0
    %1653 = vmatpush1.xpose.msra.mxu0 0.0
    %1654 = vmatprep.subr.mxu0 0.0
    %1655 = vmatpush1.xpose.msra.mxu0 0.0
    %1656 = vmatprep.subr.mxu0 0.0
    %1657 = vmatpush1.xpose.msra.mxu0 0.0
    %1658 = vmatprep.subr.mxu0 0.0
    %1659 = vmatpush1.xpose.msra.mxu0 0.0
    %1660 = vmatprep.subr.mxu0 0.0
    %1661 = vmatpush1.xpose.msra.mxu0 0.0
    %1662 = vmatprep.subr.mxu0 0.0
    %1663 = vmatpush1.xpose.msra.mxu0 0.0
    %1664 = vmatprep.subr.mxu0 0.0
    %1665 = vmatpush1.xpose.msra.mxu0 0.0
    %1666 = vmatprep.subr.mxu0 0.0
    %1667 = vmatpush1.xpose.msra.mxu0 0.0
    %1668 = vmatprep.subr.mxu0 0.0
    %1669 = vmatpush1.xpose.msra.mxu0 0.0
    %1670 = vmatprep.subr.mxu0 0.0
    %1671 = vmatpush1.xpose.msra.mxu0 0.0
    %1672 = vmatprep.subr.mxu0 0.0
    %1673 = vmatpush1.xpose.msra.mxu0 0.0
    %1674 = vmatprep.subr.mxu0 0.0
    %1675 = vmatpush1.xpose.msra.mxu0 0.0
    %1676 = vmatprep.subr.mxu0 0.0
    %1677 = vmatpush1.xpose.msra.mxu0 0.0
    %1678 = vmatprep.subr.mxu0 0.0
    %1679 = vmatpush1.xpose.msra.mxu0 0.0
    %1680 = vmatprep.subr.mxu0 0.0
    %1681 = vmatpush1.xpose.msra.mxu0 0.0
    %1682 = vmatprep.subr.mxu0 0.0
    %1683 = vmatpush1.xpose.msra.mxu0 0.0
    %1684 = vmatprep.subr.mxu0 0.0
    %1685 = vmatpush1.xpose.msra.mxu0 0.0
    %1686 = vmatprep.subr.mxu0 0.0
    %1687 = vmatpush1.xpose.msra.mxu0 0.0
    %1688 = vmatprep.subr.mxu0 0.0
    %1689 = vmatpush1.xpose.msra.mxu0 0.0
    %1690 = vmatprep.subr.mxu0 0.0
    %1691 = vmatpush1.xpose.msra.mxu0 0.0
    %1692 = vmatprep.subr.mxu0 0.0
    %1693 = vmatpush1.xpose.msra.mxu0 0.0
    %1694 = vmatprep.subr.mxu0 0.0
    %1695 = vmatpush1.xpose.msra.mxu0 0.0
    %1696 = vmatprep.subr.mxu0 0.0
    %1697 = vmatpush1.xpose.msra.mxu0 0.0
    %1698 = vmatprep.mubr.f32.mxu0 0.0
    %1699 = vmatmul.mubr.f32.gmra.mrb[0].mxu0 %v1626
    %v1700 = vpop.f32.mrb[0].mxu0
    %v1701 = vadd.f32 0.0, %v1700
    %v1702 = vpop.f32.mrb[0].mxu0
    %1703 = vmatprep.mubr.f32.mxu0 0.0
    %1704 = vmatmul.mubr.f32.gmra.mrb[0].mxu0 %v1628
    %v1705 = vpop.f32.mrb[0].mxu0
    %v1706 = vadd.f32 0.0, %v1705
    %v1707 = vpop.f32.mrb[0].mxu0
    %1708 = vdwg.mxu0
    %v1709 = vsel %vm496, %v1610, -inf
    %1710 = vmax.xlane.f32.xlu0 %v1709
    %v1711 = vpop.xlane.xlu0 %1710
    %v1712 = vsel %vm496, %v1615, -inf
    %1713 = vmax.xlane.f32.xlu0 %v1712
    %v1714 = vpop.xlane.xlu0 %1713
    %v1715 = vsel %vm496, %v1701, -inf
    %1716 = vmax.xlane.f32.xlu0 %v1715
    %v1717 = vpop.xlane.xlu0 %1716
    %v1718 = vsel %vm496, %v1706, -inf
    %1719 = vmax.xlane.f32.xlu0 %v1718
    %v1720 = vpop.xlane.xlu0 %1719
    %v1721 = vsub.f32 %v1610, %v1711
    %v1722 = vsub.f32 %v1615, %v1714
    %v1723 = vsub.f32 %v1701, %v1717
    %v1724 = vsub.f32 %v1706, %v1720
    %v1725 = vmul.f32 %v1721, 1.442695
    %v1726 = vpow.pop %v1725
    %v1727 = vmul.f32 %v1722, 1.442695
    %v1728 = vpow.pop %v1727
    %v1729 = vmul.f32 %v1723, 1.442695
    %v1730 = vpow.pop %v1729
    %v1731 = vmul.f32 %v1724, 1.442695
    %v1732 = vpow.pop %v1731
    %v1733 = vsel %vm496, %v1726, 0.0
    %1734 = vadd.xlane.f32.xlu0 %v1733
    %v1735 = vpop.xlane.xlu0 %1734
    %v1736 = vsel %vm496, %v1728, 0.0
    %1737 = vadd.xlane.f32.xlu0 %v1736
    %v1738 = vpop.xlane.xlu0 %1737
    %v1739 = vsel %vm496, %v1730, 0.0
    %1740 = vadd.xlane.f32.xlu0 %v1739
    %v1741 = vpop.xlane.xlu0 %1740
    %v1742 = vsel %vm496, %v1732, 0.0
    %1743 = vadd.xlane.f32.xlu0 %v1742
    %v1744 = vpop.xlane.xlu0 %1743
    %v1745 = vrcp.pop %v1735
    %v1746 = vmul.f32 1.0, %v1745
    %v1747 = vrcp.pop %v1738
    %v1748 = vmul.f32 1.0, %v1747
    %v1749 = vrcp.pop %v1741
    %v1750 = vmul.f32 1.0, %v1749
    %v1751 = vrcp.pop %v1744
    %v1752 = vmul.f32 1.0, %v1751
    %v1753 = vmul.f32 %v1726, %v1746
    %v1754 = vmul.f32 %v1728, %v1748
    %v1755 = vmul.f32 %v1730, %v1750
    %v1756 = vmul.f32 %v1732, %v1752
    %1757 = vrot.lane.b32.xlu0 %v299, 40
    %v1758 = vpop.permute.xlu0 %1757
    %1759 = vrot.lane.b32.xlu0 %v304, 40
    %v1760 = vpop.permute.xlu0 %1759
    %v1764 = vsel %vm496, %v1753, 0
    %v1767 = vsel %vm496, %v1754, 0
    %1769 = vmatprep.subr.mxu0 0.0
    %1770 = vmatpush1.msra.mxu0 %v1758
    %1771 = vmatprep.subr.mxu0 0.0
    %1772 = vmatpush1.msra.mxu0 %v1760
    %1773 = vmatprep.subr.mxu0 0.0
    %1774 = vmatpush1.msra.mxu0 0.0
    %1775 = vmatprep.subr.mxu0 0.0
    %1776 = vmatpush1.msra.mxu0 0.0
    %1777 = vmatprep.subr.mxu0 0.0
    %1778 = vmatpush1.msra.mxu0 0.0
    %1779 = vmatprep.subr.mxu0 0.0
    %1780 = vmatpush1.msra.mxu0 0.0
    %1781 = vmatprep.subr.mxu0 0.0
    %1782 = vmatpush1.msra.mxu0 0.0
    %1783 = vmatprep.subr.mxu0 0.0
    %1784 = vmatpush1.msra.mxu0 0.0
    %1785 = vmatprep.subr.mxu0 0.0
    %1786 = vmatpush1.msra.mxu0 0.0
    %1787 = vmatprep.subr.mxu0 0.0
    %1788 = vmatpush1.msra.mxu0 0.0
    %1789 = vmatprep.subr.mxu0 0.0
    %1790 = vmatpush1.msra.mxu0 0.0
    %1791 = vmatprep.subr.mxu0 0.0
    %1792 = vmatpush1.msra.mxu0 0.0
    %1793 = vmatprep.subr.mxu0 0.0
    %1794 = vmatpush1.msra.mxu0 0.0
    %1795 = vmatprep.subr.mxu0 0.0
    %1796 = vmatpush1.msra.mxu0 0.0
    %1797 = vmatprep.subr.mxu0 0.0
    %1798 = vmatpush1.msra.mxu0 0.0
    %1799 = vmatprep.subr.mxu0 0.0
    %1800 = vmatpush1.msra.mxu0 0.0
    %1801 = vmatprep.subr.mxu0 0.0
    %1802 = vmatpush1.msra.mxu0 0.0
    %1803 = vmatprep.subr.mxu0 0.0
    %1804 = vmatpush1.msra.mxu0 0.0
    %1805 = vmatprep.subr.mxu0 0.0
    %1806 = vmatpush1.msra.mxu0 0.0
    %1807 = vmatprep.subr.mxu0 0.0
    %1808 = vmatpush1.msra.mxu0 0.0
    %1809 = vmatprep.subr.mxu0 0.0
    %1810 = vmatpush1.msra.mxu0 0.0
    %1811 = vmatprep.subr.mxu0 0.0
    %1812 = vmatpush1.msra.mxu0 0.0
    %1813 = vmatprep.subr.mxu0 0.0
    %1814 = vmatpush1.msra.mxu0 0.0
    %1815 = vmatprep.subr.mxu0 0.0
    %1816 = vmatpush1.msra.mxu0 0.0
    %1817 = vmatprep.subr.mxu0 0.0
    %1818 = vmatpush1.msra.mxu0 0.0
    %1819 = vmatprep.subr.mxu0 0.0
    %1820 = vmatpush1.msra.mxu0 0.0
    %1821 = vmatprep.subr.mxu0 0.0
    %1822 = vmatpush1.msra.mxu0 0.0
    %1823 = vmatprep.subr.mxu0 0.0
    %1824 = vmatpush1.msra.mxu0 0.0
    %1825 = vmatprep.subr.mxu0 0.0
    %1826 = vmatpush1.msra.mxu0 0.0
    %1827 = vmatprep.subr.mxu0 0.0
    %1828 = vmatpush1.msra.mxu0 0.0
    %1829 = vmatprep.subr.mxu0 0.0
    %1830 = vmatpush1.msra.mxu0 0.0
    %1831 = vmatprep.subr.mxu0 0.0
    %1832 = vmatpush1.msra.mxu0 0.0
    %1833 = vmatprep.mubr.f32.mxu0 0.0
    %1834 = vmatmul.mubr.f32.gmra.mrb[0].mxu0 %v1764
    %v1835 = vpop.f32.mrb[0].mxu0
    %v1836 = vadd.f32 0.0, %v1835
    %v1837 = vpop.f32.mrb[0].mxu0
    %1838 = vmatprep.mubr.f32.mxu0 0.0
    %1839 = vmatmul.mubr.f32.gmra.mrb[0].mxu0 %v1767
    %v1840 = vpop.f32.mrb[0].mxu0
    %v1841 = vadd.f32 0.0, %v1840
    %v1842 = vpop.f32.mrb[0].mxu0
    %1843 = vdwg.mxu0
    %1844 = vrot.lane.b32.xlu0 %v309, 40
    %v1845 = vpop.permute.xlu0 %1844
    %1846 = vrot.lane.b32.xlu0 %v314, 40
    %v1847 = vpop.permute.xlu0 %1846
    %v1851 = vsel %vm496, %v1755, 0
    %v1854 = vsel %vm496, %v1756, 0
    %1856 = vmatprep.subr.mxu0 0.0
    %1857 = vmatpush1.msra.mxu0 %v1845
    %1858 = vmatprep.subr.mxu0 0.0
    %1859 = vmatpush1.msra.mxu0 %v1847
    %1860 = vmatprep.subr.mxu0 0.0
    %1861 = vmatpush1.msra.mxu0 0.0
    %1862 = vmatprep.subr.mxu0 0.0
    %1863 = vmatpush1.msra.mxu0 0.0
    %1864 = vmatprep.subr.mxu0 0.0
    %1865 = vmatpush1.msra.mxu0 0.0
    %1866 = vmatprep.subr.mxu0 0.0
    %1867 = vmatpush1.msra.mxu0 0.0
    %1868 = vmatprep.subr.mxu0 0.0
    %1869 = vmatpush1.msra.mxu0 0.0
    %1870 = vmatprep.subr.mxu0 0.0
    %1871 = vmatpush1.msra.mxu0 0.0
    %1872 = vmatprep.subr.mxu0 0.0
    %1873 = vmatpush1.msra.mxu0 0.0
    %1874 = vmatprep.subr.mxu0 0.0
    %1875 = vmatpush1.msra.mxu0 0.0
    %1876 = vmatprep.subr.mxu0 0.0
    %1877 = vmatpush1.msra.mxu0 0.0
    %1878 = vmatprep.subr.mxu0 0.0
    %1879 = vmatpush1.msra.mxu0 0.0
    %1880 = vmatprep.subr.mxu0 0.0
    %1881 = vmatpush1.msra.mxu0 0.0
    %1882 = vmatprep.subr.mxu0 0.0
    %1883 = vmatpush1.msra.mxu0 0.0
    %1884 = vmatprep.subr.mxu0 0.0
    %1885 = vmatpush1.msra.mxu0 0.0
    %1886 = vmatprep.subr.mxu0 0.0
    %1887 = vmatpush1.msra.mxu0 0.0
    %1888 = vmatprep.subr.mxu0 0.0
    %1889 = vmatpush1.msra.mxu0 0.0
    %1890 = vmatprep.subr.mxu0 0.0
    %1891 = vmatpush1.msra.mxu0 0.0
    %1892 = vmatprep.subr.mxu0 0.0
    %1893 = vmatpush1.msra.mxu0 0.0
    %1894 = vmatprep.subr.mxu0 0.0
    %1895 = vmatpush1.msra.mxu0 0.0
    %1896 = vmatprep.subr.mxu0 0.0
    %1897 = vmatpush1.msra.mxu0 0.0
    %1898 = vmatprep.subr.mxu0 0.0
    %1899 = vmatpush1.msra.mxu0 0.0
    %1900 = vmatprep.subr.mxu0 0.0
    %1901 = vmatpush1.msra.mxu0 0.0
    %1902 = vmatprep.subr.mxu0 0.0
    %1903 = vmatpush1.msra.mxu0 0.0
    %1904 = vmatprep.subr.mxu0 0.0
    %1905 = vmatpush1.msra.mxu0 0.0
    %1906 = vmatprep.subr.mxu0 0.0
    %1907 = vmatpush1.msra.mxu0 0.0
    %1908 = vmatprep.subr.mxu0 0.0
    %1909 = vmatpush1.msra.mxu0 0.0
    %1910 = vmatprep.subr.mxu0 0.0
    %1911 = vmatpush1.msra.mxu0 0.0
    %1912 = vmatprep.subr.mxu0 0.0
    %1913 = vmatpush1.msra.mxu0 0.0
    %1914 = vmatprep.subr.mxu0 0.0
    %1915 = vmatpush1.msra.mxu0 0.0
    %1916 = vmatprep.subr.mxu0 0.0
    %1917 = vmatpush1.msra.mxu0 0.0
    %1918 = vmatprep.subr.mxu0 0.0
    %1919 = vmatpush1.msra.mxu0 0.0
    %1920 = vmatprep.mubr.f32.mxu0 0.0
    %1921 = vmatmul.mubr.f32.gmra.mrb[0].mxu0 %v1851
    %v1922 = vpop.f32.mrb[0].mxu0
    %v1923 = vadd.f32 0.0, %v1922
    %v1924 = vpop.f32.mrb[0].mxu0
    %1925 = vmatprep.mubr.f32.mxu0 0.0
    %1926 = vmatmul.mubr.f32.gmra.mrb[0].mxu0 %v1854
    %v1927 = vpop.f32.mrb[0].mxu0
    %v1928 = vadd.f32 0.0, %v1927
    %v1929 = vpop.f32.mrb[0].mxu0
    %1930 = vdwg.mxu0
    %1935 = vrot.lane.b32.xlu0 %v1028, 8
    %v1936 = vpop.permute.xlu0 %1935
    %1937 = vrot.lane.b32.xlu0 %v1033, 8
    %v1938 = vpop.permute.xlu0 %1937
    %1939 = vrot.lane.b32.xlu0 %v1115, 8
    %v1940 = vpop.permute.xlu0 %1939
    %1941 = vrot.lane.b32.xlu0 %v1120, 8
    %v1942 = vpop.permute.xlu0 %1941
    %1951 = vrot.lane.b32.xlu0 %v1432, 16
    %v1952 = vpop.permute.xlu0 %1951
    %1953 = vrot.lane.b32.xlu0 %v1437, 16
    %v1954 = vpop.permute.xlu0 %1953
    %1955 = vrot.lane.b32.xlu0 %v1519, 16
    %v1956 = vpop.permute.xlu0 %1955
    %1957 = vrot.lane.b32.xlu0 %v1524, 16
    %v1958 = vpop.permute.xlu0 %1957
    %1967 = vrot.lane.b32.xlu0 %v1836, 24
    %v1968 = vpop.permute.xlu0 %1967
    %1969 = vrot.lane.b32.xlu0 %v1841, 24
    %v1970 = vpop.permute.xlu0 %1969
    %1971 = vrot.lane.b32.xlu0 %v1923, 24
    %v1972 = vpop.permute.xlu0 %1971
    %1973 = vrot.lane.b32.xlu0 %v1928, 24
    %v1974 = vpop.permute.xlu0 %1973
    %v1979 = vsel %vm323, %v624, %v1936
    %v1980 = vsel %vm323, %v629, %v1938
    %v1981 = vsel %vm323, %v711, %v1940
    %v1982 = vsel %vm323, %v716, %v1942
    %v1983 = vsel %vm496, %v1979, %v1952
    %v1984 = vsel %vm496, %v1980, %v1954
    %v1985 = vsel %vm496, %v1981, %v1956
    %v1986 = vsel %vm496, %v1982, %v1958
    %vm1987 = vcmask 195584
    %v1988 = vsel %vm1987, %v1983, %v1968
    %v1989 = vsel %vm1987, %v1984, %v1970
    %v1990 = vsel %vm1987, %v1985, %v1972
    %v1991 = vsel %vm1987, %v1986, %v1974
    %v1992 = vld [vmem:[%s4] sm:$0xff]
    %v1993 = vld [vmem:[%s4 + $0x8] sm:$0xff]
    %v1994 = vld [vmem:[%s4 + $0x10] sm:$0xff]
    %v1995 = vld [vmem:[%s4 + $0x18] sm:$0xff]
    %v1997 = vsel %vm146, %v1988, 0
    %v2000 = vsel %vm146, %v1989, 0
    %v2003 = vsel %vm146, %v1990, 0
    %v2006 = vsel %vm146, %v1991, 0
    %2008 = vmatprep.subr.mxu0 0.0
    %2009 = vmatpush1.msra.mxu0 %v1992
    %2010 = vmatprep.subr.mxu0 0.0
    %2011 = vmatpush1.msra.mxu0 %v1993
    %2012 = vmatprep.subr.mxu0 0.0
    %2013 = vmatpush1.msra.mxu0 %v1994
    %2014 = vmatprep.subr.mxu0 0.0
    %2015 = vmatpush1.msra.mxu0 %v1995
    %2016 = vmatprep.subr.mxu0 0.0
    %2017 = vmatpush1.msra.mxu0 0.0
    %2018 = vmatprep.subr.mxu0 0.0
    %2019 = vmatpush1.msra.mxu0 0.0
    %2020 = vmatprep.subr.mxu0 0.0
    %2021 = vmatpush1.msra.mxu0 0.0
    %2022 = vmatprep.subr.mxu0 0.0
    %2023 = vmatpush1.msra.mxu0 0.0
    %2024 = vmatprep.subr.mxu0 0.0
    %2025 = vmatpush1.msra.mxu0 0.0
    %2026 = vmatprep.subr.mxu0 0.0
    %2027 = vmatpush1.msra.mxu0 0.0
    %2028 = vmatprep.subr.mxu0 0.0
    %2029 = vmatpush1.msra.mxu0 0.0
    %2030 = vmatprep.subr.mxu0 0.0
    %2031 = vmatpush1.msra.mxu0 0.0
    %2032 = vmatprep.subr.mxu0 0.0
    %2033 = vmatpush1.msra.mxu0 0.0
    %2034 = vmatprep.subr.mxu0 0.0
    %2035 = vmatpush1.msra.mxu0 0.0
    %2036 = vmatprep.subr.mxu0 0.0
    %2037 = vmatpush1.msra.mxu0 0.0
    %2038 = vmatprep.subr.mxu0 0.0
    %2039 = vmatpush1.msra.mxu0 0.0
    %2040 = vmatprep.subr.mxu0 0.0
    %2041 = vmatpush1.msra.mxu0 0.0
    %2042 = vmatprep.subr.mxu0 0.0
    %2043 = vmatpush1.msra.mxu0 0.0
    %2044 = vmatprep.subr.mxu0 0.0
    %2045 = vmatpush1.msra.mxu0 0.0
    %2046 = vmatprep.subr.mxu0 0.0
    %2047 = vmatpush1.msra.mxu0 0.0
    %2048 = vmatprep.subr.mxu0 0.0
    %2049 = vmatpush1.msra.mxu0 0.0
    %2050 = vmatprep.subr.mxu0 0.0
    %2051 = vmatpush1.msra.mxu0 0.0
    %2052 = vmatprep.subr.mxu0 0.0
    %2053 = vmatpush1.msra.mxu0 0.0
    %2054 = vmatprep.subr.mxu0 0.0
    %2055 = vmatpush1.msra.mxu0 0.0
    %2056 = vmatprep.subr.mxu0 0.0
    %2057 = vmatpush1.msra.mxu0 0.0
    %2058 = vmatprep.subr.mxu0 0.0
    %2059 = vmatpush1.msra.mxu0 0.0
    %2060 = vmatprep.subr.mxu0 0.0
    %2061 = vmatpush1.msra.mxu0 0.0
    %2062 = vmatprep.subr.mxu0 0.0
    %2063 = vmatpush1.msra.mxu0 0.0
    %2064 = vmatprep.subr.mxu0 0.0
    %2065 = vmatpush1.msra.mxu0 0.0
    %2066 = vmatprep.subr.mxu0 0.0
    %2067 = vmatpush1.msra.mxu0 0.0
    %2068 = vmatprep.subr.mxu0 0.0
    %2069 = vmatpush1.msra.mxu0 0.0
    %2070 = vmatprep.subr.mxu0 0.0
    %2071 = vmatpush1.msra.mxu0 0.0
    %2072 = vmatprep.mubr.f32.mxu0 0.0
    %2073 = vmatmul.mubr.f32.gmra.mrb[0].mxu0 %v1997
    %v2074 = vpop.f32.mrb[0].mxu0
    %v2075 = vadd.f32 0.0, %v2074
    %v2076 = vpop.f32.mrb[0].mxu0
    %2077 = vmatprep.mubr.f32.mxu0 0.0
    %2078 = vmatmul.mubr.f32.gmra.mrb[0].mxu0 %v2000
    %v2079 = vpop.f32.mrb[0].mxu0
    %v2080 = vadd.f32 0.0, %v2079
    %v2081 = vpop.f32.mrb[0].mxu0
    %2082 = vmatprep.mubr.f32.mxu0 0.0
    %2083 = vmatmul.mubr.f32.gmra.mrb[0].mxu0 %v2003
    %v2084 = vpop.f32.mrb[0].mxu0
    %v2085 = vadd.f32 0.0, %v2084
    %v2086 = vpop.f32.mrb[0].mxu0
    %2087 = vmatprep.mubr.f32.mxu0 0.0
    %2088 = vmatmul.mubr.f32.gmra.mrb[0].mxu0 %v2006
    %v2089 = vpop.f32.mrb[0].mxu0
    %v2090 = vadd.f32 0.0, %v2089
    %v2091 = vpop.f32.mrb[0].mxu0
    %2092 = vdwg.mxu0
    %v2093 = vadd.f32 %v127, %v2075
    %v2094 = vadd.f32 %v132, %v2080
    %v2095 = vadd.f32 %v137, %v2085
    %v2096 = vadd.f32 %v142, %v2090
    %v2097 = vlaneseq
    %v2098 = vshrl.u32 %v2097, 7
    %v2099 = vsub.s32 4, %v2098
    %v2100 = vrot.slane %v145, %v2099
    %v2101 = vadd.f32 %v2093, %v2100
    %v2102 = vadd.f32 %v2094, %v2100
    %v2103 = vadd.f32 %v2095, %v2100
    %v2104 = vadd.f32 %v2096, %v2100
    %v2105 = vsel %vm146, %v2101, 0.0
    %2106 = vadd.xlane.f32.xlu0 %v2105
    %v2107 = vpop.xlane.xlu0 %2106
    %v2108 = vsel %vm146, %v2102, 0.0
    %2109 = vadd.xlane.f32.xlu0 %v2108
    %v2110 = vpop.xlane.xlu0 %2109
    %v2111 = vsel %vm146, %v2103, 0.0
    %2112 = vadd.xlane.f32.xlu0 %v2111
    %v2113 = vpop.xlane.xlu0 %2112
    %v2114 = vsel %vm146, %v2104, 0.0
    %2115 = vadd.xlane.f32.xlu0 %v2114
    %v2116 = vpop.xlane.xlu0 %2115
    %v2117 = vmul.f32 %v2107, %v159
    %v2118 = vmul.f32 %v2110, %v159
    %v2119 = vmul.f32 %v2113, %v159
    %v2120 = vmul.f32 %v2116, %v159
    %v2121 = vsub.f32 %v2101, %v2117
    %v2122 = vsub.f32 %v2102, %v2118
    %v2123 = vsub.f32 %v2103, %v2119
    %v2124 = vsub.f32 %v2104, %v2120
    %v2125 = vmul.f32 %v2121, %v2121
    %v2126 = vmul.f32 %v2122, %v2122
    %v2127 = vmul.f32 %v2123, %v2123
    %v2128 = vmul.f32 %v2124, %v2124
    %v2129 = vsel %vm146, %v2125, 0.0
    %2130 = vadd.xlane.f32.xlu0 %v2129
    %v2131 = vpop.xlane.xlu0 %2130
    %v2132 = vsel %vm146, %v2126, 0.0
    %2133 = vadd.xlane.f32.xlu0 %v2132
    %v2134 = vpop.xlane.xlu0 %2133
    %v2135 = vsel %vm146, %v2127, 0.0
    %2136 = vadd.xlane.f32.xlu0 %v2135
    %v2137 = vpop.xlane.xlu0 %2136
    %v2138 = vsel %vm146, %v2128, 0.0
    %2139 = vadd.xlane.f32.xlu0 %v2138
    %v2140 = vpop.xlane.xlu0 %2139
    %v2141 = vmul.f32 %v2131, %v159
    %v2142 = vmul.f32 %v2134, %v159
    %v2143 = vmul.f32 %v2137, %v159
    %v2144 = vmul.f32 %v2140, %v159
    %v2145 = vadd.f32 %v2141, 1e-05
    %v2146 = vadd.f32 %v2142, 1e-05
    %v2147 = vadd.f32 %v2143, 1e-05
    %v2148 = vadd.f32 %v2144, 1e-05
    %v2149 = vrsqrt.pop %v2145
    %v2150 = vrsqrt.pop %v2146
    %v2151 = vrsqrt.pop %v2147
    %v2152 = vrsqrt.pop %v2148
    %v2153 = vmul.f32 %v2121, %v2149
    %v2154 = vmul.f32 %v2122, %v2150
    %v2155 = vmul.f32 %v2123, %v2151
    %v2156 = vmul.f32 %v2124, %v2152
    %v2157 = vlaneseq
    %v2158 = vshrl.u32 %v2157, 7
    %v2159 = vsub.s32 2, %v2158
    %v2160 = vrot.slane %v145, %v2159
    %v2161 = vmul.f32 %v2153, %v2160
    %v2162 = vmul.f32 %v2154, %v2160
    %v2163 = vmul.f32 %v2155, %v2160
    %v2164 = vmul.f32 %v2156, %v2160
    %v2165 = vlaneseq
    %v2166 = vshrl.u32 %v2165, 7
    %v2167 = vsub.s32 3, %v2166
    %v2168 = vrot.slane %v145, %v2167
    %v2169 = vadd.f32 %v2161, %v2168
    %v2170 = vadd.f32 %v2162, %v2168
    %v2171 = vadd.f32 %v2163, %v2168
    %v2172 = vadd.f32 %v2164, %v2168
    %v2173 = vld [vmem:[%s6] sm:$0xff]
    %v2174 = vld [vmem:[%s6 + $0x8] sm:$0xff]
    %v2175 = vld [vmem:[%s6 + $0x10] sm:$0xff]
    %v2176 = vld [vmem:[%s6 + $0x18] sm:$0xff]
    %v2177 = vld [vmem:[%s7] sm:$0x1]
    %v2179 = vlaneseq
    %v2180 = vshrl.u32 %v2179, 7
    %v2181 = vsub.s32 0, %v2180
    %v2182 = vrot.slane %v2177, %v2181
    %v2185 = vsel %vm146, %v2169, 0
    %v2188 = vsel %vm146, %v2170, 0
    %v2191 = vsel %vm146, %v2171, 0
    %v2194 = vsel %vm146, %v2172, 0
    %2196 = vmatprep.subr.mxu0 0.0
    %2197 = vmatpush1.msra.mxu0 %v2173
    %2198 = vmatprep.subr.mxu0 0.0
    %2199 = vmatpush1.msra.mxu0 %v2174
    %2200 = vmatprep.subr.mxu0 0.0
    %2201 = vmatpush1.msra.mxu0 %v2175
    %2202 = vmatprep.subr.mxu0 0.0
    %2203 = vmatpush1.msra.mxu0 %v2176
    %2204 = vmatprep.subr.mxu0 0.0
    %2205 = vmatpush1.msra.mxu0 0.0
    %2206 = vmatprep.subr.mxu0 0.0
    %2207 = vmatpush1.msra.mxu0 0.0
    %2208 = vmatprep.subr.mxu0 0.0
    %2209 = vmatpush1.msra.mxu0 0.0
    %2210 = vmatprep.subr.mxu0 0.0
    %2211 = vmatpush1.msra.mxu0 0.0
    %2212 = vmatprep.subr.mxu0 0.0
    %2213 = vmatpush1.msra.mxu0 0.0
    %2214 = vmatprep.subr.mxu0 0.0
    %2215 = vmatpush1.msra.mxu0 0.0
    %2216 = vmatprep.subr.mxu0 0.0
    %2217 = vmatpush1.msra.mxu0 0.0
    %2218 = vmatprep.subr.mxu0 0.0
    %2219 = vmatpush1.msra.mxu0 0.0
    %2220 = vmatprep.subr.mxu0 0.0
    %2221 = vmatpush1.msra.mxu0 0.0
    %2222 = vmatprep.subr.mxu0 0.0
    %2223 = vmatpush1.msra.mxu0 0.0
    %2224 = vmatprep.subr.mxu0 0.0
    %2225 = vmatpush1.msra.mxu0 0.0
    %2226 = vmatprep.subr.mxu0 0.0
    %2227 = vmatpush1.msra.mxu0 0.0
    %2228 = vmatprep.subr.mxu0 0.0
    %2229 = vmatpush1.msra.mxu0 0.0
    %2230 = vmatprep.subr.mxu0 0.0
    %2231 = vmatpush1.msra.mxu0 0.0
    %2232 = vmatprep.subr.mxu0 0.0
    %2233 = vmatpush1.msra.mxu0 0.0
    %2234 = vmatprep.subr.mxu0 0.0
    %2235 = vmatpush1.msra.mxu0 0.0
    %2236 = vmatprep.subr.mxu0 0.0
    %2237 = vmatpush1.msra.mxu0 0.0
    %2238 = vmatprep.subr.mxu0 0.0
    %2239 = vmatpush1.msra.mxu0 0.0
    %2240 = vmatprep.subr.mxu0 0.0
    %2241 = vmatpush1.msra.mxu0 0.0
    %2242 = vmatprep.subr.mxu0 0.0
    %2243 = vmatpush1.msra.mxu0 0.0
    %2244 = vmatprep.subr.mxu0 0.0
    %2245 = vmatpush1.msra.mxu0 0.0
    %2246 = vmatprep.subr.mxu0 0.0
    %2247 = vmatpush1.msra.mxu0 0.0
    %2248 = vmatprep.subr.mxu0 0.0
    %2249 = vmatpush1.msra.mxu0 0.0
    %2250 = vmatprep.subr.mxu0 0.0
    %2251 = vmatpush1.msra.mxu0 0.0
    %2252 = vmatprep.subr.mxu0 0.0
    %2253 = vmatpush1.msra.mxu0 0.0
    %2254 = vmatprep.subr.mxu0 0.0
    %2255 = vmatpush1.msra.mxu0 0.0
    %2256 = vmatprep.subr.mxu0 0.0
    %2257 = vmatpush1.msra.mxu0 0.0
    %2258 = vmatprep.subr.mxu0 0.0
    %2259 = vmatpush1.msra.mxu0 0.0
    %2260 = vmatprep.mubr.f32.mxu0 0.0
    %2261 = vmatmul.mubr.f32.gmra.mrb[0].mxu0 %v2185
    %v2262 = vpop.f32.mrb[0].mxu0
    %v2263 = vadd.f32 %v2182, %v2262
    %v2264 = vpop.f32.mrb[0].mxu0
    %2265 = vmatprep.mubr.f32.mxu0 0.0
    %2266 = vmatmul.mubr.f32.gmra.mrb[0].mxu0 %v2188
    %v2267 = vpop.f32.mrb[0].mxu0
    %v2268 = vadd.f32 %v2182, %v2267
    %v2269 = vpop.f32.mrb[0].mxu0
    %2270 = vmatprep.mubr.f32.mxu0 0.0
    %2271 = vmatmul.mubr.f32.gmra.mrb[0].mxu0 %v2191
    %v2272 = vpop.f32.mrb[0].mxu0
    %v2273 = vadd.f32 %v2182, %v2272
    %v2274 = vpop.f32.mrb[0].mxu0
    %2275 = vmatprep.mubr.f32.mxu0 0.0
    %2276 = vmatmul.mubr.f32.gmra.mrb[0].mxu0 %v2194
    %v2277 = vpop.f32.mrb[0].mxu0
    %v2278 = vadd.f32 %v2182, %v2277
    %v2279 = vpop.f32.mrb[0].mxu0
    %2280 = vdwg.mxu0
    %v2281 = vmul.f32 %v2263, 0.5
    %v2282 = vmul.f32 %v2268, 0.5
    %v2283 = vmul.f32 %v2273, 0.5
    %v2284 = vmul.f32 %v2278, 0.5
    %v2285 = vmul.f32 %v2263, 0.70710677
    %v2286 = vmul.f32 %v2268, 0.70710677
    %v2287 = vmul.f32 %v2273, 0.70710677
    %v2288 = vmul.f32 %v2278, 0.70710677
    %v2289 = verf.f32.pop %v2285
    %v2290 = verf.f32.pop %v2286
    %v2291 = verf.f32.pop %v2287
    %v2292 = verf.f32.pop %v2288
    %v2293 = vadd.f32 %v2289, 1.0
    %v2294 = vadd.f32 %v2290, 1.0
    %v2295 = vadd.f32 %v2291, 1.0
    %v2296 = vadd.f32 %v2292, 1.0
    %v2297 = vmul.f32 %v2281, %v2293
    %v2298 = vmul.f32 %v2282, %v2294
    %v2299 = vmul.f32 %v2283, %v2295
    %v2300 = vmul.f32 %v2284, %v2296
    %v2301 = vld [vmem:[%s8] sm:$0xff]
    %v2302 = vld [vmem:[%s8 + $0x8] sm:$0xff]
    %v2303 = vld [vmem:[%s8 + $0x10] sm:$0xff]
    %v2304 = vld [vmem:[%s8 + $0x18] sm:$0xff]
    %v2305 = vld [vmem:[%s8 + $0x20] sm:$0xff]
    %v2306 = vld [vmem:[%s8 + $0x28] sm:$0xff]
    %v2307 = vld [vmem:[%s8 + $0x30] sm:$0xff]
    %v2308 = vld [vmem:[%s8 + $0x38] sm:$0xff]
    %vm2309 = vcmask 523264
    %v2311 = vsel %vm2309, %v2297, 0
    %v2314 = vsel %vm2309, %v2298, 0
    %v2317 = vsel %vm2309, %v2299, 0
    %v2320 = vsel %vm2309, %v2300, 0
    %2322 = vmatprep.subr.mxu0 0.0
    %2323 = vmatpush1.msra.mxu0 %v2301
    %2324 = vmatprep.subr.mxu0 0.0
    %2325 = vmatpush1.msra.mxu0 %v2302
    %2326 = vmatprep.subr.mxu0 0.0
    %2327 = vmatpush1.msra.mxu0 %v2303
    %2328 = vmatprep.subr.mxu0 0.0
    %2329 = vmatpush1.msra.mxu0 %v2304
    %2330 = vmatprep.subr.mxu0 0.0
    %2331 = vmatpush1.msra.mxu0 %v2305
    %2332 = vmatprep.subr.mxu0 0.0
    %2333 = vmatpush1.msra.mxu0 %v2306
    %2334 = vmatprep.subr.mxu0 0.0
    %2335 = vmatpush1.msra.mxu0 %v2307
    %2336 = vmatprep.subr.mxu0 0.0
    %2337 = vmatpush1.msra.mxu0 %v2308
    %2338 = vmatprep.subr.mxu0 0.0
    %2339 = vmatpush1.msra.mxu0 0.0
    %2340 = vmatprep.subr.mxu0 0.0
    %2341 = vmatpush1.msra.mxu0 0.0
    %2342 = vmatprep.subr.mxu0 0.0
    %2343 = vmatpush1.msra.mxu0 0.0
    %2344 = vmatprep.subr.mxu0 0.0
    %2345 = vmatpush1.msra.mxu0 0.0
    %2346 = vmatprep.subr.mxu0 0.0
    %2347 = vmatpush1.msra.mxu0 0.0
    %2348 = vmatprep.subr.mxu0 0.0
    %2349 = vmatpush1.msra.mxu0 0.0
    %2350 = vmatprep.subr.mxu0 0.0
    %2351 = vmatpush1.msra.mxu0 0.0
    %2352 = vmatprep.subr.mxu0 0.0
    %2353 = vmatpush1.msra.mxu0 0.0
    %2354 = vmatprep.subr.mxu0 0.0
    %2355 = vmatpush1.msra.mxu0 0.0
    %2356 = vmatprep.subr.mxu0 0.0
    %2357 = vmatpush1.msra.mxu0 0.0
    %2358 = vmatprep.subr.mxu0 0.0
    %2359 = vmatpush1.msra.mxu0 0.0
    %2360 = vmatprep.subr.mxu0 0.0
    %2361 = vmatpush1.msra.mxu0 0.0
    %2362 = vmatprep.subr.mxu0 0.0
    %2363 = vmatpush1.msra.mxu0 0.0
    %2364 = vmatprep.subr.mxu0 0.0
    %2365 = vmatpush1.msra.mxu0 0.0
    %2366 = vmatprep.subr.mxu0 0.0
    %2367 = vmatpush1.msra.mxu0 0.0
    %2368 = vmatprep.subr.mxu0 0.0
    %2369 = vmatpush1.msra.mxu0 0.0
    %2370 = vmatprep.subr.mxu0 0.0
    %2371 = vmatpush1.msra.mxu0 0.0
    %2372 = vmatprep.subr.mxu0 0.0
    %2373 = vmatpush1.msra.mxu0 0.0
    %2374 = vmatprep.subr.mxu0 0.0
    %2375 = vmatpush1.msra.mxu0 0.0
    %2376 = vmatprep.subr.mxu0 0.0
    %2377 = vmatpush1.msra.mxu0 0.0
    %2378 = vmatprep.subr.mxu0 0.0
    %2379 = vmatpush1.msra.mxu0 0.0
    %2380 = vmatprep.subr.mxu0 0.0
    %2381 = vmatpush1.msra.mxu0 0.0
    %2382 = vmatprep.subr.mxu0 0.0
    %2383 = vmatpush1.msra.mxu0 0.0
    %2384 = vmatprep.subr.mxu0 0.0
    %2385 = vmatpush1.msra.mxu0 0.0
    %2386 = vmatprep.mubr.f32.mxu0 0.0
    %2387 = vmatmul.mubr.f32.gmra.mrb[0].mxu0 %v2311
    %v2388 = vpop.f32.mrb[0].mxu0
    %v2389 = vadd.f32 0.0, %v2388
    %v2390 = vpop.f32.mrb[0].mxu0
    %2391 = vmatprep.mubr.f32.mxu0 0.0
    %2392 = vmatmul.mubr.f32.gmra.mrb[0].mxu0 %v2314
    %v2393 = vpop.f32.mrb[0].mxu0
    %v2394 = vadd.f32 0.0, %v2393
    %v2395 = vpop.f32.mrb[0].mxu0
    %2396 = vmatprep.mubr.f32.mxu0 0.0
    %2397 = vmatmul.mubr.f32.gmra.mrb[0].mxu0 %v2317
    %v2398 = vpop.f32.mrb[0].mxu0
    %v2399 = vadd.f32 0.0, %v2398
    %v2400 = vpop.f32.mrb[0].mxu0
    %2401 = vmatprep.mubr.f32.mxu0 0.0
    %2402 = vmatmul.mubr.f32.gmra.mrb[0].mxu0 %v2320
    %v2403 = vpop.f32.mrb[0].mxu0
    %v2404 = vadd.f32 0.0, %v2403
    %v2405 = vpop.f32.mrb[0].mxu0
    %2406 = vdwg.mxu0
    %v2407 = vadd.f32 %v2101, %v2389
    %v2408 = vadd.f32 %v2102, %v2394
    %v2409 = vadd.f32 %v2103, %v2399
    %v2410 = vadd.f32 %v2104, %v2404
    %v2411 = vlaneseq
    %v2412 = vshrl.u32 %v2411, 7
    %v2413 = vsub.s32 5, %v2412
    %v2414 = vrot.slane %v145, %v2413
    %v2415 = vadd.f32 %v2407, %v2414
    %v2416 = vadd.f32 %v2408, %v2414
    %v2417 = vadd.f32 %v2409, %v2414
    %v2418 = vadd.f32 %v2410, %v2414
    %s2419 = scalar_lea.vmem %s5, 8
    %v2420 = vld [vmem:[%s2419] sm:$0x3f]
    %v2421 = vsel %vm146, %v2415, 0.0
    %2422 = vadd.xlane.f32.xlu0 %v2421
    %v2423 = vpop.xlane.xlu0 %2422
    %v2424 = vsel %vm146, %v2416, 0.0
    %2425 = vadd.xlane.f32.xlu0 %v2424
    %v2426 = vpop.xlane.xlu0 %2425
    %v2427 = vsel %vm146, %v2417, 0.0
    %2428 = vadd.xlane.f32.xlu0 %v2427
    %v2429 = vpop.xlane.xlu0 %2428
    %v2430 = vsel %vm146, %v2418, 0.0
    %2431 = vadd.xlane.f32.xlu0 %v2430
    %v2432 = vpop.xlane.xlu0 %2431
    %v2433 = vmul.f32 %v2423, %v159
    %v2434 = vmul.f32 %v2426, %v159
    %v2435 = vmul.f32 %v2429, %v159
    %v2436 = vmul.f32 %v2432, %v159
    %v2437 = vsub.f32 %v2415, %v2433
    %v2438 = vsub.f32 %v2416, %v2434
    %v2439 = vsub.f32 %v2417, %v2435
    %v2440 = vsub.f32 %v2418, %v2436
    %v2441 = vmul.f32 %v2437, %v2437
    %v2442 = vmul.f32 %v2438, %v2438
    %v2443 = vmul.f32 %v2439, %v2439
    %v2444 = vmul.f32 %v2440, %v2440
    %v2445 = vsel %vm146, %v2441, 0.0
    %2446 = vadd.xlane.f32.xlu0 %v2445
    %v2447 = vpop.xlane.xlu0 %2446
    %v2448 = vsel %vm146, %v2442, 0.0
    %2449 = vadd.xlane.f32.xlu0 %v2448
    %v2450 = vpop.xlane.xlu0 %2449
    %v2451 = vsel %vm146, %v2443, 0.0
    %2452 = vadd.xlane.f32.xlu0 %v2451
    %v2453 = vpop.xlane.xlu0 %2452
    %v2454 = vsel %vm146, %v2444, 0.0
    %2455 = vadd.xlane.f32.xlu0 %v2454
    %v2456 = vpop.xlane.xlu0 %2455
    %v2457 = vmul.f32 %v2447, %v159
    %v2458 = vmul.f32 %v2450, %v159
    %v2459 = vmul.f32 %v2453, %v159
    %v2460 = vmul.f32 %v2456, %v159
    %v2461 = vadd.f32 %v2457, 1e-05
    %v2462 = vadd.f32 %v2458, 1e-05
    %v2463 = vadd.f32 %v2459, 1e-05
    %v2464 = vadd.f32 %v2460, 1e-05
    %v2465 = vrsqrt.pop %v2461
    %v2466 = vrsqrt.pop %v2462
    %v2467 = vrsqrt.pop %v2463
    %v2468 = vrsqrt.pop %v2464
    %v2469 = vmul.f32 %v2437, %v2465
    %v2470 = vmul.f32 %v2438, %v2466
    %v2471 = vmul.f32 %v2439, %v2467
    %v2472 = vmul.f32 %v2440, %v2468
    %v2473 = vlaneseq
    %v2474 = vshrl.u32 %v2473, 7
    %v2475 = vsub.s32 0, %v2474
    %v2476 = vrot.slane %v2420, %v2475
    %v2477 = vmul.f32 %v2469, %v2476
    %v2478 = vmul.f32 %v2470, %v2476
    %v2479 = vmul.f32 %v2471, %v2476
    %v2480 = vmul.f32 %v2472, %v2476
    %v2481 = vlaneseq
    %v2482 = vshrl.u32 %v2481, 7
    %v2483 = vsub.s32 1, %v2482
    %v2484 = vrot.slane %v2420, %v2483
    %v2485 = vadd.f32 %v2477, %v2484
    %v2486 = vadd.f32 %v2478, %v2484
    %v2487 = vadd.f32 %v2479, %v2484
    %v2488 = vadd.f32 %v2480, %v2484
    %s2489 = scalar_lea.vmem %s3, 32
    %v2490 = vld [vmem:[%s2489] sm:$0xff]
    %v2491 = vld [vmem:[%s2489 + $0x8] sm:$0xff]
    %v2492 = vld [vmem:[%s2489 + $0x10] sm:$0xff]
    %v2493 = vld [vmem:[%s2489 + $0x18] sm:$0xff]
    %v2495 = vsel %vm146, %v2485, 0
    %v2498 = vsel %vm146, %v2486, 0
    %v2501 = vsel %vm146, %v2487, 0
    %v2504 = vsel %vm146, %v2488, 0
    %2506 = vmatprep.subr.mxu0 0.0
    %2507 = vmatpush1.msra.mxu0 %v2490
    %2508 = vmatprep.subr.mxu0 0.0
    %2509 = vmatpush1.msra.mxu0 %v2491
    %2510 = vmatprep.subr.mxu0 0.0
    %2511 = vmatpush1.msra.mxu0 %v2492
    %2512 = vmatprep.subr.mxu0 0.0
    %2513 = vmatpush1.msra.mxu0 %v2493
    %2514 = vmatprep.subr.mxu0 0.0
    %2515 = vmatpush1.msra.mxu0 0.0
    %2516 = vmatprep.subr.mxu0 0.0
    %2517 = vmatpush1.msra.mxu0 0.0
    %2518 = vmatprep.subr.mxu0 0.0
    %2519 = vmatpush1.msra.mxu0 0.0
    %2520 = vmatprep.subr.mxu0 0.0
    %2521 = vmatpush1.msra.mxu0 0.0
    %2522 = vmatprep.subr.mxu0 0.0
    %2523 = vmatpush1.msra.mxu0 0.0
    %2524 = vmatprep.subr.mxu0 0.0
    %2525 = vmatpush1.msra.mxu0 0.0
    %2526 = vmatprep.subr.mxu0 0.0
    %2527 = vmatpush1.msra.mxu0 0.0
    %2528 = vmatprep.subr.mxu0 0.0
    %2529 = vmatpush1.msra.mxu0 0.0
    %2530 = vmatprep.subr.mxu0 0.0
    %2531 = vmatpush1.msra.mxu0 0.0
    %2532 = vmatprep.subr.mxu0 0.0
    %2533 = vmatpush1.msra.mxu0 0.0
    %2534 = vmatprep.subr.mxu0 0.0
    %2535 = vmatpush1.msra.mxu0 0.0
    %2536 = vmatprep.subr.mxu0 0.0
    %2537 = vmatpush1.msra.mxu0 0.0
    %2538 = vmatprep.subr.mxu0 0.0
    %2539 = vmatpush1.msra.mxu0 0.0
    %2540 = vmatprep.subr.mxu0 0.0
    %2541 = vmatpush1.msra.mxu0 0.0
    %2542 = vmatprep.subr.mxu0 0.0
    %2543 = vmatpush1.msra.mxu0 0.0
    %2544 = vmatprep.subr.mxu0 0.0
    %2545 = vmatpush1.msra.mxu0 0.0
    %2546 = vmatprep.subr.mxu0 0.0
    %2547 = vmatpush1.msra.mxu0 0.0
    %2548 = vmatprep.subr.mxu0 0.0
    %2549 = vmatpush1.msra.mxu0 0.0
    %2550 = vmatprep.subr.mxu0 0.0
    %2551 = vmatpush1.msra.mxu0 0.0
    %2552 = vmatprep.subr.mxu0 0.0
    %2553 = vmatpush1.msra.mxu0 0.0
    %2554 = vmatprep.subr.mxu0 0.0
    %2555 = vmatpush1.msra.mxu0 0.0
    %2556 = vmatprep.subr.mxu0 0.0
    %2557 = vmatpush1.msra.mxu0 0.0
    %2558 = vmatprep.subr.mxu0 0.0
    %2559 = vmatpush1.msra.mxu0 0.0
    %2560 = vmatprep.subr.mxu0 0.0
    %2561 = vmatpush1.msra.mxu0 0.0
    %2562 = vmatprep.subr.mxu0 0.0
    %2563 = vmatpush1.msra.mxu0 0.0
    %2564 = vmatprep.subr.mxu0 0.0
    %2565 = vmatpush1.msra.mxu0 0.0
    %2566 = vmatprep.subr.mxu0 0.0
    %2567 = vmatpush1.msra.mxu0 0.0
    %2568 = vmatprep.subr.mxu0 0.0
    %2569 = vmatpush1.msra.mxu0 0.0
    %2570 = vmatprep.mubr.f32.mxu0 0.0
    %2571 = vmatmul.mubr.f32.gmra.mrb[0].mxu0 %v2495
    %v2572 = vpop.f32.mrb[0].mxu0
    %v2573 = vadd.f32 0.0, %v2572
    %v2574 = vpop.f32.mrb[0].mxu0
    %2575 = vmatprep.mubr.f32.mxu0 0.0
    %2576 = vmatmul.mubr.f32.gmra.mrb[0].mxu0 %v2498
    %v2577 = vpop.f32.mrb[0].mxu0
    %v2578 = vadd.f32 0.0, %v2577
    %v2579 = vpop.f32.mrb[0].mxu0
    %2580 = vmatprep.mubr.f32.mxu0 0.0
    %2581 = vmatmul.mubr.f32.gmra.mrb[0].mxu0 %v2501
    %v2582 = vpop.f32.mrb[0].mxu0
    %v2583 = vadd.f32 0.0, %v2582
    %v2584 = vpop.f32.mrb[0].mxu0
    %2585 = vmatprep.mubr.f32.mxu0 0.0
    %2586 = vmatmul.mubr.f32.gmra.mrb[0].mxu0 %v2504
    %v2587 = vpop.f32.mrb[0].mxu0
    %v2588 = vadd.f32 0.0, %v2587
    %v2589 = vpop.f32.mrb[0].mxu0
    %2590 = vdwg.mxu0
    %2593 = vrot.lane.b32.xlu0 %v2573, 96
    %v2594 = vpop.permute.xlu0 %2593
    %2595 = vrot.lane.b32.xlu0 %v2578, 96
    %v2596 = vpop.permute.xlu0 %2595
    %v2597 = vsel %vm323, %v2573, 0
    %v2599 = vsel %vm323, %v2578, 0
    %v2601 = vsel %vm323, %v2594, 0
    %v2603 = vsel %vm323, %v2596, 0
    %2605 = vmatprep.subr.mxu0 0.0
    %2606 = vmatpush1.xpose.msra.mxu0 %v2601
    %2607 = vmatprep.subr.mxu0 0.0
    %2608 = vmatpush1.xpose.msra.mxu0 %v2603
    %2609 = vmatprep.subr.mxu0 0.0
    %2610 = vmatpush1.xpose.msra.mxu0 0.0
    %2611 = vmatprep.subr.mxu0 0.0
    %2612 = vmatpush1.xpose.msra.mxu0 0.0
    %2613 = vmatprep.subr.mxu0 0.0
    %2614 = vmatpush1.xpose.msra.mxu0 0.0
    %2615 = vmatprep.subr.mxu0 0.0
    %2616 = vmatpush1.xpose.msra.mxu0 0.0
    %2617 = vmatprep.subr.mxu0 0.0
    %2618 = vmatpush1.xpose.msra.mxu0 0.0
    %2619 = vmatprep.subr.mxu0 0.0
    %2620 = vmatpush1.xpose.msra.mxu0 0.0
    %2621 = vmatprep.subr.mxu0 0.0
    %2622 = vmatpush1.xpose.msra.mxu0 0.0
    %2623 = vmatprep.subr.mxu0 0.0
    %2624 = vmatpush1.xpose.msra.mxu0 0.0
    %2625 = vmatprep.subr.mxu0 0.0
    %2626 = vmatpush1.xpose.msra.mxu0 0.0
    %2627 = vmatprep.subr.mxu0 0.0
    %2628 = vmatpush1.xpose.msra.mxu0 0.0
    %2629 = vmatprep.subr.mxu0 0.0
    %2630 = vmatpush1.xpose.msra.mxu0 0.0
    %2631 = vmatprep.subr.mxu0 0.0
    %2632 = vmatpush1.xpose.msra.mxu0 0.0
    %2633 = vmatprep.subr.mxu0 0.0
    %2634 = vmatpush1.xpose.msra.mxu0 0.0
    %2635 = vmatprep.subr.mxu0 0.0
    %2636 = vmatpush1.xpose.msra.mxu0 0.0
    %2637 = vmatprep.subr.mxu0 0.0
    %2638 = vmatpush1.xpose.msra.mxu0 0.0
    %2639 = vmatprep.subr.mxu0 0.0
    %2640 = vmatpush1.xpose.msra.mxu0 0.0
    %2641 = vmatprep.subr.mxu0 0.0
    %2642 = vmatpush1.xpose.msra.mxu0 0.0
    %2643 = vmatprep.subr.mxu0 0.0
    %2644 = vmatpush1.xpose.msra.mxu0 0.0
    %2645 = vmatprep.subr.mxu0 0.0
    %2646 = vmatpush1.xpose.msra.mxu0 0.0
    %2647 = vmatprep.subr.mxu0 0.0
    %2648 = vmatpush1.xpose.msra.mxu0 0.0
    %2649 = vmatprep.subr.mxu0 0.0
    %2650 = vmatpush1.xpose.msra.mxu0 0.0
    %2651 = vmatprep.subr.mxu0 0.0
    %2652 = vmatpush1.xpose.msra.mxu0 0.0
    %2653 = vmatprep.subr.mxu0 0.0
    %2654 = vmatpush1.xpose.msra.mxu0 0.0
    %2655 = vmatprep.subr.mxu0 0.0
    %2656 = vmatpush1.xpose.msra.mxu0 0.0
    %2657 = vmatprep.subr.mxu0 0.0
    %2658 = vmatpush1.xpose.msra.mxu0 0.0
    %2659 = vmatprep.subr.mxu0 0.0
    %2660 = vmatpush1.xpose.msra.mxu0 0.0
    %2661 = vmatprep.subr.mxu0 0.0
    %2662 = vmatpush1.xpose.msra.mxu0 0.0
    %2663 = vmatprep.subr.mxu0 0.0
    %2664 = vmatpush1.xpose.msra.mxu0 0.0
    %2665 = vmatprep.subr.mxu0 0.0
    %2666 = vmatpush1.xpose.msra.mxu0 0.0
    %2667 = vmatprep.subr.mxu0 0.0
    %2668 = vmatpush1.xpose.msra.mxu0 0.0
    %2669 = vmatprep.mubr.f32.mxu0 0.0
    %2670 = vmatmul.mubr.f32.gmra.mrb[0].mxu0 %v2597
    %v2671 = vpop.f32.mrb[0].mxu0
    %v2672 = vadd.f32 0.0, %v2671
    %v2673 = vpop.f32.mrb[0].mxu0
    %2674 = vmatprep.mubr.f32.mxu0 0.0
    %2675 = vmatmul.mubr.f32.gmra.mrb[0].mxu0 %v2599
    %v2676 = vpop.f32.mrb[0].mxu0
    %v2677 = vadd.f32 0.0, %v2676
    %v2678 = vpop.f32.mrb[0].mxu0
    %2679 = vdwg.mxu0
    %2682 = vrot.lane.b32.xlu0 %v2583, 96
    %v2683 = vpop.permute.xlu0 %2682
    %2684 = vrot.lane.b32.xlu0 %v2588, 96
    %v2685 = vpop.permute.xlu0 %2684
    %v2686 = vsel %vm323, %v2583, 0
    %v2688 = vsel %vm323, %v2588, 0
    %v2690 = vsel %vm323, %v2683, 0
    %v2692 = vsel %vm323, %v2685, 0
    %2694 = vmatprep.subr.mxu0 0.0
    %2695 = vmatpush1.xpose.msra.mxu0 %v2690
    %2696 = vmatprep.subr.mxu0 0.0
    %2697 = vmatpush1.xpose.msra.mxu0 %v2692
    %2698 = vmatprep.subr.mxu0 0.0
    %2699 = vmatpush1.xpose.msra.mxu0 0.0
    %2700 = vmatprep.subr.mxu0 0.0
    %2701 = vmatpush1.xpose.msra.mxu0 0.0
    %2702 = vmatprep.subr.mxu0 0.0
    %2703 = vmatpush1.xpose.msra.mxu0 0.0
    %2704 = vmatprep.subr.mxu0 0.0
    %2705 = vmatpush1.xpose.msra.mxu0 0.0
    %2706 = vmatprep.subr.mxu0 0.0
    %2707 = vmatpush1.xpose.msra.mxu0 0.0
    %2708 = vmatprep.subr.mxu0 0.0
    %2709 = vmatpush1.xpose.msra.mxu0 0.0
    %2710 = vmatprep.subr.mxu0 0.0
    %2711 = vmatpush1.xpose.msra.mxu0 0.0
    %2712 = vmatprep.subr.mxu0 0.0
    %2713 = vmatpush1.xpose.msra.mxu0 0.0
    %2714 = vmatprep.subr.mxu0 0.0
    %2715 = vmatpush1.xpose.msra.mxu0 0.0
    %2716 = vmatprep.subr.mxu0 0.0
    %2717 = vmatpush1.xpose.msra.mxu0 0.0
    %2718 = vmatprep.subr.mxu0 0.0
    %2719 = vmatpush1.xpose.msra.mxu0 0.0
    %2720 = vmatprep.subr.mxu0 0.0
    %2721 = vmatpush1.xpose.msra.mxu0 0.0
    %2722 = vmatprep.subr.mxu0 0.0
    %2723 = vmatpush1.xpose.msra.mxu0 0.0
    %2724 = vmatprep.subr.mxu0 0.0
    %2725 = vmatpush1.xpose.msra.mxu0 0.0
    %2726 = vmatprep.subr.mxu0 0.0
    %2727 = vmatpush1.xpose.msra.mxu0 0.0
    %2728 = vmatprep.subr.mxu0 0.0
    %2729 = vmatpush1.xpose.msra.mxu0 0.0
    %2730 = vmatprep.subr.mxu0 0.0
    %2731 = vmatpush1.xpose.msra.mxu0 0.0
    %2732 = vmatprep.subr.mxu0 0.0
    %2733 = vmatpush1.xpose.msra.mxu0 0.0
    %2734 = vmatprep.subr.mxu0 0.0
    %2735 = vmatpush1.xpose.msra.mxu0 0.0
    %2736 = vmatprep.subr.mxu0 0.0
    %2737 = vmatpush1.xpose.msra.mxu0 0.0
    %2738 = vmatprep.subr.mxu0 0.0
    %2739 = vmatpush1.xpose.msra.mxu0 0.0
    %2740 = vmatprep.subr.mxu0 0.0
    %2741 = vmatpush1.xpose.msra.mxu0 0.0
    %2742 = vmatprep.subr.mxu0 0.0
    %2743 = vmatpush1.xpose.msra.mxu0 0.0
    %2744 = vmatprep.subr.mxu0 0.0
    %2745 = vmatpush1.xpose.msra.mxu0 0.0
    %2746 = vmatprep.subr.mxu0 0.0
    %2747 = vmatpush1.xpose.msra.mxu0 0.0
    %2748 = vmatprep.subr.mxu0 0.0
    %2749 = vmatpush1.xpose.msra.mxu0 0.0
    %2750 = vmatprep.subr.mxu0 0.0
    %2751 = vmatpush1.xpose.msra.mxu0 0.0
    %2752 = vmatprep.subr.mxu0 0.0
    %2753 = vmatpush1.xpose.msra.mxu0 0.0
    %2754 = vmatprep.subr.mxu0 0.0
    %2755 = vmatpush1.xpose.msra.mxu0 0.0
    %2756 = vmatprep.subr.mxu0 0.0
    %2757 = vmatpush1.xpose.msra.mxu0 0.0
    %2758 = vmatprep.mubr.f32.mxu0 0.0
    %2759 = vmatmul.mubr.f32.gmra.mrb[0].mxu0 %v2686
    %v2760 = vpop.f32.mrb[0].mxu0
    %v2761 = vadd.f32 0.0, %v2760
    %v2762 = vpop.f32.mrb[0].mxu0
    %2763 = vmatprep.mubr.f32.mxu0 0.0
    %2764 = vmatmul.mubr.f32.gmra.mrb[0].mxu0 %v2688
    %v2765 = vpop.f32.mrb[0].mxu0
    %v2766 = vadd.f32 0.0, %v2765
    %v2767 = vpop.f32.mrb[0].mxu0
    %2768 = vdwg.mxu0
    %v2769 = vsel %vm496, %v2672, -inf
    %2770 = vmax.xlane.f32.xlu0 %v2769
    %v2771 = vpop.xlane.xlu0 %2770
    %v2772 = vsel %vm496, %v2677, -inf
    %2773 = vmax.xlane.f32.xlu0 %v2772
    %v2774 = vpop.xlane.xlu0 %2773
    %v2775 = vsel %vm496, %v2761, -inf
    %2776 = vmax.xlane.f32.xlu0 %v2775
    %v2777 = vpop.xlane.xlu0 %2776
    %v2778 = vsel %vm496, %v2766, -inf
    %2779 = vmax.xlane.f32.xlu0 %v2778
    %v2780 = vpop.xlane.xlu0 %2779
    %v2781 = vsub.f32 %v2672, %v2771
    %v2782 = vsub.f32 %v2677, %v2774
    %v2783 = vsub.f32 %v2761, %v2777
    %v2784 = vsub.f32 %v2766, %v2780
    %v2785 = vmul.f32 %v2781, 1.442695
    %v2786 = vpow.pop %v2785
    %v2787 = vmul.f32 %v2782, 1.442695
    %v2788 = vpow.pop %v2787
    %v2789 = vmul.f32 %v2783, 1.442695
    %v2790 = vpow.pop %v2789
    %v2791 = vmul.f32 %v2784, 1.442695
    %v2792 = vpow.pop %v2791
    %v2793 = vsel %vm496, %v2786, 0.0
    %2794 = vadd.xlane.f32.xlu0 %v2793
    %v2795 = vpop.xlane.xlu0 %2794
    %v2796 = vsel %vm496, %v2788, 0.0
    %2797 = vadd.xlane.f32.xlu0 %v2796
    %v2798 = vpop.xlane.xlu0 %2797
    %v2799 = vsel %vm496, %v2790, 0.0
    %2800 = vadd.xlane.f32.xlu0 %v2799
    %v2801 = vpop.xlane.xlu0 %2800
    %v2802 = vsel %vm496, %v2792, 0.0
    %2803 = vadd.xlane.f32.xlu0 %v2802
    %v2804 = vpop.xlane.xlu0 %2803
    %v2805 = vrcp.pop %v2795
    %v2806 = vmul.f32 1.0, %v2805
    %v2807 = vrcp.pop %v2798
    %v2808 = vmul.f32 1.0, %v2807
    %v2809 = vrcp.pop %v2801
    %v2810 = vmul.f32 1.0, %v2809
    %v2811 = vrcp.pop %v2804
    %v2812 = vmul.f32 1.0, %v2811
    %v2813 = vmul.f32 %v2786, %v2806
    %v2814 = vmul.f32 %v2788, %v2808
    %v2815 = vmul.f32 %v2790, %v2810
    %v2816 = vmul.f32 %v2792, %v2812
    %2817 = vrot.lane.b32.xlu0 %v2573, 64
    %v2818 = vpop.permute.xlu0 %2817
    %2819 = vrot.lane.b32.xlu0 %v2578, 64
    %v2820 = vpop.permute.xlu0 %2819
    %v2824 = vsel %vm496, %v2813, 0
    %v2827 = vsel %vm496, %v2814, 0
    %2829 = vmatprep.subr.mxu0 0.0
    %2830 = vmatpush1.msra.mxu0 %v2818
    %2831 = vmatprep.subr.mxu0 0.0
    %2832 = vmatpush1.msra.mxu0 %v2820
    %2833 = vmatprep.subr.mxu0 0.0
    %2834 = vmatpush1.msra.mxu0 0.0
    %2835 = vmatprep.subr.mxu0 0.0
    %2836 = vmatpush1.msra.mxu0 0.0
    %2837 = vmatprep.subr.mxu0 0.0
    %2838 = vmatpush1.msra.mxu0 0.0
    %2839 = vmatprep.subr.mxu0 0.0
    %2840 = vmatpush1.msra.mxu0 0.0
    %2841 = vmatprep.subr.mxu0 0.0
    %2842 = vmatpush1.msra.mxu0 0.0
    %2843 = vmatprep.subr.mxu0 0.0
    %2844 = vmatpush1.msra.mxu0 0.0
    %2845 = vmatprep.subr.mxu0 0.0
    %2846 = vmatpush1.msra.mxu0 0.0
    %2847 = vmatprep.subr.mxu0 0.0
    %2848 = vmatpush1.msra.mxu0 0.0
    %2849 = vmatprep.subr.mxu0 0.0
    %2850 = vmatpush1.msra.mxu0 0.0
    %2851 = vmatprep.subr.mxu0 0.0
    %2852 = vmatpush1.msra.mxu0 0.0
    %2853 = vmatprep.subr.mxu0 0.0
    %2854 = vmatpush1.msra.mxu0 0.0
    %2855 = vmatprep.subr.mxu0 0.0
    %2856 = vmatpush1.msra.mxu0 0.0
    %2857 = vmatprep.subr.mxu0 0.0
    %2858 = vmatpush1.msra.mxu0 0.0
    %2859 = vmatprep.subr.mxu0 0.0
    %2860 = vmatpush1.msra.mxu0 0.0
    %2861 = vmatprep.subr.mxu0 0.0
    %2862 = vmatpush1.msra.mxu0 0.0
    %2863 = vmatprep.subr.mxu0 0.0
    %2864 = vmatpush1.msra.mxu0 0.0
    %2865 = vmatprep.subr.mxu0 0.0
    %2866 = vmatpush1.msra.mxu0 0.0
    %2867 = vmatprep.subr.mxu0 0.0
    %2868 = vmatpush1.msra.mxu0 0.0
    %2869 = vmatprep.subr.mxu0 0.0
    %2870 = vmatpush1.msra.mxu0 0.0
    %2871 = vmatprep.subr.mxu0 0.0
    %2872 = vmatpush1.msra.mxu0 0.0
    %2873 = vmatprep.subr.mxu0 0.0
    %2874 = vmatpush1.msra.mxu0 0.0
    %2875 = vmatprep.subr.mxu0 0.0
    %2876 = vmatpush1.msra.mxu0 0.0
    %2877 = vmatprep.subr.mxu0 0.0
    %2878 = vmatpush1.msra.mxu0 0.0
    %2879 = vmatprep.subr.mxu0 0.0
    %2880 = vmatpush1.msra.mxu0 0.0
    %2881 = vmatprep.subr.mxu0 0.0
    %2882 = vmatpush1.msra.mxu0 0.0
    %2883 = vmatprep.subr.mxu0 0.0
    %2884 = vmatpush1.msra.mxu0 0.0
    %2885 = vmatprep.subr.mxu0 0.0
    %2886 = vmatpush1.msra.mxu0 0.0
    %2887 = vmatprep.subr.mxu0 0.0
    %2888 = vmatpush1.msra.mxu0 0.0
    %2889 = vmatprep.subr.mxu0 0.0
    %2890 = vmatpush1.msra.mxu0 0.0
    %2891 = vmatprep.subr.mxu0 0.0
    %2892 = vmatpush1.msra.mxu0 0.0
    %2893 = vmatprep.mubr.f32.mxu0 0.0
    %2894 = vmatmul.mubr.f32.gmra.mrb[0].mxu0 %v2824
    %v2895 = vpop.f32.mrb[0].mxu0
    %v2896 = vadd.f32 0.0, %v2895
    %v2897 = vpop.f32.mrb[0].mxu0
    %2898 = vmatprep.mubr.f32.mxu0 0.0
    %2899 = vmatmul.mubr.f32.gmra.mrb[0].mxu0 %v2827
    %v2900 = vpop.f32.mrb[0].mxu0
    %v2901 = vadd.f32 0.0, %v2900
    %v2902 = vpop.f32.mrb[0].mxu0
    %2903 = vdwg.mxu0
    %2904 = vrot.lane.b32.xlu0 %v2583, 64
    %v2905 = vpop.permute.xlu0 %2904
    %2906 = vrot.lane.b32.xlu0 %v2588, 64
    %v2907 = vpop.permute.xlu0 %2906
    %v2911 = vsel %vm496, %v2815, 0
    %v2914 = vsel %vm496, %v2816, 0
    %2916 = vmatprep.subr.mxu0 0.0
    %2917 = vmatpush1.msra.mxu0 %v2905
    %2918 = vmatprep.subr.mxu0 0.0
    %2919 = vmatpush1.msra.mxu0 %v2907
    %2920 = vmatprep.subr.mxu0 0.0
    %2921 = vmatpush1.msra.mxu0 0.0
    %2922 = vmatprep.subr.mxu0 0.0
    %2923 = vmatpush1.msra.mxu0 0.0
    %2924 = vmatprep.subr.mxu0 0.0
    %2925 = vmatpush1.msra.mxu0 0.0
    %2926 = vmatprep.subr.mxu0 0.0
    %2927 = vmatpush1.msra.mxu0 0.0
    %2928 = vmatprep.subr.mxu0 0.0
    %2929 = vmatpush1.msra.mxu0 0.0
    %2930 = vmatprep.subr.mxu0 0.0
    %2931 = vmatpush1.msra.mxu0 0.0
    %2932 = vmatprep.subr.mxu0 0.0
    %2933 = vmatpush1.msra.mxu0 0.0
    %2934 = vmatprep.subr.mxu0 0.0
    %2935 = vmatpush1.msra.mxu0 0.0
    %2936 = vmatprep.subr.mxu0 0.0
    %2937 = vmatpush1.msra.mxu0 0.0
    %2938 = vmatprep.subr.mxu0 0.0
    %2939 = vmatpush1.msra.mxu0 0.0
    %2940 = vmatprep.subr.mxu0 0.0
    %2941 = vmatpush1.msra.mxu0 0.0
    %2942 = vmatprep.subr.mxu0 0.0
    %2943 = vmatpush1.msra.mxu0 0.0
    %2944 = vmatprep.subr.mxu0 0.0
    %2945 = vmatpush1.msra.mxu0 0.0
    %2946 = vmatprep.subr.mxu0 0.0
    %2947 = vmatpush1.msra.mxu0 0.0
    %2948 = vmatprep.subr.mxu0 0.0
    %2949 = vmatpush1.msra.mxu0 0.0
    %2950 = vmatprep.subr.mxu0 0.0
    %2951 = vmatpush1.msra.mxu0 0.0
    %2952 = vmatprep.subr.mxu0 0.0
    %2953 = vmatpush1.msra.mxu0 0.0
    %2954 = vmatprep.subr.mxu0 0.0
    %2955 = vmatpush1.msra.mxu0 0.0
    %2956 = vmatprep.subr.mxu0 0.0
    %2957 = vmatpush1.msra.mxu0 0.0
    %2958 = vmatprep.subr.mxu0 0.0
    %2959 = vmatpush1.msra.mxu0 0.0
    %2960 = vmatprep.subr.mxu0 0.0
    %2961 = vmatpush1.msra.mxu0 0.0
    %2962 = vmatprep.subr.mxu0 0.0
    %2963 = vmatpush1.msra.mxu0 0.0
    %2964 = vmatprep.subr.mxu0 0.0
    %2965 = vmatpush1.msra.mxu0 0.0
    %2966 = vmatprep.subr.mxu0 0.0
    %2967 = vmatpush1.msra.mxu0 0.0
    %2968 = vmatprep.subr.mxu0 0.0
    %2969 = vmatpush1.msra.mxu0 0.0
    %2970 = vmatprep.subr.mxu0 0.0
    %2971 = vmatpush1.msra.mxu0 0.0
    %2972 = vmatprep.subr.mxu0 0.0
    %2973 = vmatpush1.msra.mxu0 0.0
    %2974 = vmatprep.subr.mxu0 0.0
    %2975 = vmatpush1.msra.mxu0 0.0
    %2976 = vmatprep.subr.mxu0 0.0
    %2977 = vmatpush1.msra.mxu0 0.0
    %2978 = vmatprep.subr.mxu0 0.0
    %2979 = vmatpush1.msra.mxu0 0.0
    %2980 = vmatprep.mubr.f32.mxu0 0.0
    %2981 = vmatmul.mubr.f32.gmra.mrb[0].mxu0 %v2911
    %v2982 = vpop.f32.mrb[0].mxu0
    %v2983 = vadd.f32 0.0, %v2982
    %v2984 = vpop.f32.mrb[0].mxu0
    %2985 = vmatprep.mubr.f32.mxu0 0.0
    %2986 = vmatmul.mubr.f32.gmra.mrb[0].mxu0 %v2914
    %v2987 = vpop.f32.mrb[0].mxu0
    %v2988 = vadd.f32 0.0, %v2987
    %v2989 = vpop.f32.mrb[0].mxu0
    %2990 = vdwg.mxu0
    %2991 = vrot.lane.b32.xlu0 %v2573, 120
    %v2992 = vpop.permute.xlu0 %2991
    %2993 = vrot.lane.b32.xlu0 %v2578, 120
    %v2994 = vpop.permute.xlu0 %2993
    %2995 = vrot.lane.b32.xlu0 %v2573, 88
    %v2996 = vpop.permute.xlu0 %2995
    %2997 = vrot.lane.b32.xlu0 %v2578, 88
    %v2998 = vpop.permute.xlu0 %2997
    %v2999 = vsel %vm323, %v2992, 0
    %v3001 = vsel %vm323, %v2994, 0
    %v3003 = vsel %vm323, %v2996, 0
    %v3005 = vsel %vm323, %v2998, 0
    %3007 = vmatprep.subr.mxu0 0.0
    %3008 = vmatpush1.xpose.msra.mxu0 %v3003
    %3009 = vmatprep.subr.mxu0 0.0
    %3010 = vmatpush1.xpose.msra.mxu0 %v3005
    %3011 = vmatprep.subr.mxu0 0.0
    %3012 = vmatpush1.xpose.msra.mxu0 0.0
    %3013 = vmatprep.subr.mxu0 0.0
    %3014 = vmatpush1.xpose.msra.mxu0 0.0
    %3015 = vmatprep.subr.mxu0 0.0
    %3016 = vmatpush1.xpose.msra.mxu0 0.0
    %3017 = vmatprep.subr.mxu0 0.0
    %3018 = vmatpush1.xpose.msra.mxu0 0.0
    %3019 = vmatprep.subr.mxu0 0.0
    %3020 = vmatpush1.xpose.msra.mxu0 0.0
    %3021 = vmatprep.subr.mxu0 0.0
    %3022 = vmatpush1.xpose.msra.mxu0 0.0
    %3023 = vmatprep.subr.mxu0 0.0
    %3024 = vmatpush1.xpose.msra.mxu0 0.0
    %3025 = vmatprep.subr.mxu0 0.0
    %3026 = vmatpush1.xpose.msra.mxu0 0.0
    %3027 = vmatprep.subr.mxu0 0.0
    %3028 = vmatpush1.xpose.msra.mxu0 0.0
    %3029 = vmatprep.subr.mxu0 0.0
    %3030 = vmatpush1.xpose.msra.mxu0 0.0
    %3031 = vmatprep.subr.mxu0 0.0
    %3032 = vmatpush1.xpose.msra.mxu0 0.0
    %3033 = vmatprep.subr.mxu0 0.0
    %3034 = vmatpush1.xpose.msra.mxu0 0.0
    %3035 = vmatprep.subr.mxu0 0.0
    %3036 = vmatpush1.xpose.msra.mxu0 0.0
    %3037 = vmatprep.subr.mxu0 0.0
    %3038 = vmatpush1.xpose.msra.mxu0 0.0
    %3039 = vmatprep.subr.mxu0 0.0
    %3040 = vmatpush1.xpose.msra.mxu0 0.0
    %3041 = vmatprep.subr.mxu0 0.0
    %3042 = vmatpush1.xpose.msra.mxu0 0.0
    %3043 = vmatprep.subr.mxu0 0.0
    %3044 = vmatpush1.xpose.msra.mxu0 0.0
    %3045 = vmatprep.subr.mxu0 0.0
    %3046 = vmatpush1.xpose.msra.mxu0 0.0
    %3047 = vmatprep.subr.mxu0 0.0
    %3048 = vmatpush1.xpose.msra.mxu0 0.0
    %3049 = vmatprep.subr.mxu0 0.0
    %3050 = vmatpush1.xpose.msra.mxu0 0.0
    %3051 = vmatprep.subr.mxu0 0.0
    %3052 = vmatpush1.xpose.msra.mxu0 0.0
    %3053 = vmatprep.subr.mxu0 0.0
    %3054 = vmatpush1.xpose.msra.mxu0 0.0
    %3055 = vmatprep.subr.mxu0 0.0
    %3056 = vmatpush1.xpose.msra.mxu0 0.0
    %3057 = vmatprep.subr.mxu0 0.0
    %3058 = vmatpush1.xpose.msra.mxu0 0.0
    %3059 = vmatprep.subr.mxu0 0.0
    %3060 = vmatpush1.xpose.msra.mxu0 0.0
    %3061 = vmatprep.subr.mxu0 0.0
    %3062 = vmatpush1.xpose.msra.mxu0 0.0
    %3063 = vmatprep.subr.mxu0 0.0
    %3064 = vmatpush1.xpose.msra.mxu0 0.0
    %3065 = vmatprep.subr.mxu0 0.0
    %3066 = vmatpush1.xpose.msra.mxu0 0.0
    %3067 = vmatprep.subr.mxu0 0.0
    %3068 = vmatpush1.xpose.msra.mxu0 0.0
    %3069 = vmatprep.subr.mxu0 0.0
    %3070 = vmatpush1.xpose.msra.mxu0 0.0
    %3071 = vmatprep.mubr.f32.mxu0 0.0
    %3072 = vmatmul.mubr.f32.gmra.mrb[0].mxu0 %v2999
    %v3073 = vpop.f32.mrb[0].mxu0
    %v3074 = vadd.f32 0.0, %v3073
    %v3075 = vpop.f32.mrb[0].mxu0
    %3076 = vmatprep.mubr.f32.mxu0 0.0
    %3077 = vmatmul.mubr.f32.gmra.mrb[0].mxu0 %v3001
    %v3078 = vpop.f32.mrb[0].mxu0
    %v3079 = vadd.f32 0.0, %v3078
    %v3080 = vpop.f32.mrb[0].mxu0
    %3081 = vdwg.mxu0
    %3082 = vrot.lane.b32.xlu0 %v2583, 120
    %v3083 = vpop.permute.xlu0 %3082
    %3084 = vrot.lane.b32.xlu0 %v2588, 120
    %v3085 = vpop.permute.xlu0 %3084
    %3086 = vrot.lane.b32.xlu0 %v2583, 88
    %v3087 = vpop.permute.xlu0 %3086
    %3088 = vrot.lane.b32.xlu0 %v2588, 88
    %v3089 = vpop.permute.xlu0 %3088
    %v3090 = vsel %vm323, %v3083, 0
    %v3092 = vsel %vm323, %v3085, 0
    %v3094 = vsel %vm323, %v3087, 0
    %v3096 = vsel %vm323, %v3089, 0
    %3098 = vmatprep.subr.mxu0 0.0
    %3099 = vmatpush1.xpose.msra.mxu0 %v3094
    %3100 = vmatprep.subr.mxu0 0.0
    %3101 = vmatpush1.xpose.msra.mxu0 %v3096
    %3102 = vmatprep.subr.mxu0 0.0
    %3103 = vmatpush1.xpose.msra.mxu0 0.0
    %3104 = vmatprep.subr.mxu0 0.0
    %3105 = vmatpush1.xpose.msra.mxu0 0.0
    %3106 = vmatprep.subr.mxu0 0.0
    %3107 = vmatpush1.xpose.msra.mxu0 0.0
    %3108 = vmatprep.subr.mxu0 0.0
    %3109 = vmatpush1.xpose.msra.mxu0 0.0
    %3110 = vmatprep.subr.mxu0 0.0
    %3111 = vmatpush1.xpose.msra.mxu0 0.0
    %3112 = vmatprep.subr.mxu0 0.0
    %3113 = vmatpush1.xpose.msra.mxu0 0.0
    %3114 = vmatprep.subr.mxu0 0.0
    %3115 = vmatpush1.xpose.msra.mxu0 0.0
    %3116 = vmatprep.subr.mxu0 0.0
    %3117 = vmatpush1.xpose.msra.mxu0 0.0
    %3118 = vmatprep.subr.mxu0 0.0
    %3119 = vmatpush1.xpose.msra.mxu0 0.0
    %3120 = vmatprep.subr.mxu0 0.0
    %3121 = vmatpush1.xpose.msra.mxu0 0.0
    %3122 = vmatprep.subr.mxu0 0.0
    %3123 = vmatpush1.xpose.msra.mxu0 0.0
    %3124 = vmatprep.subr.mxu0 0.0
    %3125 = vmatpush1.xpose.msra.mxu0 0.0
    %3126 = vmatprep.subr.mxu0 0.0
    %3127 = vmatpush1.xpose.msra.mxu0 0.0
    %3128 = vmatprep.subr.mxu0 0.0
    %3129 = vmatpush1.xpose.msra.mxu0 0.0
    %3130 = vmatprep.subr.mxu0 0.0
    %3131 = vmatpush1.xpose.msra.mxu0 0.0
    %3132 = vmatprep.subr.mxu0 0.0
    %3133 = vmatpush1.xpose.msra.mxu0 0.0
    %3134 = vmatprep.subr.mxu0 0.0
    %3135 = vmatpush1.xpose.msra.mxu0 0.0
    %3136 = vmatprep.subr.mxu0 0.0
    %3137 = vmatpush1.xpose.msra.mxu0 0.0
    %3138 = vmatprep.subr.mxu0 0.0
    %3139 = vmatpush1.xpose.msra.mxu0 0.0
    %3140 = vmatprep.subr.mxu0 0.0
    %3141 = vmatpush1.xpose.msra.mxu0 0.0
    %3142 = vmatprep.subr.mxu0 0.0
    %3143 = vmatpush1.xpose.msra.mxu0 0.0
    %3144 = vmatprep.subr.mxu0 0.0
    %3145 = vmatpush1.xpose.msra.mxu0 0.0
    %3146 = vmatprep.subr.mxu0 0.0
    %3147 = vmatpush1.xpose.msra.mxu0 0.0
    %3148 = vmatprep.subr.mxu0 0.0
    %3149 = vmatpush1.xpose.msra.mxu0 0.0
    %3150 = vmatprep.subr.mxu0 0.0
    %3151 = vmatpush1.xpose.msra.mxu0 0.0
    %3152 = vmatprep.subr.mxu0 0.0
    %3153 = vmatpush1.xpose.msra.mxu0 0.0
    %3154 = vmatprep.subr.mxu0 0.0
    %3155 = vmatpush1.xpose.msra.mxu0 0.0
    %3156 = vmatprep.subr.mxu0 0.0
    %3157 = vmatpush1.xpose.msra.mxu0 0.0
    %3158 = vmatprep.subr.mxu0 0.0
    %3159 = vmatpush1.xpose.msra.mxu0 0.0
    %3160 = vmatprep.subr.mxu0 0.0
    %3161 = vmatpush1.xpose.msra.mxu0 0.0
    %3162 = vmatprep.mubr.f32.mxu0 0.0
    %3163 = vmatmul.mubr.f32.gmra.mrb[0].mxu0 %v3090
    %v3164 = vpop.f32.mrb[0].mxu0
    %v3165 = vadd.f32 0.0, %v3164
    %v3166 = vpop.f32.mrb[0].mxu0
    %3167 = vmatprep.mubr.f32.mxu0 0.0
    %3168 = vmatmul.mubr.f32.gmra.mrb[0].mxu0 %v3092
    %v3169 = vpop.f32.mrb[0].mxu0
    %v3170 = vadd.f32 0.0, %v3169
    %v3171 = vpop.f32.mrb[0].mxu0
    %3172 = vdwg.mxu0
    %v3173 = vsel %vm496, %v3074, -inf
    %3174 = vmax.xlane.f32.xlu0 %v3173
    %v3175 = vpop.xlane.xlu0 %3174
    %v3176 = vsel %vm496, %v3079, -inf
    %3177 = vmax.xlane.f32.xlu0 %v3176
    %v3178 = vpop.xlane.xlu0 %3177
    %v3179 = vsel %vm496, %v3165, -inf
    %3180 = vmax.xlane.f32.xlu0 %v3179
    %v3181 = vpop.xlane.xlu0 %3180
    %v3182 = vsel %vm496, %v3170, -inf
    %3183 = vmax.xlane.f32.xlu0 %v3182
    %v3184 = vpop.xlane.xlu0 %3183
    %v3185 = vsub.f32 %v3074, %v3175
    %v3186 = vsub.f32 %v3079, %v3178
    %v3187 = vsub.f32 %v3165, %v3181
    %v3188 = vsub.f32 %v3170, %v3184
    %v3189 = vmul.f32 %v3185, 1.442695
    %v3190 = vpow.pop %v3189
    %v3191 = vmul.f32 %v3186, 1.442695
    %v3192 = vpow.pop %v3191
    %v3193 = vmul.f32 %v3187, 1.442695
    %v3194 = vpow.pop %v3193
    %v3195 = vmul.f32 %v3188, 1.442695
    %v3196 = vpow.pop %v3195
    %v3197 = vsel %vm496, %v3190, 0.0
    %3198 = vadd.xlane.f32.xlu0 %v3197
    %v3199 = vpop.xlane.xlu0 %3198
    %v3200 = vsel %vm496, %v3192, 0.0
    %3201 = vadd.xlane.f32.xlu0 %v3200
    %v3202 = vpop.xlane.xlu0 %3201
    %v3203 = vsel %vm496, %v3194, 0.0
    %3204 = vadd.xlane.f32.xlu0 %v3203
    %v3205 = vpop.xlane.xlu0 %3204
    %v3206 = vsel %vm496, %v3196, 0.0
    %3207 = vadd.xlane.f32.xlu0 %v3206
    %v3208 = vpop.xlane.xlu0 %3207
    %v3209 = vrcp.pop %v3199
    %v3210 = vmul.f32 1.0, %v3209
    %v3211 = vrcp.pop %v3202
    %v3212 = vmul.f32 1.0, %v3211
    %v3213 = vrcp.pop %v3205
    %v3214 = vmul.f32 1.0, %v3213
    %v3215 = vrcp.pop %v3208
    %v3216 = vmul.f32 1.0, %v3215
    %v3217 = vmul.f32 %v3190, %v3210
    %v3218 = vmul.f32 %v3192, %v3212
    %v3219 = vmul.f32 %v3194, %v3214
    %v3220 = vmul.f32 %v3196, %v3216
    %3221 = vrot.lane.b32.xlu0 %v2573, 56
    %v3222 = vpop.permute.xlu0 %3221
    %3223 = vrot.lane.b32.xlu0 %v2578, 56
    %v3224 = vpop.permute.xlu0 %3223
    %v3228 = vsel %vm496, %v3217, 0
    %v3231 = vsel %vm496, %v3218, 0
    %3233 = vmatprep.subr.mxu0 0.0
    %3234 = vmatpush1.msra.mxu0 %v3222
    %3235 = vmatprep.subr.mxu0 0.0
    %3236 = vmatpush1.msra.mxu0 %v3224
    %3237 = vmatprep.subr.mxu0 0.0
    %3238 = vmatpush1.msra.mxu0 0.0
    %3239 = vmatprep.subr.mxu0 0.0
    %3240 = vmatpush1.msra.mxu0 0.0
    %3241 = vmatprep.subr.mxu0 0.0
    %3242 = vmatpush1.msra.mxu0 0.0
    %3243 = vmatprep.subr.mxu0 0.0
    %3244 = vmatpush1.msra.mxu0 0.0
    %3245 = vmatprep.subr.mxu0 0.0
    %3246 = vmatpush1.msra.mxu0 0.0
    %3247 = vmatprep.subr.mxu0 0.0
    %3248 = vmatpush1.msra.mxu0 0.0
    %3249 = vmatprep.subr.mxu0 0.0
    %3250 = vmatpush1.msra.mxu0 0.0
    %3251 = vmatprep.subr.mxu0 0.0
    %3252 = vmatpush1.msra.mxu0 0.0
    %3253 = vmatprep.subr.mxu0 0.0
    %3254 = vmatpush1.msra.mxu0 0.0
    %3255 = vmatprep.subr.mxu0 0.0
    %3256 = vmatpush1.msra.mxu0 0.0
    %3257 = vmatprep.subr.mxu0 0.0
    %3258 = vmatpush1.msra.mxu0 0.0
    %3259 = vmatprep.subr.mxu0 0.0
    %3260 = vmatpush1.msra.mxu0 0.0
    %3261 = vmatprep.subr.mxu0 0.0
    %3262 = vmatpush1.msra.mxu0 0.0
    %3263 = vmatprep.subr.mxu0 0.0
    %3264 = vmatpush1.msra.mxu0 0.0
    %3265 = vmatprep.subr.mxu0 0.0
    %3266 = vmatpush1.msra.mxu0 0.0
    %3267 = vmatprep.subr.mxu0 0.0
    %3268 = vmatpush1.msra.mxu0 0.0
    %3269 = vmatprep.subr.mxu0 0.0
    %3270 = vmatpush1.msra.mxu0 0.0
    %3271 = vmatprep.subr.mxu0 0.0
    %3272 = vmatpush1.msra.mxu0 0.0
    %3273 = vmatprep.subr.mxu0 0.0
    %3274 = vmatpush1.msra.mxu0 0.0
    %3275 = vmatprep.subr.mxu0 0.0
    %3276 = vmatpush1.msra.mxu0 0.0
    %3277 = vmatprep.subr.mxu0 0.0
    %3278 = vmatpush1.msra.mxu0 0.0
    %3279 = vmatprep.subr.mxu0 0.0
    %3280 = vmatpush1.msra.mxu0 0.0
    %3281 = vmatprep.subr.mxu0 0.0
    %3282 = vmatpush1.msra.mxu0 0.0
    %3283 = vmatprep.subr.mxu0 0.0
    %3284 = vmatpush1.msra.mxu0 0.0
    %3285 = vmatprep.subr.mxu0 0.0
    %3286 = vmatpush1.msra.mxu0 0.0
    %3287 = vmatprep.subr.mxu0 0.0
    %3288 = vmatpush1.msra.mxu0 0.0
    %3289 = vmatprep.subr.mxu0 0.0
    %3290 = vmatpush1.msra.mxu0 0.0
    %3291 = vmatprep.subr.mxu0 0.0
    %3292 = vmatpush1.msra.mxu0 0.0
    %3293 = vmatprep.subr.mxu0 0.0
    %3294 = vmatpush1.msra.mxu0 0.0
    %3295 = vmatprep.subr.mxu0 0.0
    %3296 = vmatpush1.msra.mxu0 0.0
    %3297 = vmatprep.mubr.f32.mxu0 0.0
    %3298 = vmatmul.mubr.f32.gmra.mrb[0].mxu0 %v3228
    %v3299 = vpop.f32.mrb[0].mxu0
    %v3300 = vadd.f32 0.0, %v3299
    %v3301 = vpop.f32.mrb[0].mxu0
    %3302 = vmatprep.mubr.f32.mxu0 0.0
    %3303 = vmatmul.mubr.f32.gmra.mrb[0].mxu0 %v3231
    %v3304 = vpop.f32.mrb[0].mxu0
    %v3305 = vadd.f32 0.0, %v3304
    %v3306 = vpop.f32.mrb[0].mxu0
    %3307 = vdwg.mxu0
    %3308 = vrot.lane.b32.xlu0 %v2583, 56
    %v3309 = vpop.permute.xlu0 %3308
    %3310 = vrot.lane.b32.xlu0 %v2588, 56
    %v3311 = vpop.permute.xlu0 %3310
    %v3315 = vsel %vm496, %v3219, 0
    %v3318 = vsel %vm496, %v3220, 0
    %3320 = vmatprep.subr.mxu0 0.0
    %3321 = vmatpush1.msra.mxu0 %v3309
    %3322 = vmatprep.subr.mxu0 0.0
    %3323 = vmatpush1.msra.mxu0 %v3311
    %3324 = vmatprep.subr.mxu0 0.0
    %3325 = vmatpush1.msra.mxu0 0.0
    %3326 = vmatprep.subr.mxu0 0.0
    %3327 = vmatpush1.msra.mxu0 0.0
    %3328 = vmatprep.subr.mxu0 0.0
    %3329 = vmatpush1.msra.mxu0 0.0
    %3330 = vmatprep.subr.mxu0 0.0
    %3331 = vmatpush1.msra.mxu0 0.0
    %3332 = vmatprep.subr.mxu0 0.0
    %3333 = vmatpush1.msra.mxu0 0.0
    %3334 = vmatprep.subr.mxu0 0.0
    %3335 = vmatpush1.msra.mxu0 0.0
    %3336 = vmatprep.subr.mxu0 0.0
    %3337 = vmatpush1.msra.mxu0 0.0
    %3338 = vmatprep.subr.mxu0 0.0
    %3339 = vmatpush1.msra.mxu0 0.0
    %3340 = vmatprep.subr.mxu0 0.0
    %3341 = vmatpush1.msra.mxu0 0.0
    %3342 = vmatprep.subr.mxu0 0.0
    %3343 = vmatpush1.msra.mxu0 0.0
    %3344 = vmatprep.subr.mxu0 0.0
    %3345 = vmatpush1.msra.mxu0 0.0
    %3346 = vmatprep.subr.mxu0 0.0
    %3347 = vmatpush1.msra.mxu0 0.0
    %3348 = vmatprep.subr.mxu0 0.0
    %3349 = vmatpush1.msra.mxu0 0.0
    %3350 = vmatprep.subr.mxu0 0.0
    %3351 = vmatpush1.msra.mxu0 0.0
    %3352 = vmatprep.subr.mxu0 0.0
    %3353 = vmatpush1.msra.mxu0 0.0
    %3354 = vmatprep.subr.mxu0 0.0
    %3355 = vmatpush1.msra.mxu0 0.0
    %3356 = vmatprep.subr.mxu0 0.0
    %3357 = vmatpush1.msra.mxu0 0.0
    %3358 = vmatprep.subr.mxu0 0.0
    %3359 = vmatpush1.msra.mxu0 0.0
    %3360 = vmatprep.subr.mxu0 0.0
    %3361 = vmatpush1.msra.mxu0 0.0
    %3362 = vmatprep.subr.mxu0 0.0
    %3363 = vmatpush1.msra.mxu0 0.0
    %3364 = vmatprep.subr.mxu0 0.0
    %3365 = vmatpush1.msra.mxu0 0.0
    %3366 = vmatprep.subr.mxu0 0.0
    %3367 = vmatpush1.msra.mxu0 0.0
    %3368 = vmatprep.subr.mxu0 0.0
    %3369 = vmatpush1.msra.mxu0 0.0
    %3370 = vmatprep.subr.mxu0 0.0
    %3371 = vmatpush1.msra.mxu0 0.0
    %3372 = vmatprep.subr.mxu0 0.0
    %3373 = vmatpush1.msra.mxu0 0.0
    %3374 = vmatprep.subr.mxu0 0.0
    %3375 = vmatpush1.msra.mxu0 0.0
    %3376 = vmatprep.subr.mxu0 0.0
    %3377 = vmatpush1.msra.mxu0 0.0
    %3378 = vmatprep.subr.mxu0 0.0
    %3379 = vmatpush1.msra.mxu0 0.0
    %3380 = vmatprep.subr.mxu0 0.0
    %3381 = vmatpush1.msra.mxu0 0.0
    %3382 = vmatprep.subr.mxu0 0.0
    %3383 = vmatpush1.msra.mxu0 0.0
    %3384 = vmatprep.mubr.f32.mxu0 0.0
    %3385 = vmatmul.mubr.f32.gmra.mrb[0].mxu0 %v3315
    %v3386 = vpop.f32.mrb[0].mxu0
    %v3387 = vadd.f32 0.0, %v3386
    %v3388 = vpop.f32.mrb[0].mxu0
    %3389 = vmatprep.mubr.f32.mxu0 0.0
    %3390 = vmatmul.mubr.f32.gmra.mrb[0].mxu0 %v3318
    %v3391 = vpop.f32.mrb[0].mxu0
    %v3392 = vadd.f32 0.0, %v3391
    %v3393 = vpop.f32.mrb[0].mxu0
    %3394 = vdwg.mxu0
    %3395 = vrot.lane.b32.xlu0 %v2573, 112
    %v3396 = vpop.permute.xlu0 %3395
    %3397 = vrot.lane.b32.xlu0 %v2578, 112
    %v3398 = vpop.permute.xlu0 %3397
    %3399 = vrot.lane.b32.xlu0 %v2573, 80
    %v3400 = vpop.permute.xlu0 %3399
    %3401 = vrot.lane.b32.xlu0 %v2578, 80
    %v3402 = vpop.permute.xlu0 %3401
    %v3403 = vsel %vm323, %v3396, 0
    %v3405 = vsel %vm323, %v3398, 0
    %v3407 = vsel %vm323, %v3400, 0
    %v3409 = vsel %vm323, %v3402, 0
    %3411 = vmatprep.subr.mxu0 0.0
    %3412 = vmatpush1.xpose.msra.mxu0 %v3407
    %3413 = vmatprep.subr.mxu0 0.0
    %3414 = vmatpush1.xpose.msra.mxu0 %v3409
    %3415 = vmatprep.subr.mxu0 0.0
    %3416 = vmatpush1.xpose.msra.mxu0 0.0
    %3417 = vmatprep.subr.mxu0 0.0
    %3418 = vmatpush1.xpose.msra.mxu0 0.0
    %3419 = vmatprep.subr.mxu0 0.0
    %3420 = vmatpush1.xpose.msra.mxu0 0.0
    %3421 = vmatprep.subr.mxu0 0.0
    %3422 = vmatpush1.xpose.msra.mxu0 0.0
    %3423 = vmatprep.subr.mxu0 0.0
    %3424 = vmatpush1.xpose.msra.mxu0 0.0
    %3425 = vmatprep.subr.mxu0 0.0
    %3426 = vmatpush1.xpose.msra.mxu0 0.0
    %3427 = vmatprep.subr.mxu0 0.0
    %3428 = vmatpush1.xpose.msra.mxu0 0.0
    %3429 = vmatprep.subr.mxu0 0.0
    %3430 = vmatpush1.xpose.msra.mxu0 0.0
    %3431 = vmatprep.subr.mxu0 0.0
    %3432 = vmatpush1.xpose.msra.mxu0 0.0
    %3433 = vmatprep.subr.mxu0 0.0
    %3434 = vmatpush1.xpose.msra.mxu0 0.0
    %3435 = vmatprep.subr.mxu0 0.0
    %3436 = vmatpush1.xpose.msra.mxu0 0.0
    %3437 = vmatprep.subr.mxu0 0.0
    %3438 = vmatpush1.xpose.msra.mxu0 0.0
    %3439 = vmatprep.subr.mxu0 0.0
    %3440 = vmatpush1.xpose.msra.mxu0 0.0
    %3441 = vmatprep.subr.mxu0 0.0
    %3442 = vmatpush1.xpose.msra.mxu0 0.0
    %3443 = vmatprep.subr.mxu0 0.0
    %3444 = vmatpush1.xpose.msra.mxu0 0.0
    %3445 = vmatprep.subr.mxu0 0.0
    %3446 = vmatpush1.xpose.msra.mxu0 0.0
    %3447 = vmatprep.subr.mxu0 0.0
    %3448 = vmatpush1.xpose.msra.mxu0 0.0
    %3449 = vmatprep.subr.mxu0 0.0
    %3450 = vmatpush1.xpose.msra.mxu0 0.0
    %3451 = vmatprep.subr.mxu0 0.0
    %3452 = vmatpush1.xpose.msra.mxu0 0.0
    %3453 = vmatprep.subr.mxu0 0.0
    %3454 = vmatpush1.xpose.msra.mxu0 0.0
    %3455 = vmatprep.subr.mxu0 0.0
    %3456 = vmatpush1.xpose.msra.mxu0 0.0
    %3457 = vmatprep.subr.mxu0 0.0
    %3458 = vmatpush1.xpose.msra.mxu0 0.0
    %3459 = vmatprep.subr.mxu0 0.0
    %3460 = vmatpush1.xpose.msra.mxu0 0.0
    %3461 = vmatprep.subr.mxu0 0.0
    %3462 = vmatpush1.xpose.msra.mxu0 0.0
    %3463 = vmatprep.subr.mxu0 0.0
    %3464 = vmatpush1.xpose.msra.mxu0 0.0
    %3465 = vmatprep.subr.mxu0 0.0
    %3466 = vmatpush1.xpose.msra.mxu0 0.0
    %3467 = vmatprep.subr.mxu0 0.0
    %3468 = vmatpush1.xpose.msra.mxu0 0.0
    %3469 = vmatprep.subr.mxu0 0.0
    %3470 = vmatpush1.xpose.msra.mxu0 0.0
    %3471 = vmatprep.subr.mxu0 0.0
    %3472 = vmatpush1.xpose.msra.mxu0 0.0
    %3473 = vmatprep.subr.mxu0 0.0
    %3474 = vmatpush1.xpose.msra.mxu0 0.0
    %3475 = vmatprep.mubr.f32.mxu0 0.0
    %3476 = vmatmul.mubr.f32.gmra.mrb[0].mxu0 %v3403
    %v3477 = vpop.f32.mrb[0].mxu0
    %v3478 = vadd.f32 0.0, %v3477
    %v3479 = vpop.f32.mrb[0].mxu0
    %3480 = vmatprep.mubr.f32.mxu0 0.0
    %3481 = vmatmul.mubr.f32.gmra.mrb[0].mxu0 %v3405
    %v3482 = vpop.f32.mrb[0].mxu0
    %v3483 = vadd.f32 0.0, %v3482
    %v3484 = vpop.f32.mrb[0].mxu0
    %3485 = vdwg.mxu0
    %3486 = vrot.lane.b32.xlu0 %v2583, 112
    %v3487 = vpop.permute.xlu0 %3486
    %3488 = vrot.lane.b32.xlu0 %v2588, 112
    %v3489 = vpop.permute.xlu0 %3488
    %3490 = vrot.lane.b32.xlu0 %v2583, 80
    %v3491 = vpop.permute.xlu0 %3490
    %3492 = vrot.lane.b32.xlu0 %v2588, 80
    %v3493 = vpop.permute.xlu0 %3492
    %v3494 = vsel %vm323, %v3487, 0
    %v3496 = vsel %vm323, %v3489, 0
    %v3498 = vsel %vm323, %v3491, 0
    %v3500 = vsel %vm323, %v3493, 0
    %3502 = vmatprep.subr.mxu0 0.0
    %3503 = vmatpush1.xpose.msra.mxu0 %v3498
    %3504 = vmatprep.subr.mxu0 0.0
    %3505 = vmatpush1.xpose.msra.mxu0 %v3500
    %3506 = vmatprep.subr.mxu0 0.0
    %3507 = vmatpush1.xpose.msra.mxu0 0.0
    %3508 = vmatprep.subr.mxu0 0.0
    %3509 = vmatpush1.xpose.msra.mxu0 0.0
    %3510 = vmatprep.subr.mxu0 0.0
    %3511 = vmatpush1.xpose.msra.mxu0 0.0
    %3512 = vmatprep.subr.mxu0 0.0
    %3513 = vmatpush1.xpose.msra.mxu0 0.0
    %3514 = vmatprep.subr.mxu0 0.0
    %3515 = vmatpush1.xpose.msra.mxu0 0.0
    %3516 = vmatprep.subr.mxu0 0.0
    %3517 = vmatpush1.xpose.msra.mxu0 0.0
    %3518 = vmatprep.subr.mxu0 0.0
    %3519 = vmatpush1.xpose.msra.mxu0 0.0
    %3520 = vmatprep.subr.mxu0 0.0
    %3521 = vmatpush1.xpose.msra.mxu0 0.0
    %3522 = vmatprep.subr.mxu0 0.0
    %3523 = vmatpush1.xpose.msra.mxu0 0.0
    %3524 = vmatprep.subr.mxu0 0.0
    %3525 = vmatpush1.xpose.msra.mxu0 0.0
    %3526 = vmatprep.subr.mxu0 0.0
    %3527 = vmatpush1.xpose.msra.mxu0 0.0
    %3528 = vmatprep.subr.mxu0 0.0
    %3529 = vmatpush1.xpose.msra.mxu0 0.0
    %3530 = vmatprep.subr.mxu0 0.0
    %3531 = vmatpush1.xpose.msra.mxu0 0.0
    %3532 = vmatprep.subr.mxu0 0.0
    %3533 = vmatpush1.xpose.msra.mxu0 0.0
    %3534 = vmatprep.subr.mxu0 0.0
    %3535 = vmatpush1.xpose.msra.mxu0 0.0
    %3536 = vmatprep.subr.mxu0 0.0
    %3537 = vmatpush1.xpose.msra.mxu0 0.0
    %3538 = vmatprep.subr.mxu0 0.0
    %3539 = vmatpush1.xpose.msra.mxu0 0.0
    %3540 = vmatprep.subr.mxu0 0.0
    %3541 = vmatpush1.xpose.msra.mxu0 0.0
    %3542 = vmatprep.subr.mxu0 0.0
    %3543 = vmatpush1.xpose.msra.mxu0 0.0
    %3544 = vmatprep.subr.mxu0 0.0
    %3545 = vmatpush1.xpose.msra.mxu0 0.0
    %3546 = vmatprep.subr.mxu0 0.0
    %3547 = vmatpush1.xpose.msra.mxu0 0.0
    %3548 = vmatprep.subr.mxu0 0.0
    %3549 = vmatpush1.xpose.msra.mxu0 0.0
    %3550 = vmatprep.subr.mxu0 0.0
    %3551 = vmatpush1.xpose.msra.mxu0 0.0
    %3552 = vmatprep.subr.mxu0 0.0
    %3553 = vmatpush1.xpose.msra.mxu0 0.0
    %3554 = vmatprep.subr.mxu0 0.0
    %3555 = vmatpush1.xpose.msra.mxu0 0.0
    %3556 = vmatprep.subr.mxu0 0.0
    %3557 = vmatpush1.xpose.msra.mxu0 0.0
    %3558 = vmatprep.subr.mxu0 0.0
    %3559 = vmatpush1.xpose.msra.mxu0 0.0
    %3560 = vmatprep.subr.mxu0 0.0
    %3561 = vmatpush1.xpose.msra.mxu0 0.0
    %3562 = vmatprep.subr.mxu0 0.0
    %3563 = vmatpush1.xpose.msra.mxu0 0.0
    %3564 = vmatprep.subr.mxu0 0.0
    %3565 = vmatpush1.xpose.msra.mxu0 0.0
    %3566 = vmatprep.mubr.f32.mxu0 0.0
    %3567 = vmatmul.mubr.f32.gmra.mrb[0].mxu0 %v3494
    %v3568 = vpop.f32.mrb[0].mxu0
    %v3569 = vadd.f32 0.0, %v3568
    %v3570 = vpop.f32.mrb[0].mxu0
    %3571 = vmatprep.mubr.f32.mxu0 0.0
    %3572 = vmatmul.mubr.f32.gmra.mrb[0].mxu0 %v3496
    %v3573 = vpop.f32.mrb[0].mxu0
    %v3574 = vadd.f32 0.0, %v3573
    %v3575 = vpop.f32.mrb[0].mxu0
    %3576 = vdwg.mxu0
    %v3577 = vsel %vm496, %v3478, -inf
    %3578 = vmax.xlane.f32.xlu0 %v3577
    %v3579 = vpop.xlane.xlu0 %3578
    %v3580 = vsel %vm496, %v3483, -inf
    %3581 = vmax.xlane.f32.xlu0 %v3580
    %v3582 = vpop.xlane.xlu0 %3581
    %v3583 = vsel %vm496, %v3569, -inf
    %3584 = vmax.xlane.f32.xlu0 %v3583
    %v3585 = vpop.xlane.xlu0 %3584
    %v3586 = vsel %vm496, %v3574, -inf
    %3587 = vmax.xlane.f32.xlu0 %v3586
    %v3588 = vpop.xlane.xlu0 %3587
    %v3589 = vsub.f32 %v3478, %v3579
    %v3590 = vsub.f32 %v3483, %v3582
    %v3591 = vsub.f32 %v3569, %v3585
    %v3592 = vsub.f32 %v3574, %v3588
    %v3593 = vmul.f32 %v3589, 1.442695
    %v3594 = vpow.pop %v3593
    %v3595 = vmul.f32 %v3590, 1.442695
    %v3596 = vpow.pop %v3595
    %v3597 = vmul.f32 %v3591, 1.442695
    %v3598 = vpow.pop %v3597
    %v3599 = vmul.f32 %v3592, 1.442695
    %v3600 = vpow.pop %v3599
    %v3601 = vsel %vm496, %v3594, 0.0
    %3602 = vadd.xlane.f32.xlu0 %v3601
    %v3603 = vpop.xlane.xlu0 %3602
    %v3604 = vsel %vm496, %v3596, 0.0
    %3605 = vadd.xlane.f32.xlu0 %v3604
    %v3606 = vpop.xlane.xlu0 %3605
    %v3607 = vsel %vm496, %v3598, 0.0
    %3608 = vadd.xlane.f32.xlu0 %v3607
    %v3609 = vpop.xlane.xlu0 %3608
    %v3610 = vsel %vm496, %v3600, 0.0
    %3611 = vadd.xlane.f32.xlu0 %v3610
    %v3612 = vpop.xlane.xlu0 %3611
    %v3613 = vrcp.pop %v3603
    %v3614 = vmul.f32 1.0, %v3613
    %v3615 = vrcp.pop %v3606
    %v3616 = vmul.f32 1.0, %v3615
    %v3617 = vrcp.pop %v3609
    %v3618 = vmul.f32 1.0, %v3617
    %v3619 = vrcp.pop %v3612
    %v3620 = vmul.f32 1.0, %v3619
    %v3621 = vmul.f32 %v3594, %v3614
    %v3622 = vmul.f32 %v3596, %v3616
    %v3623 = vmul.f32 %v3598, %v3618
    %v3624 = vmul.f32 %v3600, %v3620
    %3625 = vrot.lane.b32.xlu0 %v2573, 48
    %v3626 = vpop.permute.xlu0 %3625
    %3627 = vrot.lane.b32.xlu0 %v2578, 48
    %v3628 = vpop.permute.xlu0 %3627
    %v3632 = vsel %vm496, %v3621, 0
    %v3635 = vsel %vm496, %v3622, 0
    %3637 = vmatprep.subr.mxu0 0.0
    %3638 = vmatpush1.msra.mxu0 %v3626
    %3639 = vmatprep.subr.mxu0 0.0
    %3640 = vmatpush1.msra.mxu0 %v3628
    %3641 = vmatprep.subr.mxu0 0.0
    %3642 = vmatpush1.msra.mxu0 0.0
    %3643 = vmatprep.subr.mxu0 0.0
    %3644 = vmatpush1.msra.mxu0 0.0
    %3645 = vmatprep.subr.mxu0 0.0
    %3646 = vmatpush1.msra.mxu0 0.0
    %3647 = vmatprep.subr.mxu0 0.0
    %3648 = vmatpush1.msra.mxu0 0.0
    %3649 = vmatprep.subr.mxu0 0.0
    %3650 = vmatpush1.msra.mxu0 0.0
    %3651 = vmatprep.subr.mxu0 0.0
    %3652 = vmatpush1.msra.mxu0 0.0
    %3653 = vmatprep.subr.mxu0 0.0
    %3654 = vmatpush1.msra.mxu0 0.0
    %3655 = vmatprep.subr.mxu0 0.0
    %3656 = vmatpush1.msra.mxu0 0.0
    %3657 = vmatprep.subr.mxu0 0.0
    %3658 = vmatpush1.msra.mxu0 0.0
    %3659 = vmatprep.subr.mxu0 0.0
    %3660 = vmatpush1.msra.mxu0 0.0
    %3661 = vmatprep.subr.mxu0 0.0
    %3662 = vmatpush1.msra.mxu0 0.0
    %3663 = vmatprep.subr.mxu0 0.0
    %3664 = vmatpush1.msra.mxu0 0.0
    %3665 = vmatprep.subr.mxu0 0.0
    %3666 = vmatpush1.msra.mxu0 0.0
    %3667 = vmatprep.subr.mxu0 0.0
    %3668 = vmatpush1.msra.mxu0 0.0
    %3669 = vmatprep.subr.mxu0 0.0
    %3670 = vmatpush1.msra.mxu0 0.0
    %3671 = vmatprep.subr.mxu0 0.0
    %3672 = vmatpush1.msra.mxu0 0.0
    %3673 = vmatprep.subr.mxu0 0.0
    %3674 = vmatpush1.msra.mxu0 0.0
    %3675 = vmatprep.subr.mxu0 0.0
    %3676 = vmatpush1.msra.mxu0 0.0
    %3677 = vmatprep.subr.mxu0 0.0
    %3678 = vmatpush1.msra.mxu0 0.0
    %3679 = vmatprep.subr.mxu0 0.0
    %3680 = vmatpush1.msra.mxu0 0.0
    %3681 = vmatprep.subr.mxu0 0.0
    %3682 = vmatpush1.msra.mxu0 0.0
    %3683 = vmatprep.subr.mxu0 0.0
    %3684 = vmatpush1.msra.mxu0 0.0
    %3685 = vmatprep.subr.mxu0 0.0
    %3686 = vmatpush1.msra.mxu0 0.0
    %3687 = vmatprep.subr.mxu0 0.0
    %3688 = vmatpush1.msra.mxu0 0.0
    %3689 = vmatprep.subr.mxu0 0.0
    %3690 = vmatpush1.msra.mxu0 0.0
    %3691 = vmatprep.subr.mxu0 0.0
    %3692 = vmatpush1.msra.mxu0 0.0
    %3693 = vmatprep.subr.mxu0 0.0
    %3694 = vmatpush1.msra.mxu0 0.0
    %3695 = vmatprep.subr.mxu0 0.0
    %3696 = vmatpush1.msra.mxu0 0.0
    %3697 = vmatprep.subr.mxu0 0.0
    %3698 = vmatpush1.msra.mxu0 0.0
    %3699 = vmatprep.subr.mxu0 0.0
    %3700 = vmatpush1.msra.mxu0 0.0
    %3701 = vmatprep.mubr.f32.mxu0 0.0
    %3702 = vmatmul.mubr.f32.gmra.mrb[0].mxu0 %v3632
    %v3703 = vpop.f32.mrb[0].mxu0
    %v3704 = vadd.f32 0.0, %v3703
    %v3705 = vpop.f32.mrb[0].mxu0
    %3706 = vmatprep.mubr.f32.mxu0 0.0
    %3707 = vmatmul.mubr.f32.gmra.mrb[0].mxu0 %v3635
    %v3708 = vpop.f32.mrb[0].mxu0
    %v3709 = vadd.f32 0.0, %v3708
    %v3710 = vpop.f32.mrb[0].mxu0
    %3711 = vdwg.mxu0
    %3712 = vrot.lane.b32.xlu0 %v2583, 48
    %v3713 = vpop.permute.xlu0 %3712
    %3714 = vrot.lane.b32.xlu0 %v2588, 48
    %v3715 = vpop.permute.xlu0 %3714
    %v3719 = vsel %vm496, %v3623, 0
    %v3722 = vsel %vm496, %v3624, 0
    %3724 = vmatprep.subr.mxu0 0.0
    %3725 = vmatpush1.msra.mxu0 %v3713
    %3726 = vmatprep.subr.mxu0 0.0
    %3727 = vmatpush1.msra.mxu0 %v3715
    %3728 = vmatprep.subr.mxu0 0.0
    %3729 = vmatpush1.msra.mxu0 0.0
    %3730 = vmatprep.subr.mxu0 0.0
    %3731 = vmatpush1.msra.mxu0 0.0
    %3732 = vmatprep.subr.mxu0 0.0
    %3733 = vmatpush1.msra.mxu0 0.0
    %3734 = vmatprep.subr.mxu0 0.0
    %3735 = vmatpush1.msra.mxu0 0.0
    %3736 = vmatprep.subr.mxu0 0.0
    %3737 = vmatpush1.msra.mxu0 0.0
    %3738 = vmatprep.subr.mxu0 0.0
    %3739 = vmatpush1.msra.mxu0 0.0
    %3740 = vmatprep.subr.mxu0 0.0
    %3741 = vmatpush1.msra.mxu0 0.0
    %3742 = vmatprep.subr.mxu0 0.0
    %3743 = vmatpush1.msra.mxu0 0.0
    %3744 = vmatprep.subr.mxu0 0.0
    %3745 = vmatpush1.msra.mxu0 0.0
    %3746 = vmatprep.subr.mxu0 0.0
    %3747 = vmatpush1.msra.mxu0 0.0
    %3748 = vmatprep.subr.mxu0 0.0
    %3749 = vmatpush1.msra.mxu0 0.0
    %3750 = vmatprep.subr.mxu0 0.0
    %3751 = vmatpush1.msra.mxu0 0.0
    %3752 = vmatprep.subr.mxu0 0.0
    %3753 = vmatpush1.msra.mxu0 0.0
    %3754 = vmatprep.subr.mxu0 0.0
    %3755 = vmatpush1.msra.mxu0 0.0
    %3756 = vmatprep.subr.mxu0 0.0
    %3757 = vmatpush1.msra.mxu0 0.0
    %3758 = vmatprep.subr.mxu0 0.0
    %3759 = vmatpush1.msra.mxu0 0.0
    %3760 = vmatprep.subr.mxu0 0.0
    %3761 = vmatpush1.msra.mxu0 0.0
    %3762 = vmatprep.subr.mxu0 0.0
    %3763 = vmatpush1.msra.mxu0 0.0
    %3764 = vmatprep.subr.mxu0 0.0
    %3765 = vmatpush1.msra.mxu0 0.0
    %3766 = vmatprep.subr.mxu0 0.0
    %3767 = vmatpush1.msra.mxu0 0.0
    %3768 = vmatprep.subr.mxu0 0.0
    %3769 = vmatpush1.msra.mxu0 0.0
    %3770 = vmatprep.subr.mxu0 0.0
    %3771 = vmatpush1.msra.mxu0 0.0
    %3772 = vmatprep.subr.mxu0 0.0
    %3773 = vmatpush1.msra.mxu0 0.0
    %3774 = vmatprep.subr.mxu0 0.0
    %3775 = vmatpush1.msra.mxu0 0.0
    %3776 = vmatprep.subr.mxu0 0.0
    %3777 = vmatpush1.msra.mxu0 0.0
    %3778 = vmatprep.subr.mxu0 0.0
    %3779 = vmatpush1.msra.mxu0 0.0
    %3780 = vmatprep.subr.mxu0 0.0
    %3781 = vmatpush1.msra.mxu0 0.0
    %3782 = vmatprep.subr.mxu0 0.0
    %3783 = vmatpush1.msra.mxu0 0.0
    %3784 = vmatprep.subr.mxu0 0.0
    %3785 = vmatpush1.msra.mxu0 0.0
    %3786 = vmatprep.subr.mxu0 0.0
    %3787 = vmatpush1.msra.mxu0 0.0
    %3788 = vmatprep.mubr.f32.mxu0 0.0
    %3789 = vmatmul.mubr.f32.gmra.mrb[0].mxu0 %v3719
    %v3790 = vpop.f32.mrb[0].mxu0
    %v3791 = vadd.f32 0.0, %v3790
    %v3792 = vpop.f32.mrb[0].mxu0
    %3793 = vmatprep.mubr.f32.mxu0 0.0
    %3794 = vmatmul.mubr.f32.gmra.mrb[0].mxu0 %v3722
    %v3795 = vpop.f32.mrb[0].mxu0
    %v3796 = vadd.f32 0.0, %v3795
    %v3797 = vpop.f32.mrb[0].mxu0
    %3798 = vdwg.mxu0
    %3799 = vrot.lane.b32.xlu0 %v2573, 104
    %v3800 = vpop.permute.xlu0 %3799
    %3801 = vrot.lane.b32.xlu0 %v2578, 104
    %v3802 = vpop.permute.xlu0 %3801
    %3803 = vrot.lane.b32.xlu0 %v2573, 72
    %v3804 = vpop.permute.xlu0 %3803
    %3805 = vrot.lane.b32.xlu0 %v2578, 72
    %v3806 = vpop.permute.xlu0 %3805
    %v3807 = vsel %vm323, %v3800, 0
    %v3809 = vsel %vm323, %v3802, 0
    %v3811 = vsel %vm323, %v3804, 0
    %v3813 = vsel %vm323, %v3806, 0
    %3815 = vmatprep.subr.mxu0 0.0
    %3816 = vmatpush1.xpose.msra.mxu0 %v3811
    %3817 = vmatprep.subr.mxu0 0.0
    %3818 = vmatpush1.xpose.msra.mxu0 %v3813
    %3819 = vmatprep.subr.mxu0 0.0
    %3820 = vmatpush1.xpose.msra.mxu0 0.0
    %3821 = vmatprep.subr.mxu0 0.0
    %3822 = vmatpush1.xpose.msra.mxu0 0.0
    %3823 = vmatprep.subr.mxu0 0.0
    %3824 = vmatpush1.xpose.msra.mxu0 0.0
    %3825 = vmatprep.subr.mxu0 0.0
    %3826 = vmatpush1.xpose.msra.mxu0 0.0
    %3827 = vmatprep.subr.mxu0 0.0
    %3828 = vmatpush1.xpose.msra.mxu0 0.0
    %3829 = vmatprep.subr.mxu0 0.0
    %3830 = vmatpush1.xpose.msra.mxu0 0.0
    %3831 = vmatprep.subr.mxu0 0.0
    %3832 = vmatpush1.xpose.msra.mxu0 0.0
    %3833 = vmatprep.subr.mxu0 0.0
    %3834 = vmatpush1.xpose.msra.mxu0 0.0
    %3835 = vmatprep.subr.mxu0 0.0
    %3836 = vmatpush1.xpose.msra.mxu0 0.0
    %3837 = vmatprep.subr.mxu0 0.0
    %3838 = vmatpush1.xpose.msra.mxu0 0.0
    %3839 = vmatprep.subr.mxu0 0.0
    %3840 = vmatpush1.xpose.msra.mxu0 0.0
    %3841 = vmatprep.subr.mxu0 0.0
    %3842 = vmatpush1.xpose.msra.mxu0 0.0
    %3843 = vmatprep.subr.mxu0 0.0
    %3844 = vmatpush1.xpose.msra.mxu0 0.0
    %3845 = vmatprep.subr.mxu0 0.0
    %3846 = vmatpush1.xpose.msra.mxu0 0.0
    %3847 = vmatprep.subr.mxu0 0.0
    %3848 = vmatpush1.xpose.msra.mxu0 0.0
    %3849 = vmatprep.subr.mxu0 0.0
    %3850 = vmatpush1.xpose.msra.mxu0 0.0
    %3851 = vmatprep.subr.mxu0 0.0
    %3852 = vmatpush1.xpose.msra.mxu0 0.0
    %3853 = vmatprep.subr.mxu0 0.0
    %3854 = vmatpush1.xpose.msra.mxu0 0.0
    %3855 = vmatprep.subr.mxu0 0.0
    %3856 = vmatpush1.xpose.msra.mxu0 0.0
    %3857 = vmatprep.subr.mxu0 0.0
    %3858 = vmatpush1.xpose.msra.mxu0 0.0
    %3859 = vmatprep.subr.mxu0 0.0
    %3860 = vmatpush1.xpose.msra.mxu0 0.0
    %3861 = vmatprep.subr.mxu0 0.0
    %3862 = vmatpush1.xpose.msra.mxu0 0.0
    %3863 = vmatprep.subr.mxu0 0.0
    %3864 = vmatpush1.xpose.msra.mxu0 0.0
    %3865 = vmatprep.subr.mxu0 0.0
    %3866 = vmatpush1.xpose.msra.mxu0 0.0
    %3867 = vmatprep.subr.mxu0 0.0
    %3868 = vmatpush1.xpose.msra.mxu0 0.0
    %3869 = vmatprep.subr.mxu0 0.0
    %3870 = vmatpush1.xpose.msra.mxu0 0.0
    %3871 = vmatprep.subr.mxu0 0.0
    %3872 = vmatpush1.xpose.msra.mxu0 0.0
    %3873 = vmatprep.subr.mxu0 0.0
    %3874 = vmatpush1.xpose.msra.mxu0 0.0
    %3875 = vmatprep.subr.mxu0 0.0
    %3876 = vmatpush1.xpose.msra.mxu0 0.0
    %3877 = vmatprep.subr.mxu0 0.0
    %3878 = vmatpush1.xpose.msra.mxu0 0.0
    %3879 = vmatprep.mubr.f32.mxu0 0.0
    %3880 = vmatmul.mubr.f32.gmra.mrb[0].mxu0 %v3807
    %v3881 = vpop.f32.mrb[0].mxu0
    %v3882 = vadd.f32 0.0, %v3881
    %v3883 = vpop.f32.mrb[0].mxu0
    %3884 = vmatprep.mubr.f32.mxu0 0.0
    %3885 = vmatmul.mubr.f32.gmra.mrb[0].mxu0 %v3809
    %v3886 = vpop.f32.mrb[0].mxu0
    %v3887 = vadd.f32 0.0, %v3886
    %v3888 = vpop.f32.mrb[0].mxu0
    %3889 = vdwg.mxu0
    %3890 = vrot.lane.b32.xlu0 %v2583, 104
    %v3891 = vpop.permute.xlu0 %3890
    %3892 = vrot.lane.b32.xlu0 %v2588, 104
    %v3893 = vpop.permute.xlu0 %3892
    %3894 = vrot.lane.b32.xlu0 %v2583, 72
    %v3895 = vpop.permute.xlu0 %3894
    %3896 = vrot.lane.b32.xlu0 %v2588, 72
    %v3897 = vpop.permute.xlu0 %3896
    %v3898 = vsel %vm323, %v3891, 0
    %v3900 = vsel %vm323, %v3893, 0
    %v3902 = vsel %vm323, %v3895, 0
    %v3904 = vsel %vm323, %v3897, 0
    %3906 = vmatprep.subr.mxu0 0.0
    %3907 = vmatpush1.xpose.msra.mxu0 %v3902
    %3908 = vmatprep.subr.mxu0 0.0
    %3909 = vmatpush1.xpose.msra.mxu0 %v3904
    %3910 = vmatprep.subr.mxu0 0.0
    %3911 = vmatpush1.xpose.msra.mxu0 0.0
    %3912 = vmatprep.subr.mxu0 0.0
    %3913 = vmatpush1.xpose.msra.mxu0 0.0
    %3914 = vmatprep.subr.mxu0 0.0
    %3915 = vmatpush1.xpose.msra.mxu0 0.0
    %3916 = vmatprep.subr.mxu0 0.0
    %3917 = vmatpush1.xpose.msra.mxu0 0.0
    %3918 = vmatprep.subr.mxu0 0.0
    %3919 = vmatpush1.xpose.msra.mxu0 0.0
    %3920 = vmatprep.subr.mxu0 0.0
    %3921 = vmatpush1.xpose.msra.mxu0 0.0
    %3922 = vmatprep.subr.mxu0 0.0
    %3923 = vmatpush1.xpose.msra.mxu0 0.0
    %3924 = vmatprep.subr.mxu0 0.0
    %3925 = vmatpush1.xpose.msra.mxu0 0.0
    %3926 = vmatprep.subr.mxu0 0.0
    %3927 = vmatpush1.xpose.msra.mxu0 0.0
    %3928 = vmatprep.subr.mxu0 0.0
    %3929 = vmatpush1.xpose.msra.mxu0 0.0
    %3930 = vmatprep.subr.mxu0 0.0
    %3931 = vmatpush1.xpose.msra.mxu0 0.0
    %3932 = vmatprep.subr.mxu0 0.0
    %3933 = vmatpush1.xpose.msra.mxu0 0.0
    %3934 = vmatprep.subr.mxu0 0.0
    %3935 = vmatpush1.xpose.msra.mxu0 0.0
    %3936 = vmatprep.subr.mxu0 0.0
    %3937 = vmatpush1.xpose.msra.mxu0 0.0
    %3938 = vmatprep.subr.mxu0 0.0
    %3939 = vmatpush1.xpose.msra.mxu0 0.0
    %3940 = vmatprep.subr.mxu0 0.0
    %3941 = vmatpush1.xpose.msra.mxu0 0.0
    %3942 = vmatprep.subr.mxu0 0.0
    %3943 = vmatpush1.xpose.msra.mxu0 0.0
    %3944 = vmatprep.subr.mxu0 0.0
    %3945 = vmatpush1.xpose.msra.mxu0 0.0
    %3946 = vmatprep.subr.mxu0 0.0
    %3947 = vmatpush1.xpose.msra.mxu0 0.0
    %3948 = vmatprep.subr.mxu0 0.0
    %3949 = vmatpush1.xpose.msra.mxu0 0.0
    %3950 = vmatprep.subr.mxu0 0.0
    %3951 = vmatpush1.xpose.msra.mxu0 0.0
    %3952 = vmatprep.subr.mxu0 0.0
    %3953 = vmatpush1.xpose.msra.mxu0 0.0
    %3954 = vmatprep.subr.mxu0 0.0
    %3955 = vmatpush1.xpose.msra.mxu0 0.0
    %3956 = vmatprep.subr.mxu0 0.0
    %3957 = vmatpush1.xpose.msra.mxu0 0.0
    %3958 = vmatprep.subr.mxu0 0.0
    %3959 = vmatpush1.xpose.msra.mxu0 0.0
    %3960 = vmatprep.subr.mxu0 0.0
    %3961 = vmatpush1.xpose.msra.mxu0 0.0
    %3962 = vmatprep.subr.mxu0 0.0
    %3963 = vmatpush1.xpose.msra.mxu0 0.0
    %3964 = vmatprep.subr.mxu0 0.0
    %3965 = vmatpush1.xpose.msra.mxu0 0.0
    %3966 = vmatprep.subr.mxu0 0.0
    %3967 = vmatpush1.xpose.msra.mxu0 0.0
    %3968 = vmatprep.subr.mxu0 0.0
    %3969 = vmatpush1.xpose.msra.mxu0 0.0
    %3970 = vmatprep.mubr.f32.mxu0 0.0
    %3971 = vmatmul.mubr.f32.gmra.mrb[0].mxu0 %v3898
    %v3972 = vpop.f32.mrb[0].mxu0
    %v3973 = vadd.f32 0.0, %v3972
    %v3974 = vpop.f32.mrb[0].mxu0
    %3975 = vmatprep.mubr.f32.mxu0 0.0
    %3976 = vmatmul.mubr.f32.gmra.mrb[0].mxu0 %v3900
    %v3977 = vpop.f32.mrb[0].mxu0
    %v3978 = vadd.f32 0.0, %v3977
    %v3979 = vpop.f32.mrb[0].mxu0
    %3980 = vdwg.mxu0
    %v3981 = vsel %vm496, %v3882, -inf
    %3982 = vmax.xlane.f32.xlu0 %v3981
    %v3983 = vpop.xlane.xlu0 %3982
    %v3984 = vsel %vm496, %v3887, -inf
    %3985 = vmax.xlane.f32.xlu0 %v3984
    %v3986 = vpop.xlane.xlu0 %3985
    %v3987 = vsel %vm496, %v3973, -inf
    %3988 = vmax.xlane.f32.xlu0 %v3987
    %v3989 = vpop.xlane.xlu0 %3988
    %v3990 = vsel %vm496, %v3978, -inf
    %3991 = vmax.xlane.f32.xlu0 %v3990
    %v3992 = vpop.xlane.xlu0 %3991
    %v3993 = vsub.f32 %v3882, %v3983
    %v3994 = vsub.f32 %v3887, %v3986
    %v3995 = vsub.f32 %v3973, %v3989
    %v3996 = vsub.f32 %v3978, %v3992
    %v3997 = vmul.f32 %v3993, 1.442695
    %v3998 = vpow.pop %v3997
    %v3999 = vmul.f32 %v3994, 1.442695
    %v4000 = vpow.pop %v3999
    %v4001 = vmul.f32 %v3995, 1.442695
    %v4002 = vpow.pop %v4001
    %v4003 = vmul.f32 %v3996, 1.442695
    %v4004 = vpow.pop %v4003
    %v4005 = vsel %vm496, %v3998, 0.0
    %4006 = vadd.xlane.f32.xlu0 %v4005
    %v4007 = vpop.xlane.xlu0 %4006
    %v4008 = vsel %vm496, %v4000, 0.0
    %4009 = vadd.xlane.f32.xlu0 %v4008
    %v4010 = vpop.xlane.xlu0 %4009
    %v4011 = vsel %vm496, %v4002, 0.0
    %4012 = vadd.xlane.f32.xlu0 %v4011
    %v4013 = vpop.xlane.xlu0 %4012
    %v4014 = vsel %vm496, %v4004, 0.0
    %4015 = vadd.xlane.f32.xlu0 %v4014
    %v4016 = vpop.xlane.xlu0 %4015
    %v4017 = vrcp.pop %v4007
    %v4018 = vmul.f32 1.0, %v4017
    %v4019 = vrcp.pop %v4010
    %v4020 = vmul.f32 1.0, %v4019
    %v4021 = vrcp.pop %v4013
    %v4022 = vmul.f32 1.0, %v4021
    %v4023 = vrcp.pop %v4016
    %v4024 = vmul.f32 1.0, %v4023
    %v4025 = vmul.f32 %v3998, %v4018
    %v4026 = vmul.f32 %v4000, %v4020
    %v4027 = vmul.f32 %v4002, %v4022
    %v4028 = vmul.f32 %v4004, %v4024
    %4029 = vrot.lane.b32.xlu0 %v2573, 40
    %v4030 = vpop.permute.xlu0 %4029
    %4031 = vrot.lane.b32.xlu0 %v2578, 40
    %v4032 = vpop.permute.xlu0 %4031
    %v4036 = vsel %vm496, %v4025, 0
    %v4039 = vsel %vm496, %v4026, 0
    %4041 = vmatprep.subr.mxu0 0.0
    %4042 = vmatpush1.msra.mxu0 %v4030
    %4043 = vmatprep.subr.mxu0 0.0
    %4044 = vmatpush1.msra.mxu0 %v4032
    %4045 = vmatprep.subr.mxu0 0.0
    %4046 = vmatpush1.msra.mxu0 0.0
    %4047 = vmatprep.subr.mxu0 0.0
    %4048 = vmatpush1.msra.mxu0 0.0
    %4049 = vmatprep.subr.mxu0 0.0
    %4050 = vmatpush1.msra.mxu0 0.0
    %4051 = vmatprep.subr.mxu0 0.0
    %4052 = vmatpush1.msra.mxu0 0.0
    %4053 = vmatprep.subr.mxu0 0.0
    %4054 = vmatpush1.msra.mxu0 0.0
    %4055 = vmatprep.subr.mxu0 0.0
    %4056 = vmatpush1.msra.mxu0 0.0
    %4057 = vmatprep.subr.mxu0 0.0
    %4058 = vmatpush1.msra.mxu0 0.0
    %4059 = vmatprep.subr.mxu0 0.0
    %4060 = vmatpush1.msra.mxu0 0.0
    %4061 = vmatprep.subr.mxu0 0.0
    %4062 = vmatpush1.msra.mxu0 0.0
    %4063 = vmatprep.subr.mxu0 0.0
    %4064 = vmatpush1.msra.mxu0 0.0
    %4065 = vmatprep.subr.mxu0 0.0
    %4066 = vmatpush1.msra.mxu0 0.0
    %4067 = vmatprep.subr.mxu0 0.0
    %4068 = vmatpush1.msra.mxu0 0.0
    %4069 = vmatprep.subr.mxu0 0.0
    %4070 = vmatpush1.msra.mxu0 0.0
    %4071 = vmatprep.subr.mxu0 0.0
    %4072 = vmatpush1.msra.mxu0 0.0
    %4073 = vmatprep.subr.mxu0 0.0
    %4074 = vmatpush1.msra.mxu0 0.0
    %4075 = vmatprep.subr.mxu0 0.0
    %4076 = vmatpush1.msra.mxu0 0.0
    %4077 = vmatprep.subr.mxu0 0.0
    %4078 = vmatpush1.msra.mxu0 0.0
    %4079 = vmatprep.subr.mxu0 0.0
    %4080 = vmatpush1.msra.mxu0 0.0
    %4081 = vmatprep.subr.mxu0 0.0
    %4082 = vmatpush1.msra.mxu0 0.0
    %4083 = vmatprep.subr.mxu0 0.0
    %4084 = vmatpush1.msra.mxu0 0.0
    %4085 = vmatprep.subr.mxu0 0.0
    %4086 = vmatpush1.msra.mxu0 0.0
    %4087 = vmatprep.subr.mxu0 0.0
    %4088 = vmatpush1.msra.mxu0 0.0
    %4089 = vmatprep.subr.mxu0 0.0
    %4090 = vmatpush1.msra.mxu0 0.0
    %4091 = vmatprep.subr.mxu0 0.0
    %4092 = vmatpush1.msra.mxu0 0.0
    %4093 = vmatprep.subr.mxu0 0.0
    %4094 = vmatpush1.msra.mxu0 0.0
    %4095 = vmatprep.subr.mxu0 0.0
    %4096 = vmatpush1.msra.mxu0 0.0
    %4097 = vmatprep.subr.mxu0 0.0
    %4098 = vmatpush1.msra.mxu0 0.0
    %4099 = vmatprep.subr.mxu0 0.0
    %4100 = vmatpush1.msra.mxu0 0.0
    %4101 = vmatprep.subr.mxu0 0.0
    %4102 = vmatpush1.msra.mxu0 0.0
    %4103 = vmatprep.subr.mxu0 0.0
    %4104 = vmatpush1.msra.mxu0 0.0
    %4105 = vmatprep.mubr.f32.mxu0 0.0
    %4106 = vmatmul.mubr.f32.gmra.mrb[0].mxu0 %v4036
    %v4107 = vpop.f32.mrb[0].mxu0
    %v4108 = vadd.f32 0.0, %v4107
    %v4109 = vpop.f32.mrb[0].mxu0
    %4110 = vmatprep.mubr.f32.mxu0 0.0
    %4111 = vmatmul.mubr.f32.gmra.mrb[0].mxu0 %v4039
    %v4112 = vpop.f32.mrb[0].mxu0
    %v4113 = vadd.f32 0.0, %v4112
    %v4114 = vpop.f32.mrb[0].mxu0
    %4115 = vdwg.mxu0
    %4116 = vrot.lane.b32.xlu0 %v2583, 40
    %v4117 = vpop.permute.xlu0 %4116
    %4118 = vrot.lane.b32.xlu0 %v2588, 40
    %v4119 = vpop.permute.xlu0 %4118
    %v4123 = vsel %vm496, %v4027, 0
    %v4126 = vsel %vm496, %v4028, 0
    %4128 = vmatprep.subr.mxu0 0.0
    %4129 = vmatpush1.msra.mxu0 %v4117
    %4130 = vmatprep.subr.mxu0 0.0
    %4131 = vmatpush1.msra.mxu0 %v4119
    %4132 = vmatprep.subr.mxu0 0.0
    %4133 = vmatpush1.msra.mxu0 0.0
    %4134 = vmatprep.subr.mxu0 0.0
    %4135 = vmatpush1.msra.mxu0 0.0
    %4136 = vmatprep.subr.mxu0 0.0
    %4137 = vmatpush1.msra.mxu0 0.0
    %4138 = vmatprep.subr.mxu0 0.0
    %4139 = vmatpush1.msra.mxu0 0.0
    %4140 = vmatprep.subr.mxu0 0.0
    %4141 = vmatpush1.msra.mxu0 0.0
    %4142 = vmatprep.subr.mxu0 0.0
    %4143 = vmatpush1.msra.mxu0 0.0
    %4144 = vmatprep.subr.mxu0 0.0
    %4145 = vmatpush1.msra.mxu0 0.0
    %4146 = vmatprep.subr.mxu0 0.0
    %4147 = vmatpush1.msra.mxu0 0.0
    %4148 = vmatprep.subr.mxu0 0.0
    %4149 = vmatpush1.msra.mxu0 0.0
    %4150 = vmatprep.subr.mxu0 0.0
    %4151 = vmatpush1.msra.mxu0 0.0
    %4152 = vmatprep.subr.mxu0 0.0
    %4153 = vmatpush1.msra.mxu0 0.0
    %4154 = vmatprep.subr.mxu0 0.0
    %4155 = vmatpush1.msra.mxu0 0.0
    %4156 = vmatprep.subr.mxu0 0.0
    %4157 = vmatpush1.msra.mxu0 0.0
    %4158 = vmatprep.subr.mxu0 0.0
    %4159 = vmatpush1.msra.mxu0 0.0
    %4160 = vmatprep.subr.mxu0 0.0
    %4161 = vmatpush1.msra.mxu0 0.0
    %4162 = vmatprep.subr.mxu0 0.0
    %4163 = vmatpush1.msra.mxu0 0.0
    %4164 = vmatprep.subr.mxu0 0.0
    %4165 = vmatpush1.msra.mxu0 0.0
    %4166 = vmatprep.subr.mxu0 0.0
    %4167 = vmatpush1.msra.mxu0 0.0
    %4168 = vmatprep.subr.mxu0 0.0
    %4169 = vmatpush1.msra.mxu0 0.0
    %4170 = vmatprep.subr.mxu0 0.0
    %4171 = vmatpush1.msra.mxu0 0.0
    %4172 = vmatprep.subr.mxu0 0.0
    %4173 = vmatpush1.msra.mxu0 0.0
    %4174 = vmatprep.subr.mxu0 0.0
    %4175 = vmatpush1.msra.mxu0 0.0
    %4176 = vmatprep.subr.mxu0 0.0
    %4177 = vmatpush1.msra.mxu0 0.0
    %4178 = vmatprep.subr.mxu0 0.0
    %4179 = vmatpush1.msra.mxu0 0.0
    %4180 = vmatprep.subr.mxu0 0.0
    %4181 = vmatpush1.msra.mxu0 0.0
    %4182 = vmatprep.subr.mxu0 0.0
    %4183 = vmatpush1.msra.mxu0 0.0
    %4184 = vmatprep.subr.mxu0 0.0
    %4185 = vmatpush1.msra.mxu0 0.0
    %4186 = vmatprep.subr.mxu0 0.0
    %4187 = vmatpush1.msra.mxu0 0.0
    %4188 = vmatprep.subr.mxu0 0.0
    %4189 = vmatpush1.msra.mxu0 0.0
    %4190 = vmatprep.subr.mxu0 0.0
    %4191 = vmatpush1.msra.mxu0 0.0
    %4192 = vmatprep.mubr.f32.mxu0 0.0
    %4193 = vmatmul.mubr.f32.gmra.mrb[0].mxu0 %v4123
    %v4194 = vpop.f32.mrb[0].mxu0
    %v4195 = vadd.f32 0.0, %v4194
    %v4196 = vpop.f32.mrb[0].mxu0
    %4197 = vmatprep.mubr.f32.mxu0 0.0
    %4198 = vmatmul.mubr.f32.gmra.mrb[0].mxu0 %v4126
    %v4199 = vpop.f32.mrb[0].mxu0
    %v4200 = vadd.f32 0.0, %v4199
    %v4201 = vpop.f32.mrb[0].mxu0
    %4202 = vdwg.mxu0
    %4207 = vrot.lane.b32.xlu0 %v3300, 8
    %v4208 = vpop.permute.xlu0 %4207
    %4209 = vrot.lane.b32.xlu0 %v3305, 8
    %v4210 = vpop.permute.xlu0 %4209
    %4211 = vrot.lane.b32.xlu0 %v3387, 8
    %v4212 = vpop.permute.xlu0 %4211
    %4213 = vrot.lane.b32.xlu0 %v3392, 8
    %v4214 = vpop.permute.xlu0 %4213
    %4223 = vrot.lane.b32.xlu0 %v3704, 16
    %v4224 = vpop.permute.xlu0 %4223
    %4225 = vrot.lane.b32.xlu0 %v3709, 16
    %v4226 = vpop.permute.xlu0 %4225
    %4227 = vrot.lane.b32.xlu0 %v3791, 16
    %v4228 = vpop.permute.xlu0 %4227
    %4229 = vrot.lane.b32.xlu0 %v3796, 16
    %v4230 = vpop.permute.xlu0 %4229
    %4239 = vrot.lane.b32.xlu0 %v4108, 24
    %v4240 = vpop.permute.xlu0 %4239
    %4241 = vrot.lane.b32.xlu0 %v4113, 24
    %v4242 = vpop.permute.xlu0 %4241
    %4243 = vrot.lane.b32.xlu0 %v4195, 24
    %v4244 = vpop.permute.xlu0 %4243
    %4245 = vrot.lane.b32.xlu0 %v4200, 24
    %v4246 = vpop.permute.xlu0 %4245
    %v4251 = vsel %vm323, %v2896, %v4208
    %v4252 = vsel %vm323, %v2901, %v4210
    %v4253 = vsel %vm323, %v2983, %v4212
    %v4254 = vsel %vm323, %v2988, %v4214
    %v4255 = vsel %vm496, %v4251, %v4224
    %v4256 = vsel %vm496, %v4252, %v4226
    %v4257 = vsel %vm496, %v4253, %v4228
    %v4258 = vsel %vm496, %v4254, %v4230
    %v4259 = vsel %vm1987, %v4255, %v4240
    %v4260 = vsel %vm1987, %v4256, %v4242
    %v4261 = vsel %vm1987, %v4257, %v4244
    %v4262 = vsel %vm1987, %v4258, %v4246
    %s4263 = scalar_lea.vmem %s4, 32
    %v4264 = vld [vmem:[%s4263] sm:$0xff]
    %v4265 = vld [vmem:[%s4263 + $0x8] sm:$0xff]
    %v4266 = vld [vmem:[%s4263 + $0x10] sm:$0xff]
    %v4267 = vld [vmem:[%s4263 + $0x18] sm:$0xff]
    %v4269 = vsel %vm146, %v4259, 0
    %v4272 = vsel %vm146, %v4260, 0
    %v4275 = vsel %vm146, %v4261, 0
    %v4278 = vsel %vm146, %v4262, 0
    %4280 = vmatprep.subr.mxu0 0.0
    %4281 = vmatpush1.msra.mxu0 %v4264
    %4282 = vmatprep.subr.mxu0 0.0
    %4283 = vmatpush1.msra.mxu0 %v4265
    %4284 = vmatprep.subr.mxu0 0.0
    %4285 = vmatpush1.msra.mxu0 %v4266
    %4286 = vmatprep.subr.mxu0 0.0
    %4287 = vmatpush1.msra.mxu0 %v4267
    %4288 = vmatprep.subr.mxu0 0.0
    %4289 = vmatpush1.msra.mxu0 0.0
    %4290 = vmatprep.subr.mxu0 0.0
    %4291 = vmatpush1.msra.mxu0 0.0
    %4292 = vmatprep.subr.mxu0 0.0
    %4293 = vmatpush1.msra.mxu0 0.0
    %4294 = vmatprep.subr.mxu0 0.0
    %4295 = vmatpush1.msra.mxu0 0.0
    %4296 = vmatprep.subr.mxu0 0.0
    %4297 = vmatpush1.msra.mxu0 0.0
    %4298 = vmatprep.subr.mxu0 0.0
    %4299 = vmatpush1.msra.mxu0 0.0
    %4300 = vmatprep.subr.mxu0 0.0
    %4301 = vmatpush1.msra.mxu0 0.0
    %4302 = vmatprep.subr.mxu0 0.0
    %4303 = vmatpush1.msra.mxu0 0.0
    %4304 = vmatprep.subr.mxu0 0.0
    %4305 = vmatpush1.msra.mxu0 0.0
    %4306 = vmatprep.subr.mxu0 0.0
    %4307 = vmatpush1.msra.mxu0 0.0
    %4308 = vmatprep.subr.mxu0 0.0
    %4309 = vmatpush1.msra.mxu0 0.0
    %4310 = vmatprep.subr.mxu0 0.0
    %4311 = vmatpush1.msra.mxu0 0.0
    %4312 = vmatprep.subr.mxu0 0.0
    %4313 = vmatpush1.msra.mxu0 0.0
    %4314 = vmatprep.subr.mxu0 0.0
    %4315 = vmatpush1.msra.mxu0 0.0
    %4316 = vmatprep.subr.mxu0 0.0
    %4317 = vmatpush1.msra.mxu0 0.0
    %4318 = vmatprep.subr.mxu0 0.0
    %4319 = vmatpush1.msra.mxu0 0.0
    %4320 = vmatprep.subr.mxu0 0.0
    %4321 = vmatpush1.msra.mxu0 0.0
    %4322 = vmatprep.subr.mxu0 0.0
    %4323 = vmatpush1.msra.mxu0 0.0
    %4324 = vmatprep.subr.mxu0 0.0
    %4325 = vmatpush1.msra.mxu0 0.0
    %4326 = vmatprep.subr.mxu0 0.0
    %4327 = vmatpush1.msra.mxu0 0.0
    %4328 = vmatprep.subr.mxu0 0.0
    %4329 = vmatpush1.msra.mxu0 0.0
    %4330 = vmatprep.subr.mxu0 0.0
    %4331 = vmatpush1.msra.mxu0 0.0
    %4332 = vmatprep.subr.mxu0 0.0
    %4333 = vmatpush1.msra.mxu0 0.0
    %4334 = vmatprep.subr.mxu0 0.0
    %4335 = vmatpush1.msra.mxu0 0.0
    %4336 = vmatprep.subr.mxu0 0.0
    %4337 = vmatpush1.msra.mxu0 0.0
    %4338 = vmatprep.subr.mxu0 0.0
    %4339 = vmatpush1.msra.mxu0 0.0
    %4340 = vmatprep.subr.mxu0 0.0
    %4341 = vmatpush1.msra.mxu0 0.0
    %4342 = vmatprep.subr.mxu0 0.0
    %4343 = vmatpush1.msra.mxu0 0.0
    %4344 = vmatprep.mubr.f32.mxu0 0.0
    %4345 = vmatmul.mubr.f32.gmra.mrb[0].mxu0 %v4269
    %v4346 = vpop.f32.mrb[0].mxu0
    %v4347 = vadd.f32 0.0, %v4346
    %v4348 = vpop.f32.mrb[0].mxu0
    %4349 = vmatprep.mubr.f32.mxu0 0.0
    %4350 = vmatmul.mubr.f32.gmra.mrb[0].mxu0 %v4272
    %v4351 = vpop.f32.mrb[0].mxu0
    %v4352 = vadd.f32 0.0, %v4351
    %v4353 = vpop.f32.mrb[0].mxu0
    %4354 = vmatprep.mubr.f32.mxu0 0.0
    %4355 = vmatmul.mubr.f32.gmra.mrb[0].mxu0 %v4275
    %v4356 = vpop.f32.mrb[0].mxu0
    %v4357 = vadd.f32 0.0, %v4356
    %v4358 = vpop.f32.mrb[0].mxu0
    %4359 = vmatprep.mubr.f32.mxu0 0.0
    %4360 = vmatmul.mubr.f32.gmra.mrb[0].mxu0 %v4278
    %v4361 = vpop.f32.mrb[0].mxu0
    %v4362 = vadd.f32 0.0, %v4361
    %v4363 = vpop.f32.mrb[0].mxu0
    %4364 = vdwg.mxu0
    %v4365 = vadd.f32 %v2415, %v4347
    %v4366 = vadd.f32 %v2416, %v4352
    %v4367 = vadd.f32 %v2417, %v4357
    %v4368 = vadd.f32 %v2418, %v4362
    %v4369 = vlaneseq
    %v4370 = vshrl.u32 %v4369, 7
    %v4371 = vsub.s32 4, %v4370
    %v4372 = vrot.slane %v2420, %v4371
    %v4373 = vadd.f32 %v4365, %v4372
    %v4374 = vadd.f32 %v4366, %v4372
    %v4375 = vadd.f32 %v4367, %v4372
    %v4376 = vadd.f32 %v4368, %v4372
    %v4377 = vsel %vm146, %v4373, 0.0
    %4378 = vadd.xlane.f32.xlu0 %v4377
    %v4379 = vpop.xlane.xlu0 %4378
    %v4380 = vsel %vm146, %v4374, 0.0
    %4381 = vadd.xlane.f32.xlu0 %v4380
    %v4382 = vpop.xlane.xlu0 %4381
    %v4383 = vsel %vm146, %v4375, 0.0
    %4384 = vadd.xlane.f32.xlu0 %v4383
    %v4385 = vpop.xlane.xlu0 %4384
    %v4386 = vsel %vm146, %v4376, 0.0
    %4387 = vadd.xlane.f32.xlu0 %v4386
    %v4388 = vpop.xlane.xlu0 %4387
    %v4389 = vmul.f32 %v4379, %v159
    %v4390 = vmul.f32 %v4382, %v159
    %v4391 = vmul.f32 %v4385, %v159
    %v4392 = vmul.f32 %v4388, %v159
    %v4393 = vsub.f32 %v4373, %v4389
    %v4394 = vsub.f32 %v4374, %v4390
    %v4395 = vsub.f32 %v4375, %v4391
    %v4396 = vsub.f32 %v4376, %v4392
    %v4397 = vmul.f32 %v4393, %v4393
    %v4398 = vmul.f32 %v4394, %v4394
    %v4399 = vmul.f32 %v4395, %v4395
    %v4400 = vmul.f32 %v4396, %v4396
    %v4401 = vsel %vm146, %v4397, 0.0
    %4402 = vadd.xlane.f32.xlu0 %v4401
    %v4403 = vpop.xlane.xlu0 %4402
    %v4404 = vsel %vm146, %v4398, 0.0
    %4405 = vadd.xlane.f32.xlu0 %v4404
    %v4406 = vpop.xlane.xlu0 %4405
    %v4407 = vsel %vm146, %v4399, 0.0
    %4408 = vadd.xlane.f32.xlu0 %v4407
    %v4409 = vpop.xlane.xlu0 %4408
    %v4410 = vsel %vm146, %v4400, 0.0
    %4411 = vadd.xlane.f32.xlu0 %v4410
    %v4412 = vpop.xlane.xlu0 %4411
    %v4413 = vmul.f32 %v4403, %v159
    %v4414 = vmul.f32 %v4406, %v159
    %v4415 = vmul.f32 %v4409, %v159
    %v4416 = vmul.f32 %v4412, %v159
    %v4417 = vadd.f32 %v4413, 1e-05
    %v4418 = vadd.f32 %v4414, 1e-05
    %v4419 = vadd.f32 %v4415, 1e-05
    %v4420 = vadd.f32 %v4416, 1e-05
    %v4421 = vrsqrt.pop %v4417
    %v4422 = vrsqrt.pop %v4418
    %v4423 = vrsqrt.pop %v4419
    %v4424 = vrsqrt.pop %v4420
    %v4425 = vmul.f32 %v4393, %v4421
    %v4426 = vmul.f32 %v4394, %v4422
    %v4427 = vmul.f32 %v4395, %v4423
    %v4428 = vmul.f32 %v4396, %v4424
    %v4429 = vlaneseq
    %v4430 = vshrl.u32 %v4429, 7
    %v4431 = vsub.s32 2, %v4430
    %v4432 = vrot.slane %v2420, %v4431
    %v4433 = vmul.f32 %v4425, %v4432
    %v4434 = vmul.f32 %v4426, %v4432
    %v4435 = vmul.f32 %v4427, %v4432
    %v4436 = vmul.f32 %v4428, %v4432
    %v4437 = vlaneseq
    %v4438 = vshrl.u32 %v4437, 7
    %v4439 = vsub.s32 3, %v4438
    %v4440 = vrot.slane %v2420, %v4439
    %v4441 = vadd.f32 %v4433, %v4440
    %v4442 = vadd.f32 %v4434, %v4440
    %v4443 = vadd.f32 %v4435, %v4440
    %v4444 = vadd.f32 %v4436, %v4440
    %s4445 = scalar_lea.vmem %s6, 32
    %v4446 = vld [vmem:[%s4445] sm:$0xff]
    %v4447 = vld [vmem:[%s4445 + $0x8] sm:$0xff]
    %v4448 = vld [vmem:[%s4445 + $0x10] sm:$0xff]
    %v4449 = vld [vmem:[%s4445 + $0x18] sm:$0xff]
    %s4450 = scalar_lea.vmem %s7, 1
    %v4451 = vld [vmem:[%s4450] sm:$0x1]
    %v4453 = vlaneseq
    %v4454 = vshrl.u32 %v4453, 7
    %v4455 = vsub.s32 0, %v4454
    %v4456 = vrot.slane %v4451, %v4455
    %v4459 = vsel %vm146, %v4441, 0
    %v4462 = vsel %vm146, %v4442, 0
    %v4465 = vsel %vm146, %v4443, 0
    %v4468 = vsel %vm146, %v4444, 0
    %4470 = vmatprep.subr.mxu0 0.0
    %4471 = vmatpush1.msra.mxu0 %v4446
    %4472 = vmatprep.subr.mxu0 0.0
    %4473 = vmatpush1.msra.mxu0 %v4447
    %4474 = vmatprep.subr.mxu0 0.0
    %4475 = vmatpush1.msra.mxu0 %v4448
    %4476 = vmatprep.subr.mxu0 0.0
    %4477 = vmatpush1.msra.mxu0 %v4449
    %4478 = vmatprep.subr.mxu0 0.0
    %4479 = vmatpush1.msra.mxu0 0.0
    %4480 = vmatprep.subr.mxu0 0.0
    %4481 = vmatpush1.msra.mxu0 0.0
    %4482 = vmatprep.subr.mxu0 0.0
    %4483 = vmatpush1.msra.mxu0 0.0
    %4484 = vmatprep.subr.mxu0 0.0
    %4485 = vmatpush1.msra.mxu0 0.0
    %4486 = vmatprep.subr.mxu0 0.0
    %4487 = vmatpush1.msra.mxu0 0.0
    %4488 = vmatprep.subr.mxu0 0.0
    %4489 = vmatpush1.msra.mxu0 0.0
    %4490 = vmatprep.subr.mxu0 0.0
    %4491 = vmatpush1.msra.mxu0 0.0
    %4492 = vmatprep.subr.mxu0 0.0
    %4493 = vmatpush1.msra.mxu0 0.0
    %4494 = vmatprep.subr.mxu0 0.0
    %4495 = vmatpush1.msra.mxu0 0.0
    %4496 = vmatprep.subr.mxu0 0.0
    %4497 = vmatpush1.msra.mxu0 0.0
    %4498 = vmatprep.subr.mxu0 0.0
    %4499 = vmatpush1.msra.mxu0 0.0
    %4500 = vmatprep.subr.mxu0 0.0
    %4501 = vmatpush1.msra.mxu0 0.0
    %4502 = vmatprep.subr.mxu0 0.0
    %4503 = vmatpush1.msra.mxu0 0.0
    %4504 = vmatprep.subr.mxu0 0.0
    %4505 = vmatpush1.msra.mxu0 0.0
    %4506 = vmatprep.subr.mxu0 0.0
    %4507 = vmatpush1.msra.mxu0 0.0
    %4508 = vmatprep.subr.mxu0 0.0
    %4509 = vmatpush1.msra.mxu0 0.0
    %4510 = vmatprep.subr.mxu0 0.0
    %4511 = vmatpush1.msra.mxu0 0.0
    %4512 = vmatprep.subr.mxu0 0.0
    %4513 = vmatpush1.msra.mxu0 0.0
    %4514 = vmatprep.subr.mxu0 0.0
    %4515 = vmatpush1.msra.mxu0 0.0
    %4516 = vmatprep.subr.mxu0 0.0
    %4517 = vmatpush1.msra.mxu0 0.0
    %4518 = vmatprep.subr.mxu0 0.0
    %4519 = vmatpush1.msra.mxu0 0.0
    %4520 = vmatprep.subr.mxu0 0.0
    %4521 = vmatpush1.msra.mxu0 0.0
    %4522 = vmatprep.subr.mxu0 0.0
    %4523 = vmatpush1.msra.mxu0 0.0
    %4524 = vmatprep.subr.mxu0 0.0
    %4525 = vmatpush1.msra.mxu0 0.0
    %4526 = vmatprep.subr.mxu0 0.0
    %4527 = vmatpush1.msra.mxu0 0.0
    %4528 = vmatprep.subr.mxu0 0.0
    %4529 = vmatpush1.msra.mxu0 0.0
    %4530 = vmatprep.subr.mxu0 0.0
    %4531 = vmatpush1.msra.mxu0 0.0
    %4532 = vmatprep.subr.mxu0 0.0
    %4533 = vmatpush1.msra.mxu0 0.0
    %4534 = vmatprep.mubr.f32.mxu0 0.0
    %4535 = vmatmul.mubr.f32.gmra.mrb[0].mxu0 %v4459
    %v4536 = vpop.f32.mrb[0].mxu0
    %v4537 = vadd.f32 %v4456, %v4536
    %v4538 = vpop.f32.mrb[0].mxu0
    %4539 = vmatprep.mubr.f32.mxu0 0.0
    %4540 = vmatmul.mubr.f32.gmra.mrb[0].mxu0 %v4462
    %v4541 = vpop.f32.mrb[0].mxu0
    %v4542 = vadd.f32 %v4456, %v4541
    %v4543 = vpop.f32.mrb[0].mxu0
    %4544 = vmatprep.mubr.f32.mxu0 0.0
    %4545 = vmatmul.mubr.f32.gmra.mrb[0].mxu0 %v4465
    %v4546 = vpop.f32.mrb[0].mxu0
    %v4547 = vadd.f32 %v4456, %v4546
    %v4548 = vpop.f32.mrb[0].mxu0
    %4549 = vmatprep.mubr.f32.mxu0 0.0
    %4550 = vmatmul.mubr.f32.gmra.mrb[0].mxu0 %v4468
    %v4551 = vpop.f32.mrb[0].mxu0
    %v4552 = vadd.f32 %v4456, %v4551
    %v4553 = vpop.f32.mrb[0].mxu0
    %4554 = vdwg.mxu0
    %v4555 = vmul.f32 %v4537, 0.5
    %v4556 = vmul.f32 %v4542, 0.5
    %v4557 = vmul.f32 %v4547, 0.5
    %v4558 = vmul.f32 %v4552, 0.5
    %v4559 = vmul.f32 %v4537, 0.70710677
    %v4560 = vmul.f32 %v4542, 0.70710677
    %v4561 = vmul.f32 %v4547, 0.70710677
    %v4562 = vmul.f32 %v4552, 0.70710677
    %v4563 = verf.f32.pop %v4559
    %v4564 = verf.f32.pop %v4560
    %v4565 = verf.f32.pop %v4561
    %v4566 = verf.f32.pop %v4562
    %v4567 = vadd.f32 %v4563, 1.0
    %v4568 = vadd.f32 %v4564, 1.0
    %v4569 = vadd.f32 %v4565, 1.0
    %v4570 = vadd.f32 %v4566, 1.0
    %v4571 = vmul.f32 %v4555, %v4567
    %v4572 = vmul.f32 %v4556, %v4568
    %v4573 = vmul.f32 %v4557, %v4569
    %v4574 = vmul.f32 %v4558, %v4570
    %s4575 = scalar_lea.vmem %s8, 64
    %v4576 = vld [vmem:[%s4575] sm:$0xff]
    %v4577 = vld [vmem:[%s4575 + $0x8] sm:$0xff]
    %v4578 = vld [vmem:[%s4575 + $0x10] sm:$0xff]
    %v4579 = vld [vmem:[%s4575 + $0x18] sm:$0xff]
    %v4580 = vld [vmem:[%s4575 + $0x20] sm:$0xff]
    %v4581 = vld [vmem:[%s4575 + $0x28] sm:$0xff]
    %v4582 = vld [vmem:[%s4575 + $0x30] sm:$0xff]
    %v4583 = vld [vmem:[%s4575 + $0x38] sm:$0xff]
    %v4585 = vsel %vm2309, %v4571, 0
    %v4588 = vsel %vm2309, %v4572, 0
    %v4591 = vsel %vm2309, %v4573, 0
    %v4594 = vsel %vm2309, %v4574, 0
    %4596 = vmatprep.subr.mxu0 0.0
    %4597 = vmatpush1.msra.mxu0 %v4576
    %4598 = vmatprep.subr.mxu0 0.0
    %4599 = vmatpush1.msra.mxu0 %v4577
    %4600 = vmatprep.subr.mxu0 0.0
    %4601 = vmatpush1.msra.mxu0 %v4578
    %4602 = vmatprep.subr.mxu0 0.0
    %4603 = vmatpush1.msra.mxu0 %v4579
    %4604 = vmatprep.subr.mxu0 0.0
    %4605 = vmatpush1.msra.mxu0 %v4580
    %4606 = vmatprep.subr.mxu0 0.0
    %4607 = vmatpush1.msra.mxu0 %v4581
    %4608 = vmatprep.subr.mxu0 0.0
    %4609 = vmatpush1.msra.mxu0 %v4582
    %4610 = vmatprep.subr.mxu0 0.0
    %4611 = vmatpush1.msra.mxu0 %v4583
    %4612 = vmatprep.subr.mxu0 0.0
    %4613 = vmatpush1.msra.mxu0 0.0
    %4614 = vmatprep.subr.mxu0 0.0
    %4615 = vmatpush1.msra.mxu0 0.0
    %4616 = vmatprep.subr.mxu0 0.0
    %4617 = vmatpush1.msra.mxu0 0.0
    %4618 = vmatprep.subr.mxu0 0.0
    %4619 = vmatpush1.msra.mxu0 0.0
    %4620 = vmatprep.subr.mxu0 0.0
    %4621 = vmatpush1.msra.mxu0 0.0
    %4622 = vmatprep.subr.mxu0 0.0
    %4623 = vmatpush1.msra.mxu0 0.0
    %4624 = vmatprep.subr.mxu0 0.0
    %4625 = vmatpush1.msra.mxu0 0.0
    %4626 = vmatprep.subr.mxu0 0.0
    %4627 = vmatpush1.msra.mxu0 0.0
    %4628 = vmatprep.subr.mxu0 0.0
    %4629 = vmatpush1.msra.mxu0 0.0
    %4630 = vmatprep.subr.mxu0 0.0
    %4631 = vmatpush1.msra.mxu0 0.0
    %4632 = vmatprep.subr.mxu0 0.0
    %4633 = vmatpush1.msra.mxu0 0.0
    %4634 = vmatprep.subr.mxu0 0.0
    %4635 = vmatpush1.msra.mxu0 0.0
    %4636 = vmatprep.subr.mxu0 0.0
    %4637 = vmatpush1.msra.mxu0 0.0
    %4638 = vmatprep.subr.mxu0 0.0
    %4639 = vmatpush1.msra.mxu0 0.0
    %4640 = vmatprep.subr.mxu0 0.0
    %4641 = vmatpush1.msra.mxu0 0.0
    %4642 = vmatprep.subr.mxu0 0.0
    %4643 = vmatpush1.msra.mxu0 0.0
    %4644 = vmatprep.subr.mxu0 0.0
    %4645 = vmatpush1.msra.mxu0 0.0
    %4646 = vmatprep.subr.mxu0 0.0
    %4647 = vmatpush1.msra.mxu0 0.0
    %4648 = vmatprep.subr.mxu0 0.0
    %4649 = vmatpush1.msra.mxu0 0.0
    %4650 = vmatprep.subr.mxu0 0.0
    %4651 = vmatpush1.msra.mxu0 0.0
    %4652 = vmatprep.subr.mxu0 0.0
    %4653 = vmatpush1.msra.mxu0 0.0
    %4654 = vmatprep.subr.mxu0 0.0
    %4655 = vmatpush1.msra.mxu0 0.0
    %4656 = vmatprep.subr.mxu0 0.0
    %4657 = vmatpush1.msra.mxu0 0.0
    %4658 = vmatprep.subr.mxu0 0.0
    %4659 = vmatpush1.msra.mxu0 0.0
    %4660 = vmatprep.mubr.f32.mxu0 0.0
    %4661 = vmatmul.mubr.f32.gmra.mrb[0].mxu0 %v4585
    %v4662 = vpop.f32.mrb[0].mxu0
    %v4663 = vadd.f32 0.0, %v4662
    %v4664 = vpop.f32.mrb[0].mxu0
    %4665 = vmatprep.mubr.f32.mxu0 0.0
    %4666 = vmatmul.mubr.f32.gmra.mrb[0].mxu0 %v4588
    %v4667 = vpop.f32.mrb[0].mxu0
    %v4668 = vadd.f32 0.0, %v4667
    %v4669 = vpop.f32.mrb[0].mxu0
    %4670 = vmatprep.mubr.f32.mxu0 0.0
    %4671 = vmatmul.mubr.f32.gmra.mrb[0].mxu0 %v4591
    %v4672 = vpop.f32.mrb[0].mxu0
    %v4673 = vadd.f32 0.0, %v4672
    %v4674 = vpop.f32.mrb[0].mxu0
    %4675 = vmatprep.mubr.f32.mxu0 0.0
    %4676 = vmatmul.mubr.f32.gmra.mrb[0].mxu0 %v4594
    %v4677 = vpop.f32.mrb[0].mxu0
    %v4678 = vadd.f32 0.0, %v4677
    %v4679 = vpop.f32.mrb[0].mxu0
    %4680 = vdwg.mxu0
    %v4681 = vadd.f32 %v4373, %v4663
    %v4682 = vadd.f32 %v4374, %v4668
    %v4683 = vadd.f32 %v4375, %v4673
    %v4684 = vadd.f32 %v4376, %v4678
    %v4685 = vlaneseq
    %v4686 = vshrl.u32 %v4685, 7
    %v4687 = vsub.s32 5, %v4686
    %v4688 = vrot.slane %v2420, %v4687
    %v4689 = vadd.f32 %v4681, %v4688
    %v4690 = vadd.f32 %v4682, %v4688
    %v4691 = vadd.f32 %v4683, %v4688
    %v4692 = vadd.f32 %v4684, %v4688
    %4693 = vst.msk [vmem:[#allocation2] sm:$0xff] %vm146, %v4689
    %4694 = vst.msk [vmem:[#allocation2 + $0x8] sm:$0xff] %vm146, %v4690
    %4695 = vst.msk [vmem:[#allocation2 + $0x10] sm:$0xff] %vm146, %v4691
    %4696 = vst.msk [vmem:[#allocation2 + $0x18] sm:$0xff] %vm146, %v4692
    // Predicated region
    $region38: #{vit_forward.1} parent=1 // pred_check
      _
    $region39: #{vit_forward.1} parent=1 // pred_check_branch
      %4698 = sbr.rel (0) target = $region41
    $region40: #{vit_forward.1} parent=1 // pred_region
      %s4700 = ssub.s32 512, 512
      %4701 = vsyncadd [#allocation3], %s4700
      %s4702 = sshll.u32 [#allocation2], 4
      %s4703 = int_to_ptr.vmem [resolvable:$true] %s4702
      %4708 = dma.vmem_to_hbm [thread:$0]  %s4703, 512, %s9, [#allocation3], 128, 128, 8
    $region41: #{vit_forward.1} parent=1 // pred_fallthru
      _
    // Predicated region
    $region42: #{vit_forward.1} parent=1 // pred_check
      _
    $region43: #{vit_forward.1} parent=1 // pred_check_branch
      %4710 = sbr.rel (0) target = $region45
    $region44: #{vit_forward.1} parent=1 // pred_region
      %4711 = dma.done [#allocation3], 512
    $region45: #{vit_forward.1} parent=1 // pred_fallthru
      _
    %4712 = vsyncpa [#allocation3], 1

</llo_original>
